<compile_context>
chip_gen: v6e
topology: v6e:2x2x1
jax: 0.10.0
libtpu: 0.0.40
codegen_flags: <defaults>
</compile_context>

<pallas_src>
import functools

import jax
import jax.numpy as jnp
import numpy as np
from jax.experimental import pallas as pl
from jax.experimental.pallas import tpu as pltpu


# ------------------------------ Pallas kernel -------------------------------


def _lstm_cell(gates, c, H):
    """PyTorch-ordered (i, f, g, o) LSTM cell update from pre-activation gates (B, 4H)."""
    # Evaluate sigmoid/tanh on the whole (B, 4H) vreg (EUP slot), then take the
    # H-lane gate sub-ranges -- cheaper than four slice-then-activate passes.
    sg = jax.nn.sigmoid(gates)
    tg = jnp.tanh(gates)
    i = sg[:, 0 * H:1 * H]
    f = sg[:, 1 * H:2 * H]
    g = tg[:, 2 * H:3 * H]
    o = sg[:, 3 * H:4 * H]
    c_new = f * c + i * g
    h_new = o * jnp.tanh(c_new)
    return h_new, c_new


def _fused_lstm_kernel(
    x_ref,                                  # (T*B, E)  time-major flattened embeddings
    wih0f_ref, whh0f_ref, b0f_ref,          # layer-0 forward : (E,4H), (H,4H), (1,4H)
    wih0b_ref, whh0b_ref, b0b_ref,          # layer-0 backward: (E,4H), (H,4H), (1,4H)
    wih1f_ref, wih1b_ref, whh1_ref, b1_ref, # layer-1 backward: (H,4H), (H,4H), (H,4H), (1,4H)
    wlin_ref, blin_ref,                     # linear head     : (H,4), (1,4)
    out_ref,                                # (B, 4)
    *, seq_len, batch,
):
    T, B = seq_len, batch
    H = whh0f_ref.shape[0]

    x = x_ref[...]                                                   # (T*B, E)

    # Layer-0 input projections for ALL timesteps, hoisted out of the recurrence:
    # one (T*B, E) @ (E, 4H) matmul per direction instead of T tiny ones.
    g0f_all = jnp.dot(x, wih0f_ref[...], preferred_element_type=jnp.float32) + b0f_ref[...]
    g0b_all = jnp.dot(x, wih0b_ref[...], preferred_element_type=jnp.float32) + b0b_ref[...]

    whh0f = whh0f_ref[...]
    whh0b = whh0b_ref[...]
    wih1f = wih1f_ref[...]
    wih1b = wih1b_ref[...]

    zeros = jnp.zeros((B, H), jnp.float32)
    h_f, c_f = zeros, zeros
    h_b, c_b = zeros, zeros

    # Layer-1 (reverse dir) input projections, filled in as layer-0 hiddens appear,
    # so layer-1's serial chain is only h1 @ W_hh + nonlinearities.
    g1_pre = [None] * T

    # Layer 0: forward and backward recurrences interleaved in one fully unrolled
    # time loop (T is static). No scratch / HBM round-trip for the hidden sequence.
    for s in range(T):
        tf, tb = s, T - 1 - s

        gf = g0f_all[tf * B:(tf + 1) * B, :] + jnp.dot(
            h_f, whh0f, preferred_element_type=jnp.float32)
        h_f, c_f = _lstm_cell(gf, c_f, H)
        pf = jnp.dot(h_f, wih1f, preferred_element_type=jnp.float32)   # fw-feature half
        g1_pre[tf] = pf if g1_pre[tf] is None else g1_pre[tf] + pf

        gb = g0b_all[tb * B:(tb + 1) * B, :] + jnp.dot(
            h_b, whh0b, preferred_element_type=jnp.float32)
        h_b, c_b = _lstm_cell(gb, c_b, H)
        pb = jnp.dot(h_b, wih1b, preferred_element_type=jnp.float32)   # bw-feature half
        g1_pre[tb] = pb if g1_pre[tb] is None else g1_pre[tb] + pb

    # Layer 1, reverse direction only (that is all ht[-1] needs). Only the final
    # hidden state is kept -- no (T, B, H) hidden-sequence output at all.
    whh1 = whh1_ref[...]
    b1 = b1_ref[...]
    h1, c1 = zeros, zeros
    for s in range(T):
        t = T - 1 - s
        g1 = g1_pre[t] + b1 + jnp.dot(h1, whh1, preferred_element_type=jnp.float32)
        h1, c1 = _lstm_cell(g1, c1, H)

    # Linear head fused into the epilogue: ht[-1] @ W^T + b.
    out_ref[...] = (
        jnp.dot(h1, wlin_ref[...], preferred_element_type=jnp.float32) + blin_ref[...]
    )


# ------------------------------- forward pass --------------------------------


def lstm_glove_vecs_forward(params, x_ids, lengths):
    del lengths  # the PyTorch forward also never uses `l`

    # Embedding lookup on the frozen glove table (plain XLA gather glue).
    emb = jnp.take(params["embedding"], x_ids, axis=0)               # (B, T, E)
    # TODO(synk): Dropout(p=0.2) train-mode masking not implemented; eval mode = identity.
    B, T, E = emb.shape
    # Time-major flattened: row t*B + b holds token t of batch element b.
    x_flat = jnp.transpose(emb, (1, 0, 2)).reshape(T * B, E).astype(jnp.float32)

    wih0f, whh0f, b0f = params["l0_fw"]
    wih0b, whh0b, b0b = params["l0_bw"]
    wih1, whh1, b1 = params["l1_bw"]
    H = whh0f.shape[0]
    # Split layer-1 W_ih^T into the halves applied to layer-0 fw / bw features,
    # so the kernel never concatenates the two hidden sequences.
    wih1_f, wih1_b = wih1[:H, :], wih1[H:, :]

    kernel = functools.partial(_fused_lstm_kernel, seq_len=T, batch=B)
    return pl.pallas_call(
        kernel,
        out_shape=jax.ShapeDtypeStruct((B, 4), jnp.float32),
        # Total resident footprint is ~0.2 MiB (everything whole-array in VMEM),
        # far below the 64 MiB (v7x) / 128 MiB (v5e/v6e) budgets; set explicitly.
        compiler_params=pltpu.CompilerParams(vmem_limit_bytes=8 * 1024 * 1024),
    )(x_flat,
      wih0f, whh0f, b0f,
      wih0b, whh0b, b0b,
      wih1_f, wih1_b, whh1, b1,
      params["lin_w"], params["lin_b"])


# --------------------------- parameter creation ------------------------------


def make_lstm_dir_params(key, in_dim, H):
    """PyTorch-style init uniform(-1/sqrt(H), 1/sqrt(H)); returns transposed
    weights and the combined bias (b_ih + b_hh)."""
    k = 1.0 / np.sqrt(H)
    k1, k2, k3, k4 = jax.random.split(key, 4)
    w_ih = jax.random.uniform(k1, (4 * H, in_dim), jnp.float32, -k, k)
    w_hh = jax.random.uniform(k2, (4 * H, H), jnp.float32, -k, k)
    b_ih = jax.random.uniform(k3, (4 * H,), jnp.float32, -k, k)
    b_hh = jax.random.uniform(k4, (4 * H,), jnp.float32, -k, k)
    return w_ih.T, w_hh.T, (b_ih + b_hh)[None, :]


def init_params(key, vocab_size, embedding_dim, hidden_dim):
    keys = jax.random.split(key, 7)
    H = hidden_dim
    k_lin = 1.0 / np.sqrt(H)
    glove = 0.1 * jax.random.normal(keys[0], (vocab_size, embedding_dim), jnp.float32)
    return {
        "embedding": glove,                                   # frozen glove weights
        "l0_fw": make_lstm_dir_params(keys[1], embedding_dim, H),
        "l0_bw": make_lstm_dir_params(keys[2], embedding_dim, H),
        # layer-1 forward weights (keys[3]) exist in the PyTorch module but never
        # influence ht[-1]; they are dead work and are not materialized / run.
        "l1_bw": make_lstm_dir_params(keys[4], 2 * H, H),
        "lin_w": jax.random.uniform(keys[5], (4, H), jnp.float32, -k_lin, k_lin).T,  # (H,4)
        "lin_b": jax.random.uniform(keys[6], (1, 4), jnp.float32, -k_lin, k_lin),
    }


# ----------------------------- pure-JAX reference ----------------------------


def _ref_lstm_dir(x_tm, w_ih_t, w_hh_t, b, reverse):
    T, B, _ = x_tm.shape
    H = w_hh_t.shape[0]
    xs = x_tm[::-1] if reverse else x_tm

    def step(carry, x_t):
        h, c = carry
        gates = x_t @ w_ih_t + h @ w_hh_t + b
        i, f, g, o = jnp.split(gates, 4, axis=-1)
        i = jax.nn.sigmoid(i)
        f = jax.nn.sigmoid(f)
        g = jnp.tanh(g)
        o = jax.nn.sigmoid(o)
        c = f * c + i * g
        h = o * jnp.tanh(c)
        return (h, c), h

    init = (jnp.zeros((B, H), jnp.float32), jnp.zeros((B, H), jnp.float32))
    (h_fin, _), hs = jax.lax.scan(step, init, xs)
    if reverse:
        hs = hs[::-1]
    return hs, h_fin


def reference_forward(params, x_ids, lengths):
    del lengths
    emb = jnp.take(params["embedding"], x_ids, axis=0)
    x_tm = jnp.transpose(emb, (1, 0, 2)).astype(jnp.float32)
    h_f0, _ = _ref_lstm_dir(x_tm, *params["l0_fw"], reverse=False)
    h_b0, _ = _ref_lstm_dir(x_tm, *params["l0_bw"], reverse=True)
    x1 = jnp.concatenate([h_f0, h_b0], axis=-1)
    _, h_b1_fin = _ref_lstm_dir(x1, *params["l1_bw"], reverse=True)
    return h_b1_fin @ params["lin_w"] + params["lin_b"]


# ------------------------------------ main -----------------------------------

if __name__ == "__main__":
    VOCAB, E, H = 50, 32, 32
    B, T = 2, 8

    key = jax.random.PRNGKey(0)
    k_params, k_ids = jax.random.split(key)
    params = init_params(k_params, VOCAB, E, H)

    x_ids = jax.random.randint(k_ids, (B, T), 0, VOCAB, dtype=jnp.int32)
    lengths = jnp.full((B,), T, dtype=jnp.int32)  # accepted but unused (matches PyTorch forward)

    out = jax.jit(lstm_glove_vecs_forward)(params, x_ids, lengths)
    out = jax.block_until_ready(out)
    assert out.shape == (B, 4) and out.dtype == jnp.float32

    ref = jax.block_until_ready(reference_forward(params, x_ids, lengths))
    # Loose-ish tolerance: Pallas/Mosaic and XLA may use different f32-on-MXU pass
    # counts; structural bugs (gate order, time indexing) would differ at O(1).
    np.testing.assert_allclose(np.asarray(out), np.asarray(ref), rtol=1e-2, atol=1e-2)

    print("KERNEL_OK")
</pallas_src>

<mosaic_0001>
module attributes {stable_mosaic.version = 11 : i64} {
  func.func @_fused_lstm_kernel(%arg0: memref<16x32xf32, #tpu.memory_space<vmem>>, %arg1: memref<32x128xf32, #tpu.memory_space<vmem>>, %arg2: memref<32x128xf32, #tpu.memory_space<vmem>>, %arg3: memref<1x128xf32, #tpu.memory_space<vmem>>, %arg4: memref<32x128xf32, #tpu.memory_space<vmem>>, %arg5: memref<32x128xf32, #tpu.memory_space<vmem>>, %arg6: memref<1x128xf32, #tpu.memory_space<vmem>>, %arg7: memref<32x128xf32, #tpu.memory_space<vmem>>, %arg8: memref<32x128xf32, #tpu.memory_space<vmem>>, %arg9: memref<32x128xf32, #tpu.memory_space<vmem>>, %arg10: memref<1x128xf32, #tpu.memory_space<vmem>>, %arg11: memref<32x4xf32, #tpu.memory_space<vmem>>, %arg12: memref<1x4xf32, #tpu.memory_space<vmem>>, %arg13: memref<2x4xf32, #tpu.memory_space<vmem>>) attributes {dimension_semantics = [], scalar_prefetch = 0 : i64, scratch_operands = 0 : i64, tpu.core_type = #tpu.core_type<tc>} {
    %c0 = arith.constant 0 : index
    %c0_0 = arith.constant 0 : index
    %0 = vector.load %arg0[%c0, %c0_0] : memref<16x32xf32, #tpu.memory_space<vmem>>, vector<16x32xf32>
    %c0_1 = arith.constant 0 : index
    %c0_2 = arith.constant 0 : index
    %1 = vector.load %arg1[%c0_1, %c0_2] : memref<32x128xf32, #tpu.memory_space<vmem>>, vector<32x128xf32>
    %cst = arith.constant dense<0.000000e+00> : vector<16x128xf32>
    %2 = tpu.matmul %0, %1, %cst {dimension_numbers = #tpu.dot_dimension_numbers<[1], [0], [0], [1], [0, 0, 1, 1], [], []>} : vector<16x32xf32>, vector<32x128xf32>, vector<16x128xf32> -> vector<16x128xf32>
    %c0_3 = arith.constant 0 : index
    %c0_4 = arith.constant 0 : index
    %3 = vector.load %arg3[%c0_3, %c0_4] : memref<1x128xf32, #tpu.memory_space<vmem>>, vector<1x128xf32>
    %4 = vector.broadcast %3 : vector<1x128xf32> to vector<16x128xf32>
    %5 = arith.addf %2, %4 : vector<16x128xf32>
    %c0_5 = arith.constant 0 : index
    %c0_6 = arith.constant 0 : index
    %6 = vector.load %arg4[%c0_5, %c0_6] : memref<32x128xf32, #tpu.memory_space<vmem>>, vector<32x128xf32>
    %cst_7 = arith.constant dense<0.000000e+00> : vector<16x128xf32>
    %7 = tpu.matmul %0, %6, %cst_7 {dimension_numbers = #tpu.dot_dimension_numbers<[1], [0], [0], [1], [0, 0, 1, 1], [], []>} : vector<16x32xf32>, vector<32x128xf32>, vector<16x128xf32> -> vector<16x128xf32>
    %c0_8 = arith.constant 0 : index
    %c0_9 = arith.constant 0 : index
    %8 = vector.load %arg6[%c0_8, %c0_9] : memref<1x128xf32, #tpu.memory_space<vmem>>, vector<1x128xf32>
    %9 = vector.broadcast %8 : vector<1x128xf32> to vector<16x128xf32>
    %10 = arith.addf %7, %9 : vector<16x128xf32>
    %c0_10 = arith.constant 0 : index
    %c0_11 = arith.constant 0 : index
    %11 = vector.load %arg2[%c0_10, %c0_11] : memref<32x128xf32, #tpu.memory_space<vmem>>, vector<32x128xf32>
    %c0_12 = arith.constant 0 : index
    %c0_13 = arith.constant 0 : index
    %12 = vector.load %arg5[%c0_12, %c0_13] : memref<32x128xf32, #tpu.memory_space<vmem>>, vector<32x128xf32>
    %c0_14 = arith.constant 0 : index
    %c0_15 = arith.constant 0 : index
    %13 = vector.load %arg7[%c0_14, %c0_15] : memref<32x128xf32, #tpu.memory_space<vmem>>, vector<32x128xf32>
    %c0_16 = arith.constant 0 : index
    %c0_17 = arith.constant 0 : index
    %14 = vector.load %arg8[%c0_16, %c0_17] : memref<32x128xf32, #tpu.memory_space<vmem>>, vector<32x128xf32>
    %cst_18 = arith.constant 0.000000e+00 : f32
    %15 = vector.broadcast %cst_18 : f32 to vector<2x32xf32>
    %16 = vector.extract_strided_slice %5 {offsets = [0, 0], sizes = [2, 128], strides = [1, 1]} : vector<16x128xf32> to vector<2x128xf32>
    %cst_19 = arith.constant dense<0.000000e+00> : vector<2x128xf32>
    %17 = tpu.matmul %15, %11, %cst_19 {dimension_numbers = #tpu.dot_dimension_numbers<[1], [0], [0], [1], [0, 0, 1, 1], [], []>} : vector<2x32xf32>, vector<32x128xf32>, vector<2x128xf32> -> vector<2x128xf32>
    %18 = arith.addf %16, %17 : vector<2x128xf32>
    %19 = arith.negf %18 : vector<2x128xf32>
    %20 = math.exp %19 : vector<2x128xf32>
    %cst_20 = arith.constant 1.000000e+00 : f32
    %21 = vector.broadcast %cst_20 : f32 to vector<2x128xf32>
    %22 = arith.addf %21, %20 : vector<2x128xf32>
    %23 = arith.divf %21, %22 : vector<2x128xf32>
    %24 = math.tanh %18 : vector<2x128xf32>
    %25 = vector.extract_strided_slice %23 {offsets = [0, 0], sizes = [2, 32], strides = [1, 1]} : vector<2x128xf32> to vector<2x32xf32>
    %26 = vector.extract_strided_slice %23 {offsets = [0, 32], sizes = [2, 32], strides = [1, 1]} : vector<2x128xf32> to vector<2x32xf32>
    %27 = vector.extract_strided_slice %24 {offsets = [0, 64], sizes = [2, 32], strides = [1, 1]} : vector<2x128xf32> to vector<2x32xf32>
    %28 = vector.extract_strided_slice %23 {offsets = [0, 96], sizes = [2, 32], strides = [1, 1]} : vector<2x128xf32> to vector<2x32xf32>
    %29 = arith.mulf %26, %15 : vector<2x32xf32>
    %30 = arith.mulf %25, %27 : vector<2x32xf32>
    %31 = arith.addf %29, %30 : vector<2x32xf32>
    %32 = math.tanh %31 : vector<2x32xf32>
    %33 = arith.mulf %28, %32 : vector<2x32xf32>
    %cst_21 = arith.constant dense<0.000000e+00> : vector<2x128xf32>
    %34 = tpu.matmul %33, %13, %cst_21 {dimension_numbers = #tpu.dot_dimension_numbers<[1], [0], [0], [1], [0, 0, 1, 1], [], []>} : vector<2x32xf32>, vector<32x128xf32>, vector<2x128xf32> -> vector<2x128xf32>
    %35 = vector.extract_strided_slice %10 {offsets = [14, 0], sizes = [2, 128], strides = [1, 1]} : vector<16x128xf32> to vector<2x128xf32>
    %cst_22 = arith.constant dense<0.000000e+00> : vector<2x128xf32>
    %36 = tpu.matmul %15, %12, %cst_22 {dimension_numbers = #tpu.dot_dimension_numbers<[1], [0], [0], [1], [0, 0, 1, 1], [], []>} : vector<2x32xf32>, vector<32x128xf32>, vector<2x128xf32> -> vector<2x128xf32>
    %37 = arith.addf %35, %36 : vector<2x128xf32>
    %38 = arith.negf %37 : vector<2x128xf32>
    %39 = math.exp %38 : vector<2x128xf32>
    %cst_23 = arith.constant 1.000000e+00 : f32
    %40 = vector.broadcast %cst_23 : f32 to vector<2x128xf32>
    %41 = arith.addf %40, %39 : vector<2x128xf32>
    %42 = arith.divf %40, %41 : vector<2x128xf32>
    %43 = math.tanh %37 : vector<2x128xf32>
    %44 = vector.extract_strided_slice %42 {offsets = [0, 0], sizes = [2, 32], strides = [1, 1]} : vector<2x128xf32> to vector<2x32xf32>
    %45 = vector.extract_strided_slice %42 {offsets = [0, 32], sizes = [2, 32], strides = [1, 1]} : vector<2x128xf32> to vector<2x32xf32>
    %46 = vector.extract_strided_slice %43 {offsets = [0, 64], sizes = [2, 32], strides = [1, 1]} : vector<2x128xf32> to vector<2x32xf32>
    %47 = vector.extract_strided_slice %42 {offsets = [0, 96], sizes = [2, 32], strides = [1, 1]} : vector<2x128xf32> to vector<2x32xf32>
    %48 = arith.mulf %45, %15 : vector<2x32xf32>
    %49 = arith.mulf %44, %46 : vector<2x32xf32>
    %50 = arith.addf %48, %49 : vector<2x32xf32>
    %51 = math.tanh %50 : vector<2x32xf32>
    %52 = arith.mulf %47, %51 : vector<2x32xf32>
    %cst_24 = arith.constant dense<0.000000e+00> : vector<2x128xf32>
    %53 = tpu.matmul %52, %14, %cst_24 {dimension_numbers = #tpu.dot_dimension_numbers<[1], [0], [0], [1], [0, 0, 1, 1], [], []>} : vector<2x32xf32>, vector<32x128xf32>, vector<2x128xf32> -> vector<2x128xf32>
    %54 = vector.extract_strided_slice %5 {offsets = [2, 0], sizes = [2, 128], strides = [1, 1]} : vector<16x128xf32> to vector<2x128xf32>
    %cst_25 = arith.constant dense<0.000000e+00> : vector<2x128xf32>
    %55 = tpu.matmul %33, %11, %cst_25 {dimension_numbers = #tpu.dot_dimension_numbers<[1], [0], [0], [1], [0, 0, 1, 1], [], []>} : vector<2x32xf32>, vector<32x128xf32>, vector<2x128xf32> -> vector<2x128xf32>
    %56 = arith.addf %54, %55 : vector<2x128xf32>
    %57 = arith.negf %56 : vector<2x128xf32>
    %58 = math.exp %57 : vector<2x128xf32>
    %cst_26 = arith.constant 1.000000e+00 : f32
    %59 = vector.broadcast %cst_26 : f32 to vector<2x128xf32>
    %60 = arith.addf %59, %58 : vector<2x128xf32>
    %61 = arith.divf %59, %60 : vector<2x128xf32>
    %62 = math.tanh %56 : vector<2x128xf32>
    %63 = vector.extract_strided_slice %61 {offsets = [0, 0], sizes = [2, 32], strides = [1, 1]} : vector<2x128xf32> to vector<2x32xf32>
    %64 = vector.extract_strided_slice %61 {offsets = [0, 32], sizes = [2, 32], strides = [1, 1]} : vector<2x128xf32> to vector<2x32xf32>
    %65 = vector.extract_strided_slice %62 {offsets = [0, 64], sizes = [2, 32], strides = [1, 1]} : vector<2x128xf32> to vector<2x32xf32>
    %66 = vector.extract_strided_slice %61 {offsets = [0, 96], sizes = [2, 32], strides = [1, 1]} : vector<2x128xf32> to vector<2x32xf32>
    %67 = arith.mulf %64, %31 : vector<2x32xf32>
    %68 = arith.mulf %63, %65 : vector<2x32xf32>
    %69 = arith.addf %67, %68 : vector<2x32xf32>
    %70 = math.tanh %69 : vector<2x32xf32>
    %71 = arith.mulf %66, %70 : vector<2x32xf32>
    %cst_27 = arith.constant dense<0.000000e+00> : vector<2x128xf32>
    %72 = tpu.matmul %71, %13, %cst_27 {dimension_numbers = #tpu.dot_dimension_numbers<[1], [0], [0], [1], [0, 0, 1, 1], [], []>} : vector<2x32xf32>, vector<32x128xf32>, vector<2x128xf32> -> vector<2x128xf32>
    %73 = vector.extract_strided_slice %10 {offsets = [12, 0], sizes = [2, 128], strides = [1, 1]} : vector<16x128xf32> to vector<2x128xf32>
    %cst_28 = arith.constant dense<0.000000e+00> : vector<2x128xf32>
    %74 = tpu.matmul %52, %12, %cst_28 {dimension_numbers = #tpu.dot_dimension_numbers<[1], [0], [0], [1], [0, 0, 1, 1], [], []>} : vector<2x32xf32>, vector<32x128xf32>, vector<2x128xf32> -> vector<2x128xf32>
    %75 = arith.addf %73, %74 : vector<2x128xf32>
    %76 = arith.negf %75 : vector<2x128xf32>
    %77 = math.exp %76 : vector<2x128xf32>
    %cst_29 = arith.constant 1.000000e+00 : f32
    %78 = vector.broadcast %cst_29 : f32 to vector<2x128xf32>
    %79 = arith.addf %78, %77 : vector<2x128xf32>
    %80 = arith.divf %78, %79 : vector<2x128xf32>
    %81 = math.tanh %75 : vector<2x128xf32>
    %82 = vector.extract_strided_slice %80 {offsets = [0, 0], sizes = [2, 32], strides = [1, 1]} : vector<2x128xf32> to vector<2x32xf32>
    %83 = vector.extract_strided_slice %80 {offsets = [0, 32], sizes = [2, 32], strides = [1, 1]} : vector<2x128xf32> to vector<2x32xf32>
    %84 = vector.extract_strided_slice %81 {offsets = [0, 64], sizes = [2, 32], strides = [1, 1]} : vector<2x128xf32> to vector<2x32xf32>
    %85 = vector.extract_strided_slice %80 {offsets = [0, 96], sizes = [2, 32], strides = [1, 1]} : vector<2x128xf32> to vector<2x32xf32>
    %86 = arith.mulf %83, %50 : vector<2x32xf32>
    %87 = arith.mulf %82, %84 : vector<2x32xf32>
    %88 = arith.addf %86, %87 : vector<2x32xf32>
    %89 = math.tanh %88 : vector<2x32xf32>
    %90 = arith.mulf %85, %89 : vector<2x32xf32>
    %cst_30 = arith.constant dense<0.000000e+00> : vector<2x128xf32>
    %91 = tpu.matmul %90, %14, %cst_30 {dimension_numbers = #tpu.dot_dimension_numbers<[1], [0], [0], [1], [0, 0, 1, 1], [], []>} : vector<2x32xf32>, vector<32x128xf32>, vector<2x128xf32> -> vector<2x128xf32>
    %92 = vector.extract_strided_slice %5 {offsets = [4, 0], sizes = [2, 128], strides = [1, 1]} : vector<16x128xf32> to vector<2x128xf32>
    %cst_31 = arith.constant dense<0.000000e+00> : vector<2x128xf32>
    %93 = tpu.matmul %71, %11, %cst_31 {dimension_numbers = #tpu.dot_dimension_numbers<[1], [0], [0], [1], [0, 0, 1, 1], [], []>} : vector<2x32xf32>, vector<32x128xf32>, vector<2x128xf32> -> vector<2x128xf32>
    %94 = arith.addf %92, %93 : vector<2x128xf32>
    %95 = arith.negf %94 : vector<2x128xf32>
    %96 = math.exp %95 : vector<2x128xf32>
    %cst_32 = arith.constant 1.000000e+00 : f32
    %97 = vector.broadcast %cst_32 : f32 to vector<2x128xf32>
    %98 = arith.addf %97, %96 : vector<2x128xf32>
    %99 = arith.divf %97, %98 : vector<2x128xf32>
    %100 = math.tanh %94 : vector<2x128xf32>
    %101 = vector.extract_strided_slice %99 {offsets = [0, 0], sizes = [2, 32], strides = [1, 1]} : vector<2x128xf32> to vector<2x32xf32>
    %102 = vector.extract_strided_slice %99 {offsets = [0, 32], sizes = [2, 32], strides = [1, 1]} : vector<2x128xf32> to vector<2x32xf32>
    %103 = vector.extract_strided_slice %100 {offsets = [0, 64], sizes = [2, 32], strides = [1, 1]} : vector<2x128xf32> to vector<2x32xf32>
    %104 = vector.extract_strided_slice %99 {offsets = [0, 96], sizes = [2, 32], strides = [1, 1]} : vector<2x128xf32> to vector<2x32xf32>
    %105 = arith.mulf %102, %69 : vector<2x32xf32>
    %106 = arith.mulf %101, %103 : vector<2x32xf32>
    %107 = arith.addf %105, %106 : vector<2x32xf32>
    %108 = math.tanh %107 : vector<2x32xf32>
    %109 = arith.mulf %104, %108 : vector<2x32xf32>
    %cst_33 = arith.constant dense<0.000000e+00> : vector<2x128xf32>
    %110 = tpu.matmul %109, %13, %cst_33 {dimension_numbers = #tpu.dot_dimension_numbers<[1], [0], [0], [1], [0, 0, 1, 1], [], []>} : vector<2x32xf32>, vector<32x128xf32>, vector<2x128xf32> -> vector<2x128xf32>
    %111 = vector.extract_strided_slice %10 {offsets = [10, 0], sizes = [2, 128], strides = [1, 1]} : vector<16x128xf32> to vector<2x128xf32>
    %cst_34 = arith.constant dense<0.000000e+00> : vector<2x128xf32>
    %112 = tpu.matmul %90, %12, %cst_34 {dimension_numbers = #tpu.dot_dimension_numbers<[1], [0], [0], [1], [0, 0, 1, 1], [], []>} : vector<2x32xf32>, vector<32x128xf32>, vector<2x128xf32> -> vector<2x128xf32>
    %113 = arith.addf %111, %112 : vector<2x128xf32>
    %114 = arith.negf %113 : vector<2x128xf32>
    %115 = math.exp %114 : vector<2x128xf32>
    %cst_35 = arith.constant 1.000000e+00 : f32
    %116 = vector.broadcast %cst_35 : f32 to vector<2x128xf32>
    %117 = arith.addf %116, %115 : vector<2x128xf32>
    %118 = arith.divf %116, %117 : vector<2x128xf32>
    %119 = math.tanh %113 : vector<2x128xf32>
    %120 = vector.extract_strided_slice %118 {offsets = [0, 0], sizes = [2, 32], strides = [1, 1]} : vector<2x128xf32> to vector<2x32xf32>
    %121 = vector.extract_strided_slice %118 {offsets = [0, 32], sizes = [2, 32], strides = [1, 1]} : vector<2x128xf32> to vector<2x32xf32>
    %122 = vector.extract_strided_slice %119 {offsets = [0, 64], sizes = [2, 32], strides = [1, 1]} : vector<2x128xf32> to vector<2x32xf32>
    %123 = vector.extract_strided_slice %118 {offsets = [0, 96], sizes = [2, 32], strides = [1, 1]} : vector<2x128xf32> to vector<2x32xf32>
    %124 = arith.mulf %121, %88 : vector<2x32xf32>
    %125 = arith.mulf %120, %122 : vector<2x32xf32>
    %126 = arith.addf %124, %125 : vector<2x32xf32>
    %127 = math.tanh %126 : vector<2x32xf32>
    %128 = arith.mulf %123, %127 : vector<2x32xf32>
    %cst_36 = arith.constant dense<0.000000e+00> : vector<2x128xf32>
    %129 = tpu.matmul %128, %14, %cst_36 {dimension_numbers = #tpu.dot_dimension_numbers<[1], [0], [0], [1], [0, 0, 1, 1], [], []>} : vector<2x32xf32>, vector<32x128xf32>, vector<2x128xf32> -> vector<2x128xf32>
    %130 = vector.extract_strided_slice %5 {offsets = [6, 0], sizes = [2, 128], strides = [1, 1]} : vector<16x128xf32> to vector<2x128xf32>
    %cst_37 = arith.constant dense<0.000000e+00> : vector<2x128xf32>
    %131 = tpu.matmul %109, %11, %cst_37 {dimension_numbers = #tpu.dot_dimension_numbers<[1], [0], [0], [1], [0, 0, 1, 1], [], []>} : vector<2x32xf32>, vector<32x128xf32>, vector<2x128xf32> -> vector<2x128xf32>
    %132 = arith.addf %130, %131 : vector<2x128xf32>
    %133 = arith.negf %132 : vector<2x128xf32>
    %134 = math.exp %133 : vector<2x128xf32>
    %cst_38 = arith.constant 1.000000e+00 : f32
    %135 = vector.broadcast %cst_38 : f32 to vector<2x128xf32>
    %136 = arith.addf %135, %134 : vector<2x128xf32>
    %137 = arith.divf %135, %136 : vector<2x128xf32>
    %138 = math.tanh %132 : vector<2x128xf32>
    %139 = vector.extract_strided_slice %137 {offsets = [0, 0], sizes = [2, 32], strides = [1, 1]} : vector<2x128xf32> to vector<2x32xf32>
    %140 = vector.extract_strided_slice %137 {offsets = [0, 32], sizes = [2, 32], strides = [1, 1]} : vector<2x128xf32> to vector<2x32xf32>
    %141 = vector.extract_strided_slice %138 {offsets = [0, 64], sizes = [2, 32], strides = [1, 1]} : vector<2x128xf32> to vector<2x32xf32>
    %142 = vector.extract_strided_slice %137 {offsets = [0, 96], sizes = [2, 32], strides = [1, 1]} : vector<2x128xf32> to vector<2x32xf32>
    %143 = arith.mulf %140, %107 : vector<2x32xf32>
    %144 = arith.mulf %139, %141 : vector<2x32xf32>
    %145 = arith.addf %143, %144 : vector<2x32xf32>
    %146 = math.tanh %145 : vector<2x32xf32>
    %147 = arith.mulf %142, %146 : vector<2x32xf32>
    %cst_39 = arith.constant dense<0.000000e+00> : vector<2x128xf32>
    %148 = tpu.matmul %147, %13, %cst_39 {dimension_numbers = #tpu.dot_dimension_numbers<[1], [0], [0], [1], [0, 0, 1, 1], [], []>} : vector<2x32xf32>, vector<32x128xf32>, vector<2x128xf32> -> vector<2x128xf32>
    %149 = vector.extract_strided_slice %10 {offsets = [8, 0], sizes = [2, 128], strides = [1, 1]} : vector<16x128xf32> to vector<2x128xf32>
    %cst_40 = arith.constant dense<0.000000e+00> : vector<2x128xf32>
    %150 = tpu.matmul %128, %12, %cst_40 {dimension_numbers = #tpu.dot_dimension_numbers<[1], [0], [0], [1], [0, 0, 1, 1], [], []>} : vector<2x32xf32>, vector<32x128xf32>, vector<2x128xf32> -> vector<2x128xf32>
    %151 = arith.addf %149, %150 : vector<2x128xf32>
    %152 = arith.negf %151 : vector<2x128xf32>
    %153 = math.exp %152 : vector<2x128xf32>
    %cst_41 = arith.constant 1.000000e+00 : f32
    %154 = vector.broadcast %cst_41 : f32 to vector<2x128xf32>
    %155 = arith.addf %154, %153 : vector<2x128xf32>
    %156 = arith.divf %154, %155 : vector<2x128xf32>
    %157 = math.tanh %151 : vector<2x128xf32>
    %158 = vector.extract_strided_slice %156 {offsets = [0, 0], sizes = [2, 32], strides = [1, 1]} : vector<2x128xf32> to vector<2x32xf32>
    %159 = vector.extract_strided_slice %156 {offsets = [0, 32], sizes = [2, 32], strides = [1, 1]} : vector<2x128xf32> to vector<2x32xf32>
    %160 = vector.extract_strided_slice %157 {offsets = [0, 64], sizes = [2, 32], strides = [1, 1]} : vector<2x128xf32> to vector<2x32xf32>
    %161 = vector.extract_strided_slice %156 {offsets = [0, 96], sizes = [2, 32], strides = [1, 1]} : vector<2x128xf32> to vector<2x32xf32>
    %162 = arith.mulf %159, %126 : vector<2x32xf32>
    %163 = arith.mulf %158, %160 : vector<2x32xf32>
    %164 = arith.addf %162, %163 : vector<2x32xf32>
    %165 = math.tanh %164 : vector<2x32xf32>
    %166 = arith.mulf %161, %165 : vector<2x32xf32>
    %cst_42 = arith.constant dense<0.000000e+00> : vector<2x128xf32>
    %167 = tpu.matmul %166, %14, %cst_42 {dimension_numbers = #tpu.dot_dimension_numbers<[1], [0], [0], [1], [0, 0, 1, 1], [], []>} : vector<2x32xf32>, vector<32x128xf32>, vector<2x128xf32> -> vector<2x128xf32>
    %168 = vector.extract_strided_slice %5 {offsets = [8, 0], sizes = [2, 128], strides = [1, 1]} : vector<16x128xf32> to vector<2x128xf32>
    %cst_43 = arith.constant dense<0.000000e+00> : vector<2x128xf32>
    %169 = tpu.matmul %147, %11, %cst_43 {dimension_numbers = #tpu.dot_dimension_numbers<[1], [0], [0], [1], [0, 0, 1, 1], [], []>} : vector<2x32xf32>, vector<32x128xf32>, vector<2x128xf32> -> vector<2x128xf32>
    %170 = arith.addf %168, %169 : vector<2x128xf32>
    %171 = arith.negf %170 : vector<2x128xf32>
    %172 = math.exp %171 : vector<2x128xf32>
    %cst_44 = arith.constant 1.000000e+00 : f32
    %173 = vector.broadcast %cst_44 : f32 to vector<2x128xf32>
    %174 = arith.addf %173, %172 : vector<2x128xf32>
    %175 = arith.divf %173, %174 : vector<2x128xf32>
    %176 = math.tanh %170 : vector<2x128xf32>
    %177 = vector.extract_strided_slice %175 {offsets = [0, 0], sizes = [2, 32], strides = [1, 1]} : vector<2x128xf32> to vector<2x32xf32>
    %178 = vector.extract_strided_slice %175 {offsets = [0, 32], sizes = [2, 32], strides = [1, 1]} : vector<2x128xf32> to vector<2x32xf32>
    %179 = vector.extract_strided_slice %176 {offsets = [0, 64], sizes = [2, 32], strides = [1, 1]} : vector<2x128xf32> to vector<2x32xf32>
    %180 = vector.extract_strided_slice %175 {offsets = [0, 96], sizes = [2, 32], strides = [1, 1]} : vector<2x128xf32> to vector<2x32xf32>
    %181 = arith.mulf %178, %145 : vector<2x32xf32>
    %182 = arith.mulf %177, %179 : vector<2x32xf32>
    %183 = arith.addf %181, %182 : vector<2x32xf32>
    %184 = math.tanh %183 : vector<2x32xf32>
    %185 = arith.mulf %180, %184 : vector<2x32xf32>
    %cst_45 = arith.constant dense<0.000000e+00> : vector<2x128xf32>
    %186 = tpu.matmul %185, %13, %cst_45 {dimension_numbers = #tpu.dot_dimension_numbers<[1], [0], [0], [1], [0, 0, 1, 1], [], []>} : vector<2x32xf32>, vector<32x128xf32>, vector<2x128xf32> -> vector<2x128xf32>
    %187 = arith.addf %167, %186 : vector<2x128xf32>
    %188 = vector.extract_strided_slice %10 {offsets = [6, 0], sizes = [2, 128], strides = [1, 1]} : vector<16x128xf32> to vector<2x128xf32>
    %cst_46 = arith.constant dense<0.000000e+00> : vector<2x128xf32>
    %189 = tpu.matmul %166, %12, %cst_46 {dimension_numbers = #tpu.dot_dimension_numbers<[1], [0], [0], [1], [0, 0, 1, 1], [], []>} : vector<2x32xf32>, vector<32x128xf32>, vector<2x128xf32> -> vector<2x128xf32>
    %190 = arith.addf %188, %189 : vector<2x128xf32>
    %191 = arith.negf %190 : vector<2x128xf32>
    %192 = math.exp %191 : vector<2x128xf32>
    %cst_47 = arith.constant 1.000000e+00 : f32
    %193 = vector.broadcast %cst_47 : f32 to vector<2x128xf32>
    %194 = arith.addf %193, %192 : vector<2x128xf32>
    %195 = arith.divf %193, %194 : vector<2x128xf32>
    %196 = math.tanh %190 : vector<2x128xf32>
    %197 = vector.extract_strided_slice %195 {offsets = [0, 0], sizes = [2, 32], strides = [1, 1]} : vector<2x128xf32> to vector<2x32xf32>
    %198 = vector.extract_strided_slice %195 {offsets = [0, 32], sizes = [2, 32], strides = [1, 1]} : vector<2x128xf32> to vector<2x32xf32>
    %199 = vector.extract_strided_slice %196 {offsets = [0, 64], sizes = [2, 32], strides = [1, 1]} : vector<2x128xf32> to vector<2x32xf32>
    %200 = vector.extract_strided_slice %195 {offsets = [0, 96], sizes = [2, 32], strides = [1, 1]} : vector<2x128xf32> to vector<2x32xf32>
    %201 = arith.mulf %198, %164 : vector<2x32xf32>
    %202 = arith.mulf %197, %199 : vector<2x32xf32>
    %203 = arith.addf %201, %202 : vector<2x32xf32>
    %204 = math.tanh %203 : vector<2x32xf32>
    %205 = arith.mulf %200, %204 : vector<2x32xf32>
    %cst_48 = arith.constant dense<0.000000e+00> : vector<2x128xf32>
    %206 = tpu.matmul %205, %14, %cst_48 {dimension_numbers = #tpu.dot_dimension_numbers<[1], [0], [0], [1], [0, 0, 1, 1], [], []>} : vector<2x32xf32>, vector<32x128xf32>, vector<2x128xf32> -> vector<2x128xf32>
    %207 = arith.addf %148, %206 : vector<2x128xf32>
    %208 = vector.extract_strided_slice %5 {offsets = [10, 0], sizes = [2, 128], strides = [1, 1]} : vector<16x128xf32> to vector<2x128xf32>
    %cst_49 = arith.constant dense<0.000000e+00> : vector<2x128xf32>
    %209 = tpu.matmul %185, %11, %cst_49 {dimension_numbers = #tpu.dot_dimension_numbers<[1], [0], [0], [1], [0, 0, 1, 1], [], []>} : vector<2x32xf32>, vector<32x128xf32>, vector<2x128xf32> -> vector<2x128xf32>
    %210 = arith.addf %208, %209 : vector<2x128xf32>
    %211 = arith.negf %210 : vector<2x128xf32>
    %212 = math.exp %211 : vector<2x128xf32>
    %cst_50 = arith.constant 1.000000e+00 : f32
    %213 = vector.broadcast %cst_50 : f32 to vector<2x128xf32>
    %214 = arith.addf %213, %212 : vector<2x128xf32>
    %215 = arith.divf %213, %214 : vector<2x128xf32>
    %216 = math.tanh %210 : vector<2x128xf32>
    %217 = vector.extract_strided_slice %215 {offsets = [0, 0], sizes = [2, 32], strides = [1, 1]} : vector<2x128xf32> to vector<2x32xf32>
    %218 = vector.extract_strided_slice %215 {offsets = [0, 32], sizes = [2, 32], strides = [1, 1]} : vector<2x128xf32> to vector<2x32xf32>
    %219 = vector.extract_strided_slice %216 {offsets = [0, 64], sizes = [2, 32], strides = [1, 1]} : vector<2x128xf32> to vector<2x32xf32>
    %220 = vector.extract_strided_slice %215 {offsets = [0, 96], sizes = [2, 32], strides = [1, 1]} : vector<2x128xf32> to vector<2x32xf32>
    %221 = arith.mulf %218, %183 : vector<2x32xf32>
    %222 = arith.mulf %217, %219 : vector<2x32xf32>
    %223 = arith.addf %221, %222 : vector<2x32xf32>
    %224 = math.tanh %223 : vector<2x32xf32>
    %225 = arith.mulf %220, %224 : vector<2x32xf32>
    %cst_51 = arith.constant dense<0.000000e+00> : vector<2x128xf32>
    %226 = tpu.matmul %225, %13, %cst_51 {dimension_numbers = #tpu.dot_dimension_numbers<[1], [0], [0], [1], [0, 0, 1, 1], [], []>} : vector<2x32xf32>, vector<32x128xf32>, vector<2x128xf32> -> vector<2x128xf32>
    %227 = arith.addf %129, %226 : vector<2x128xf32>
    %228 = vector.extract_strided_slice %10 {offsets = [4, 0], sizes = [2, 128], strides = [1, 1]} : vector<16x128xf32> to vector<2x128xf32>
    %cst_52 = arith.constant dense<0.000000e+00> : vector<2x128xf32>
    %229 = tpu.matmul %205, %12, %cst_52 {dimension_numbers = #tpu.dot_dimension_numbers<[1], [0], [0], [1], [0, 0, 1, 1], [], []>} : vector<2x32xf32>, vector<32x128xf32>, vector<2x128xf32> -> vector<2x128xf32>
    %230 = arith.addf %228, %229 : vector<2x128xf32>
    %231 = arith.negf %230 : vector<2x128xf32>
    %232 = math.exp %231 : vector<2x128xf32>
    %cst_53 = arith.constant 1.000000e+00 : f32
    %233 = vector.broadcast %cst_53 : f32 to vector<2x128xf32>
    %234 = arith.addf %233, %232 : vector<2x128xf32>
    %235 = arith.divf %233, %234 : vector<2x128xf32>
    %236 = math.tanh %230 : vector<2x128xf32>
    %237 = vector.extract_strided_slice %235 {offsets = [0, 0], sizes = [2, 32], strides = [1, 1]} : vector<2x128xf32> to vector<2x32xf32>
    %238 = vector.extract_strided_slice %235 {offsets = [0, 32], sizes = [2, 32], strides = [1, 1]} : vector<2x128xf32> to vector<2x32xf32>
    %239 = vector.extract_strided_slice %236 {offsets = [0, 64], sizes = [2, 32], strides = [1, 1]} : vector<2x128xf32> to vector<2x32xf32>
    %240 = vector.extract_strided_slice %235 {offsets = [0, 96], sizes = [2, 32], strides = [1, 1]} : vector<2x128xf32> to vector<2x32xf32>
    %241 = arith.mulf %238, %203 : vector<2x32xf32>
    %242 = arith.mulf %237, %239 : vector<2x32xf32>
    %243 = arith.addf %241, %242 : vector<2x32xf32>
    %244 = math.tanh %243 : vector<2x32xf32>
    %245 = arith.mulf %240, %244 : vector<2x32xf32>
    %cst_54 = arith.constant dense<0.000000e+00> : vector<2x128xf32>
    %246 = tpu.matmul %245, %14, %cst_54 {dimension_numbers = #tpu.dot_dimension_numbers<[1], [0], [0], [1], [0, 0, 1, 1], [], []>} : vector<2x32xf32>, vector<32x128xf32>, vector<2x128xf32> -> vector<2x128xf32>
    %247 = arith.addf %110, %246 : vector<2x128xf32>
    %248 = vector.extract_strided_slice %5 {offsets = [12, 0], sizes = [2, 128], strides = [1, 1]} : vector<16x128xf32> to vector<2x128xf32>
    %cst_55 = arith.constant dense<0.000000e+00> : vector<2x128xf32>
    %249 = tpu.matmul %225, %11, %cst_55 {dimension_numbers = #tpu.dot_dimension_numbers<[1], [0], [0], [1], [0, 0, 1, 1], [], []>} : vector<2x32xf32>, vector<32x128xf32>, vector<2x128xf32> -> vector<2x128xf32>
    %250 = arith.addf %248, %249 : vector<2x128xf32>
    %251 = arith.negf %250 : vector<2x128xf32>
    %252 = math.exp %251 : vector<2x128xf32>
    %cst_56 = arith.constant 1.000000e+00 : f32
    %253 = vector.broadcast %cst_56 : f32 to vector<2x128xf32>
    %254 = arith.addf %253, %252 : vector<2x128xf32>
    %255 = arith.divf %253, %254 : vector<2x128xf32>
    %256 = math.tanh %250 : vector<2x128xf32>
    %257 = vector.extract_strided_slice %255 {offsets = [0, 0], sizes = [2, 32], strides = [1, 1]} : vector<2x128xf32> to vector<2x32xf32>
    %258 = vector.extract_strided_slice %255 {offsets = [0, 32], sizes = [2, 32], strides = [1, 1]} : vector<2x128xf32> to vector<2x32xf32>
    %259 = vector.extract_strided_slice %256 {offsets = [0, 64], sizes = [2, 32], strides = [1, 1]} : vector<2x128xf32> to vector<2x32xf32>
    %260 = vector.extract_strided_slice %255 {offsets = [0, 96], sizes = [2, 32], strides = [1, 1]} : vector<2x128xf32> to vector<2x32xf32>
    %261 = arith.mulf %258, %223 : vector<2x32xf32>
    %262 = arith.mulf %257, %259 : vector<2x32xf32>
    %263 = arith.addf %261, %262 : vector<2x32xf32>
    %264 = math.tanh %263 : vector<2x32xf32>
    %265 = arith.mulf %260, %264 : vector<2x32xf32>
    %cst_57 = arith.constant dense<0.000000e+00> : vector<2x128xf32>
    %266 = tpu.matmul %265, %13, %cst_57 {dimension_numbers = #tpu.dot_dimension_numbers<[1], [0], [0], [1], [0, 0, 1, 1], [], []>} : vector<2x32xf32>, vector<32x128xf32>, vector<2x128xf32> -> vector<2x128xf32>
    %267 = arith.addf %91, %266 : vector<2x128xf32>
    %268 = vector.extract_strided_slice %10 {offsets = [2, 0], sizes = [2, 128], strides = [1, 1]} : vector<16x128xf32> to vector<2x128xf32>
    %cst_58 = arith.constant dense<0.000000e+00> : vector<2x128xf32>
    %269 = tpu.matmul %245, %12, %cst_58 {dimension_numbers = #tpu.dot_dimension_numbers<[1], [0], [0], [1], [0, 0, 1, 1], [], []>} : vector<2x32xf32>, vector<32x128xf32>, vector<2x128xf32> -> vector<2x128xf32>
    %270 = arith.addf %268, %269 : vector<2x128xf32>
    %271 = arith.negf %270 : vector<2x128xf32>
    %272 = math.exp %271 : vector<2x128xf32>
    %cst_59 = arith.constant 1.000000e+00 : f32
    %273 = vector.broadcast %cst_59 : f32 to vector<2x128xf32>
    %274 = arith.addf %273, %272 : vector<2x128xf32>
    %275 = arith.divf %273, %274 : vector<2x128xf32>
    %276 = math.tanh %270 : vector<2x128xf32>
    %277 = vector.extract_strided_slice %275 {offsets = [0, 0], sizes = [2, 32], strides = [1, 1]} : vector<2x128xf32> to vector<2x32xf32>
    %278 = vector.extract_strided_slice %275 {offsets = [0, 32], sizes = [2, 32], strides = [1, 1]} : vector<2x128xf32> to vector<2x32xf32>
    %279 = vector.extract_strided_slice %276 {offsets = [0, 64], sizes = [2, 32], strides = [1, 1]} : vector<2x128xf32> to vector<2x32xf32>
    %280 = vector.extract_strided_slice %275 {offsets = [0, 96], sizes = [2, 32], strides = [1, 1]} : vector<2x128xf32> to vector<2x32xf32>
    %281 = arith.mulf %278, %243 : vector<2x32xf32>
    %282 = arith.mulf %277, %279 : vector<2x32xf32>
    %283 = arith.addf %281, %282 : vector<2x32xf32>
    %284 = math.tanh %283 : vector<2x32xf32>
    %285 = arith.mulf %280, %284 : vector<2x32xf32>
    %cst_60 = arith.constant dense<0.000000e+00> : vector<2x128xf32>
    %286 = tpu.matmul %285, %14, %cst_60 {dimension_numbers = #tpu.dot_dimension_numbers<[1], [0], [0], [1], [0, 0, 1, 1], [], []>} : vector<2x32xf32>, vector<32x128xf32>, vector<2x128xf32> -> vector<2x128xf32>
    %287 = arith.addf %72, %286 : vector<2x128xf32>
    %288 = vector.extract_strided_slice %5 {offsets = [14, 0], sizes = [2, 128], strides = [1, 1]} : vector<16x128xf32> to vector<2x128xf32>
    %cst_61 = arith.constant dense<0.000000e+00> : vector<2x128xf32>
    %289 = tpu.matmul %265, %11, %cst_61 {dimension_numbers = #tpu.dot_dimension_numbers<[1], [0], [0], [1], [0, 0, 1, 1], [], []>} : vector<2x32xf32>, vector<32x128xf32>, vector<2x128xf32> -> vector<2x128xf32>
    %290 = arith.addf %288, %289 : vector<2x128xf32>
    %291 = arith.negf %290 : vector<2x128xf32>
    %292 = math.exp %291 : vector<2x128xf32>
    %cst_62 = arith.constant 1.000000e+00 : f32
    %293 = vector.broadcast %cst_62 : f32 to vector<2x128xf32>
    %294 = arith.addf %293, %292 : vector<2x128xf32>
    %295 = arith.divf %293, %294 : vector<2x128xf32>
    %296 = math.tanh %290 : vector<2x128xf32>
    %297 = vector.extract_strided_slice %295 {offsets = [0, 0], sizes = [2, 32], strides = [1, 1]} : vector<2x128xf32> to vector<2x32xf32>
    %298 = vector.extract_strided_slice %295 {offsets = [0, 32], sizes = [2, 32], strides = [1, 1]} : vector<2x128xf32> to vector<2x32xf32>
    %299 = vector.extract_strided_slice %296 {offsets = [0, 64], sizes = [2, 32], strides = [1, 1]} : vector<2x128xf32> to vector<2x32xf32>
    %300 = vector.extract_strided_slice %295 {offsets = [0, 96], sizes = [2, 32], strides = [1, 1]} : vector<2x128xf32> to vector<2x32xf32>
    %301 = arith.mulf %298, %263 : vector<2x32xf32>
    %302 = arith.mulf %297, %299 : vector<2x32xf32>
    %303 = arith.addf %301, %302 : vector<2x32xf32>
    %304 = math.tanh %303 : vector<2x32xf32>
    %305 = arith.mulf %300, %304 : vector<2x32xf32>
    %cst_63 = arith.constant dense<0.000000e+00> : vector<2x128xf32>
    %306 = tpu.matmul %305, %13, %cst_63 {dimension_numbers = #tpu.dot_dimension_numbers<[1], [0], [0], [1], [0, 0, 1, 1], [], []>} : vector<2x32xf32>, vector<32x128xf32>, vector<2x128xf32> -> vector<2x128xf32>
    %307 = arith.addf %53, %306 : vector<2x128xf32>
    %308 = vector.extract_strided_slice %10 {offsets = [0, 0], sizes = [2, 128], strides = [1, 1]} : vector<16x128xf32> to vector<2x128xf32>
    %cst_64 = arith.constant dense<0.000000e+00> : vector<2x128xf32>
    %309 = tpu.matmul %285, %12, %cst_64 {dimension_numbers = #tpu.dot_dimension_numbers<[1], [0], [0], [1], [0, 0, 1, 1], [], []>} : vector<2x32xf32>, vector<32x128xf32>, vector<2x128xf32> -> vector<2x128xf32>
    %310 = arith.addf %308, %309 : vector<2x128xf32>
    %311 = arith.negf %310 : vector<2x128xf32>
    %312 = math.exp %311 : vector<2x128xf32>
    %cst_65 = arith.constant 1.000000e+00 : f32
    %313 = vector.broadcast %cst_65 : f32 to vector<2x128xf32>
    %314 = arith.addf %313, %312 : vector<2x128xf32>
    %315 = arith.divf %313, %314 : vector<2x128xf32>
    %316 = math.tanh %310 : vector<2x128xf32>
    %317 = vector.extract_strided_slice %315 {offsets = [0, 0], sizes = [2, 32], strides = [1, 1]} : vector<2x128xf32> to vector<2x32xf32>
    %318 = vector.extract_strided_slice %315 {offsets = [0, 32], sizes = [2, 32], strides = [1, 1]} : vector<2x128xf32> to vector<2x32xf32>
    %319 = vector.extract_strided_slice %316 {offsets = [0, 64], sizes = [2, 32], strides = [1, 1]} : vector<2x128xf32> to vector<2x32xf32>
    %320 = vector.extract_strided_slice %315 {offsets = [0, 96], sizes = [2, 32], strides = [1, 1]} : vector<2x128xf32> to vector<2x32xf32>
    %321 = arith.mulf %318, %283 : vector<2x32xf32>
    %322 = arith.mulf %317, %319 : vector<2x32xf32>
    %323 = arith.addf %321, %322 : vector<2x32xf32>
    %324 = math.tanh %323 : vector<2x32xf32>
    %325 = arith.mulf %320, %324 : vector<2x32xf32>
    %cst_66 = arith.constant dense<0.000000e+00> : vector<2x128xf32>
    %326 = tpu.matmul %325, %14, %cst_66 {dimension_numbers = #tpu.dot_dimension_numbers<[1], [0], [0], [1], [0, 0, 1, 1], [], []>} : vector<2x32xf32>, vector<32x128xf32>, vector<2x128xf32> -> vector<2x128xf32>
    %327 = arith.addf %34, %326 : vector<2x128xf32>
    %c0_67 = arith.constant 0 : index
    %c0_68 = arith.constant 0 : index
    %328 = vector.load %arg9[%c0_67, %c0_68] : memref<32x128xf32, #tpu.memory_space<vmem>>, vector<32x128xf32>
    %c0_69 = arith.constant 0 : index
    %c0_70 = arith.constant 0 : index
    %329 = vector.load %arg10[%c0_69, %c0_70] : memref<1x128xf32, #tpu.memory_space<vmem>>, vector<1x128xf32>
    %330 = vector.broadcast %329 : vector<1x128xf32> to vector<2x128xf32>
    %331 = arith.addf %307, %330 : vector<2x128xf32>
    %cst_71 = arith.constant dense<0.000000e+00> : vector<2x128xf32>
    %332 = tpu.matmul %15, %328, %cst_71 {dimension_numbers = #tpu.dot_dimension_numbers<[1], [0], [0], [1], [0, 0, 1, 1], [], []>} : vector<2x32xf32>, vector<32x128xf32>, vector<2x128xf32> -> vector<2x128xf32>
    %333 = arith.addf %331, %332 : vector<2x128xf32>
    %334 = arith.negf %333 : vector<2x128xf32>
    %335 = math.exp %334 : vector<2x128xf32>
    %cst_72 = arith.constant 1.000000e+00 : f32
    %336 = vector.broadcast %cst_72 : f32 to vector<2x128xf32>
    %337 = arith.addf %336, %335 : vector<2x128xf32>
    %338 = arith.divf %336, %337 : vector<2x128xf32>
    %339 = math.tanh %333 : vector<2x128xf32>
    %340 = vector.extract_strided_slice %338 {offsets = [0, 0], sizes = [2, 32], strides = [1, 1]} : vector<2x128xf32> to vector<2x32xf32>
    %341 = vector.extract_strided_slice %338 {offsets = [0, 32], sizes = [2, 32], strides = [1, 1]} : vector<2x128xf32> to vector<2x32xf32>
    %342 = vector.extract_strided_slice %339 {offsets = [0, 64], sizes = [2, 32], strides = [1, 1]} : vector<2x128xf32> to vector<2x32xf32>
    %343 = vector.extract_strided_slice %338 {offsets = [0, 96], sizes = [2, 32], strides = [1, 1]} : vector<2x128xf32> to vector<2x32xf32>
    %344 = arith.mulf %341, %15 : vector<2x32xf32>
    %345 = arith.mulf %340, %342 : vector<2x32xf32>
    %346 = arith.addf %344, %345 : vector<2x32xf32>
    %347 = math.tanh %346 : vector<2x32xf32>
    %348 = arith.mulf %343, %347 : vector<2x32xf32>
    %349 = vector.broadcast %329 : vector<1x128xf32> to vector<2x128xf32>
    %350 = arith.addf %267, %349 : vector<2x128xf32>
    %cst_73 = arith.constant dense<0.000000e+00> : vector<2x128xf32>
    %351 = tpu.matmul %348, %328, %cst_73 {dimension_numbers = #tpu.dot_dimension_numbers<[1], [0], [0], [1], [0, 0, 1, 1], [], []>} : vector<2x32xf32>, vector<32x128xf32>, vector<2x128xf32> -> vector<2x128xf32>
    %352 = arith.addf %350, %351 : vector<2x128xf32>
    %353 = arith.negf %352 : vector<2x128xf32>
    %354 = math.exp %353 : vector<2x128xf32>
    %cst_74 = arith.constant 1.000000e+00 : f32
    %355 = vector.broadcast %cst_74 : f32 to vector<2x128xf32>
    %356 = arith.addf %355, %354 : vector<2x128xf32>
    %357 = arith.divf %355, %356 : vector<2x128xf32>
    %358 = math.tanh %352 : vector<2x128xf32>
    %359 = vector.extract_strided_slice %357 {offsets = [0, 0], sizes = [2, 32], strides = [1, 1]} : vector<2x128xf32> to vector<2x32xf32>
    %360 = vector.extract_strided_slice %357 {offsets = [0, 32], sizes = [2, 32], strides = [1, 1]} : vector<2x128xf32> to vector<2x32xf32>
    %361 = vector.extract_strided_slice %358 {offsets = [0, 64], sizes = [2, 32], strides = [1, 1]} : vector<2x128xf32> to vector<2x32xf32>
    %362 = vector.extract_strided_slice %357 {offsets = [0, 96], sizes = [2, 32], strides = [1, 1]} : vector<2x128xf32> to vector<2x32xf32>
    %363 = arith.mulf %360, %346 : vector<2x32xf32>
    %364 = arith.mulf %359, %361 : vector<2x32xf32>
    %365 = arith.addf %363, %364 : vector<2x32xf32>
    %366 = math.tanh %365 : vector<2x32xf32>
    %367 = arith.mulf %362, %366 : vector<2x32xf32>
    %368 = vector.broadcast %329 : vector<1x128xf32> to vector<2x128xf32>
    %369 = arith.addf %227, %368 : vector<2x128xf32>
    %cst_75 = arith.constant dense<0.000000e+00> : vector<2x128xf32>
    %370 = tpu.matmul %367, %328, %cst_75 {dimension_numbers = #tpu.dot_dimension_numbers<[1], [0], [0], [1], [0, 0, 1, 1], [], []>} : vector<2x32xf32>, vector<32x128xf32>, vector<2x128xf32> -> vector<2x128xf32>
    %371 = arith.addf %369, %370 : vector<2x128xf32>
    %372 = arith.negf %371 : vector<2x128xf32>
    %373 = math.exp %372 : vector<2x128xf32>
    %cst_76 = arith.constant 1.000000e+00 : f32
    %374 = vector.broadcast %cst_76 : f32 to vector<2x128xf32>
    %375 = arith.addf %374, %373 : vector<2x128xf32>
    %376 = arith.divf %374, %375 : vector<2x128xf32>
    %377 = math.tanh %371 : vector<2x128xf32>
    %378 = vector.extract_strided_slice %376 {offsets = [0, 0], sizes = [2, 32], strides = [1, 1]} : vector<2x128xf32> to vector<2x32xf32>
    %379 = vector.extract_strided_slice %376 {offsets = [0, 32], sizes = [2, 32], strides = [1, 1]} : vector<2x128xf32> to vector<2x32xf32>
    %380 = vector.extract_strided_slice %377 {offsets = [0, 64], sizes = [2, 32], strides = [1, 1]} : vector<2x128xf32> to vector<2x32xf32>
    %381 = vector.extract_strided_slice %376 {offsets = [0, 96], sizes = [2, 32], strides = [1, 1]} : vector<2x128xf32> to vector<2x32xf32>
    %382 = arith.mulf %379, %365 : vector<2x32xf32>
    %383 = arith.mulf %378, %380 : vector<2x32xf32>
    %384 = arith.addf %382, %383 : vector<2x32xf32>
    %385 = math.tanh %384 : vector<2x32xf32>
    %386 = arith.mulf %381, %385 : vector<2x32xf32>
    %387 = vector.broadcast %329 : vector<1x128xf32> to vector<2x128xf32>
    %388 = arith.addf %187, %387 : vector<2x128xf32>
    %cst_77 = arith.constant dense<0.000000e+00> : vector<2x128xf32>
    %389 = tpu.matmul %386, %328, %cst_77 {dimension_numbers = #tpu.dot_dimension_numbers<[1], [0], [0], [1], [0, 0, 1, 1], [], []>} : vector<2x32xf32>, vector<32x128xf32>, vector<2x128xf32> -> vector<2x128xf32>
    %390 = arith.addf %388, %389 : vector<2x128xf32>
    %391 = arith.negf %390 : vector<2x128xf32>
    %392 = math.exp %391 : vector<2x128xf32>
    %cst_78 = arith.constant 1.000000e+00 : f32
    %393 = vector.broadcast %cst_78 : f32 to vector<2x128xf32>
    %394 = arith.addf %393, %392 : vector<2x128xf32>
    %395 = arith.divf %393, %394 : vector<2x128xf32>
    %396 = math.tanh %390 : vector<2x128xf32>
    %397 = vector.extract_strided_slice %395 {offsets = [0, 0], sizes = [2, 32], strides = [1, 1]} : vector<2x128xf32> to vector<2x32xf32>
    %398 = vector.extract_strided_slice %395 {offsets = [0, 32], sizes = [2, 32], strides = [1, 1]} : vector<2x128xf32> to vector<2x32xf32>
    %399 = vector.extract_strided_slice %396 {offsets = [0, 64], sizes = [2, 32], strides = [1, 1]} : vector<2x128xf32> to vector<2x32xf32>
    %400 = vector.extract_strided_slice %395 {offsets = [0, 96], sizes = [2, 32], strides = [1, 1]} : vector<2x128xf32> to vector<2x32xf32>
    %401 = arith.mulf %398, %384 : vector<2x32xf32>
    %402 = arith.mulf %397, %399 : vector<2x32xf32>
    %403 = arith.addf %401, %402 : vector<2x32xf32>
    %404 = math.tanh %403 : vector<2x32xf32>
    %405 = arith.mulf %400, %404 : vector<2x32xf32>
    %406 = vector.broadcast %329 : vector<1x128xf32> to vector<2x128xf32>
    %407 = arith.addf %207, %406 : vector<2x128xf32>
    %cst_79 = arith.constant dense<0.000000e+00> : vector<2x128xf32>
    %408 = tpu.matmul %405, %328, %cst_79 {dimension_numbers = #tpu.dot_dimension_numbers<[1], [0], [0], [1], [0, 0, 1, 1], [], []>} : vector<2x32xf32>, vector<32x128xf32>, vector<2x128xf32> -> vector<2x128xf32>
    %409 = arith.addf %407, %408 : vector<2x128xf32>
    %410 = arith.negf %409 : vector<2x128xf32>
    %411 = math.exp %410 : vector<2x128xf32>
    %cst_80 = arith.constant 1.000000e+00 : f32
    %412 = vector.broadcast %cst_80 : f32 to vector<2x128xf32>
    %413 = arith.addf %412, %411 : vector<2x128xf32>
    %414 = arith.divf %412, %413 : vector<2x128xf32>
    %415 = math.tanh %409 : vector<2x128xf32>
    %416 = vector.extract_strided_slice %414 {offsets = [0, 0], sizes = [2, 32], strides = [1, 1]} : vector<2x128xf32> to vector<2x32xf32>
    %417 = vector.extract_strided_slice %414 {offsets = [0, 32], sizes = [2, 32], strides = [1, 1]} : vector<2x128xf32> to vector<2x32xf32>
    %418 = vector.extract_strided_slice %415 {offsets = [0, 64], sizes = [2, 32], strides = [1, 1]} : vector<2x128xf32> to vector<2x32xf32>
    %419 = vector.extract_strided_slice %414 {offsets = [0, 96], sizes = [2, 32], strides = [1, 1]} : vector<2x128xf32> to vector<2x32xf32>
    %420 = arith.mulf %417, %403 : vector<2x32xf32>
    %421 = arith.mulf %416, %418 : vector<2x32xf32>
    %422 = arith.addf %420, %421 : vector<2x32xf32>
    %423 = math.tanh %422 : vector<2x32xf32>
    %424 = arith.mulf %419, %423 : vector<2x32xf32>
    %425 = vector.broadcast %329 : vector<1x128xf32> to vector<2x128xf32>
    %426 = arith.addf %247, %425 : vector<2x128xf32>
    %cst_81 = arith.constant dense<0.000000e+00> : vector<2x128xf32>
    %427 = tpu.matmul %424, %328, %cst_81 {dimension_numbers = #tpu.dot_dimension_numbers<[1], [0], [0], [1], [0, 0, 1, 1], [], []>} : vector<2x32xf32>, vector<32x128xf32>, vector<2x128xf32> -> vector<2x128xf32>
    %428 = arith.addf %426, %427 : vector<2x128xf32>
    %429 = arith.negf %428 : vector<2x128xf32>
    %430 = math.exp %429 : vector<2x128xf32>
    %cst_82 = arith.constant 1.000000e+00 : f32
    %431 = vector.broadcast %cst_82 : f32 to vector<2x128xf32>
    %432 = arith.addf %431, %430 : vector<2x128xf32>
    %433 = arith.divf %431, %432 : vector<2x128xf32>
    %434 = math.tanh %428 : vector<2x128xf32>
    %435 = vector.extract_strided_slice %433 {offsets = [0, 0], sizes = [2, 32], strides = [1, 1]} : vector<2x128xf32> to vector<2x32xf32>
    %436 = vector.extract_strided_slice %433 {offsets = [0, 32], sizes = [2, 32], strides = [1, 1]} : vector<2x128xf32> to vector<2x32xf32>
    %437 = vector.extract_strided_slice %434 {offsets = [0, 64], sizes = [2, 32], strides = [1, 1]} : vector<2x128xf32> to vector<2x32xf32>
    %438 = vector.extract_strided_slice %433 {offsets = [0, 96], sizes = [2, 32], strides = [1, 1]} : vector<2x128xf32> to vector<2x32xf32>
    %439 = arith.mulf %436, %422 : vector<2x32xf32>
    %440 = arith.mulf %435, %437 : vector<2x32xf32>
    %441 = arith.addf %439, %440 : vector<2x32xf32>
    %442 = math.tanh %441 : vector<2x32xf32>
    %443 = arith.mulf %438, %442 : vector<2x32xf32>
    %444 = vector.broadcast %329 : vector<1x128xf32> to vector<2x128xf32>
    %445 = arith.addf %287, %444 : vector<2x128xf32>
    %cst_83 = arith.constant dense<0.000000e+00> : vector<2x128xf32>
    %446 = tpu.matmul %443, %328, %cst_83 {dimension_numbers = #tpu.dot_dimension_numbers<[1], [0], [0], [1], [0, 0, 1, 1], [], []>} : vector<2x32xf32>, vector<32x128xf32>, vector<2x128xf32> -> vector<2x128xf32>
    %447 = arith.addf %445, %446 : vector<2x128xf32>
    %448 = arith.negf %447 : vector<2x128xf32>
    %449 = math.exp %448 : vector<2x128xf32>
    %cst_84 = arith.constant 1.000000e+00 : f32
    %450 = vector.broadcast %cst_84 : f32 to vector<2x128xf32>
    %451 = arith.addf %450, %449 : vector<2x128xf32>
    %452 = arith.divf %450, %451 : vector<2x128xf32>
    %453 = math.tanh %447 : vector<2x128xf32>
    %454 = vector.extract_strided_slice %452 {offsets = [0, 0], sizes = [2, 32], strides = [1, 1]} : vector<2x128xf32> to vector<2x32xf32>
    %455 = vector.extract_strided_slice %452 {offsets = [0, 32], sizes = [2, 32], strides = [1, 1]} : vector<2x128xf32> to vector<2x32xf32>
    %456 = vector.extract_strided_slice %453 {offsets = [0, 64], sizes = [2, 32], strides = [1, 1]} : vector<2x128xf32> to vector<2x32xf32>
    %457 = vector.extract_strided_slice %452 {offsets = [0, 96], sizes = [2, 32], strides = [1, 1]} : vector<2x128xf32> to vector<2x32xf32>
    %458 = arith.mulf %455, %441 : vector<2x32xf32>
    %459 = arith.mulf %454, %456 : vector<2x32xf32>
    %460 = arith.addf %458, %459 : vector<2x32xf32>
    %461 = math.tanh %460 : vector<2x32xf32>
    %462 = arith.mulf %457, %461 : vector<2x32xf32>
    %463 = vector.broadcast %329 : vector<1x128xf32> to vector<2x128xf32>
    %464 = arith.addf %327, %463 : vector<2x128xf32>
    %cst_85 = arith.constant dense<0.000000e+00> : vector<2x128xf32>
    %465 = tpu.matmul %462, %328, %cst_85 {dimension_numbers = #tpu.dot_dimension_numbers<[1], [0], [0], [1], [0, 0, 1, 1], [], []>} : vector<2x32xf32>, vector<32x128xf32>, vector<2x128xf32> -> vector<2x128xf32>
    %466 = arith.addf %464, %465 : vector<2x128xf32>
    %467 = arith.negf %466 : vector<2x128xf32>
    %468 = math.exp %467 : vector<2x128xf32>
    %cst_86 = arith.constant 1.000000e+00 : f32
    %469 = vector.broadcast %cst_86 : f32 to vector<2x128xf32>
    %470 = arith.addf %469, %468 : vector<2x128xf32>
    %471 = arith.divf %469, %470 : vector<2x128xf32>
    %472 = math.tanh %466 : vector<2x128xf32>
    %473 = vector.extract_strided_slice %471 {offsets = [0, 0], sizes = [2, 32], strides = [1, 1]} : vector<2x128xf32> to vector<2x32xf32>
    %474 = vector.extract_strided_slice %471 {offsets = [0, 32], sizes = [2, 32], strides = [1, 1]} : vector<2x128xf32> to vector<2x32xf32>
    %475 = vector.extract_strided_slice %472 {offsets = [0, 64], sizes = [2, 32], strides = [1, 1]} : vector<2x128xf32> to vector<2x32xf32>
    %476 = vector.extract_strided_slice %471 {offsets = [0, 96], sizes = [2, 32], strides = [1, 1]} : vector<2x128xf32> to vector<2x32xf32>
    %477 = arith.mulf %474, %460 : vector<2x32xf32>
    %478 = arith.mulf %473, %475 : vector<2x32xf32>
    %479 = arith.addf %477, %478 : vector<2x32xf32>
    %480 = math.tanh %479 : vector<2x32xf32>
    %481 = arith.mulf %476, %480 : vector<2x32xf32>
    %c0_87 = arith.constant 0 : index
    %c0_88 = arith.constant 0 : index
    %482 = vector.load %arg11[%c0_87, %c0_88] : memref<32x4xf32, #tpu.memory_space<vmem>>, vector<32x4xf32>
    %cst_89 = arith.constant dense<0.000000e+00> : vector<2x4xf32>
    %483 = tpu.matmul %481, %482, %cst_89 {dimension_numbers = #tpu.dot_dimension_numbers<[1], [0], [0], [1], [0, 0, 1, 1], [], []>} : vector<2x32xf32>, vector<32x4xf32>, vector<2x4xf32> -> vector<2x4xf32>
    %c0_90 = arith.constant 0 : index
    %c0_91 = arith.constant 0 : index
    %484 = vector.load %arg12[%c0_90, %c0_91] : memref<1x4xf32, #tpu.memory_space<vmem>>, vector<1x4xf32>
    %485 = vector.broadcast %484 : vector<1x4xf32> to vector<2x4xf32>
    %486 = arith.addf %483, %485 : vector<2x4xf32>
    %c0_92 = arith.constant 0 : index
    %c0_93 = arith.constant 0 : index
    %487 = vector.load %arg13[%c0_92, %c0_93] : memref<2x4xf32, #tpu.memory_space<vmem>>, vector<2x4xf32>
    tpu.vector_store %arg13[%c0_92, %c0_93], %486 {strides = array<i32>} : memref<2x4xf32, #tpu.memory_space<vmem>>, vector<2x4xf32>,
    return
  }
}

</mosaic_0001>

<llo_original>
// kernel: lstm_glove_vecs_forward.1
$region0: #{lstm_glove_vecs_forward.1}
  #allocation0 [shape = 'u32[]', space=smem, size = 0x4, offset = 0x4, fixed_abs, tag = 'smem constant byte address 0x4 - core index']
  #allocation1 [shape = 'u32[144,128]{1,0:T(1,128)}', space=vmem, size = 0x12000, scoped, tag = 'internal scratch']
  %s0 = inlined_call_operand.vmem [shape: f32[16,32], index: 0, kind: input, shape index: {}]
  %s1 = inlined_call_operand.vmem [shape: f32[32,128], index: 1, kind: input, shape index: {}]
  %s2 = inlined_call_operand.vmem [shape: f32[32,128], index: 2, kind: input, shape index: {}]
  %s3 = inlined_call_operand.vmem [shape: f32[1,128], index: 3, kind: input, shape index: {}]
  %s4 = inlined_call_operand.vmem [shape: f32[32,128], index: 4, kind: input, shape index: {}]
  %s5 = inlined_call_operand.vmem [shape: f32[32,128], index: 5, kind: input, shape index: {}]
  %s6 = inlined_call_operand.vmem [shape: f32[1,128], index: 6, kind: input, shape index: {}]
  %s7 = inlined_call_operand.vmem [shape: f32[32,128], index: 7, kind: input, shape index: {}]
  %s8 = inlined_call_operand.vmem [shape: f32[32,128], index: 8, kind: input, shape index: {}]
  %s9 = inlined_call_operand.vmem [shape: f32[32,128], index: 9, kind: input, shape index: {}]
  %s10 = inlined_call_operand.vmem [shape: f32[1,128], index: 10, kind: input, shape index: {}]
  %s11 = inlined_call_operand.vmem [shape: f32[32,4], index: 11, kind: input, shape index: {}]
  %s12 = inlined_call_operand.vmem [shape: f32[1,4], index: 12, kind: input, shape index: {}]
  %s13 = inlined_call_operand.hbm [shape: f32[2,4], index: 13, kind: output, shape index: {}]
  %s14 = sld [smem:[#allocation0]]
  $region62: #{lstm_glove_vecs_forward.1} parent=0
    _
  %s16 = ssub.s32 1, %s14
  %s17 = scalar_select 0, %s16, %s14
  $region1: #{lstm_glove_vecs_forward.1} parent=0
    #allocation2 [shape = 'u8[1024]{0}', space=vmem, size = 0x400, scoped, tag = 'output window, operand 0, single buffered']
    #allocation3 [shape = 's32[1]{0}', space=sflag, size = 0x4, scoped, tag = 'scoped memory for lstm_glove_vecs_forward.1']
    %18 = vsyncpa [#allocation3], 0
    // Predicated region
    $region2: #{lstm_glove_vecs_forward.1} parent=1 // pred_check
      _
    $region3: #{lstm_glove_vecs_forward.1} parent=1 // pred_check_branch
      %20 = sbr.rel (0) target = $region5
    $region4: #{lstm_glove_vecs_forward.1} parent=1 // pred_region
      _
    $region5: #{lstm_glove_vecs_forward.1} parent=1 // pred_fallthru
      _
    // Predicated region
    $region6: #{lstm_glove_vecs_forward.1} parent=1 // pred_check
      _
    $region7: #{lstm_glove_vecs_forward.1} parent=1 // pred_check_branch
      %22 = sbr.rel (0) target = $region9
    $region8: #{lstm_glove_vecs_forward.1} parent=1 // pred_region
      _
    $region9: #{lstm_glove_vecs_forward.1} parent=1 // pred_fallthru
      _
    // Predicated region
    $region10: #{lstm_glove_vecs_forward.1} parent=1 // pred_check
      _
    $region11: #{lstm_glove_vecs_forward.1} parent=1 // pred_check_branch
      %24 = sbr.rel (0) target = $region13
    $region12: #{lstm_glove_vecs_forward.1} parent=1 // pred_region
      _
    $region13: #{lstm_glove_vecs_forward.1} parent=1 // pred_fallthru
      _
    // Predicated region
    $region14: #{lstm_glove_vecs_forward.1} parent=1 // pred_check
      _
    $region15: #{lstm_glove_vecs_forward.1} parent=1 // pred_check_branch
      %26 = sbr.rel (0) target = $region17
    $region16: #{lstm_glove_vecs_forward.1} parent=1 // pred_region
      _
    $region17: #{lstm_glove_vecs_forward.1} parent=1 // pred_fallthru
      _
    // Predicated region
    $region18: #{lstm_glove_vecs_forward.1} parent=1 // pred_check
      _
    $region19: #{lstm_glove_vecs_forward.1} parent=1 // pred_check_branch
      %28 = sbr.rel (0) target = $region21
    $region20: #{lstm_glove_vecs_forward.1} parent=1 // pred_region
      _
    $region21: #{lstm_glove_vecs_forward.1} parent=1 // pred_fallthru
      _
    // Predicated region
    $region22: #{lstm_glove_vecs_forward.1} parent=1 // pred_check
      _
    $region23: #{lstm_glove_vecs_forward.1} parent=1 // pred_check_branch
      %30 = sbr.rel (0) target = $region25
    $region24: #{lstm_glove_vecs_forward.1} parent=1 // pred_region
      _
    $region25: #{lstm_glove_vecs_forward.1} parent=1 // pred_fallthru
      _
    // Predicated region
    $region26: #{lstm_glove_vecs_forward.1} parent=1 // pred_check
      _
    $region27: #{lstm_glove_vecs_forward.1} parent=1 // pred_check_branch
      %32 = sbr.rel (0) target = $region29
    $region28: #{lstm_glove_vecs_forward.1} parent=1 // pred_region
      _
    $region29: #{lstm_glove_vecs_forward.1} parent=1 // pred_fallthru
      _
    // Predicated region
    $region30: #{lstm_glove_vecs_forward.1} parent=1 // pred_check
      _
    $region31: #{lstm_glove_vecs_forward.1} parent=1 // pred_check_branch
      %34 = sbr.rel (0) target = $region33
    $region32: #{lstm_glove_vecs_forward.1} parent=1 // pred_region
      _
    $region33: #{lstm_glove_vecs_forward.1} parent=1 // pred_fallthru
      _
    // Predicated region
    $region34: #{lstm_glove_vecs_forward.1} parent=1 // pred_check
      _
    $region35: #{lstm_glove_vecs_forward.1} parent=1 // pred_check_branch
      %36 = sbr.rel (0) target = $region37
    $region36: #{lstm_glove_vecs_forward.1} parent=1 // pred_region
      _
    $region37: #{lstm_glove_vecs_forward.1} parent=1 // pred_fallthru
      _
    // Predicated region
    $region38: #{lstm_glove_vecs_forward.1} parent=1 // pred_check
      _
    $region39: #{lstm_glove_vecs_forward.1} parent=1 // pred_check_branch
      %38 = sbr.rel (0) target = $region41
    $region40: #{lstm_glove_vecs_forward.1} parent=1 // pred_region
      _
    $region41: #{lstm_glove_vecs_forward.1} parent=1 // pred_fallthru
      _
    // Predicated region
    $region42: #{lstm_glove_vecs_forward.1} parent=1 // pred_check
      _
    $region43: #{lstm_glove_vecs_forward.1} parent=1 // pred_check_branch
      %40 = sbr.rel (0) target = $region45
    $region44: #{lstm_glove_vecs_forward.1} parent=1 // pred_region
      _
    $region45: #{lstm_glove_vecs_forward.1} parent=1 // pred_fallthru
      _
    // Predicated region
    $region46: #{lstm_glove_vecs_forward.1} parent=1 // pred_check
      _
    $region47: #{lstm_glove_vecs_forward.1} parent=1 // pred_check_branch
      %42 = sbr.rel (0) target = $region49
    $region48: #{lstm_glove_vecs_forward.1} parent=1 // pred_region
      _
    $region49: #{lstm_glove_vecs_forward.1} parent=1 // pred_fallthru
      _
    // Predicated region
    $region50: #{lstm_glove_vecs_forward.1} parent=1 // pred_check
      _
    $region51: #{lstm_glove_vecs_forward.1} parent=1 // pred_check_branch
      %44 = sbr.rel (0) target = $region53
    $region52: #{lstm_glove_vecs_forward.1} parent=1 // pred_region
      _
    $region53: #{lstm_glove_vecs_forward.1} parent=1 // pred_fallthru
      _
    %v45 = vld [vmem:[%s0] sm:$0xff]
    %v46 = vld [vmem:[%s0 + $0x8] sm:$0xff]
    %v47 = vld [vmem:[%s1] sm:$0xff]
    %v48 = vld [vmem:[%s1 + $0x8] sm:$0xff]
    %v49 = vld [vmem:[%s1 + $0x10] sm:$0xff]
    %v50 = vld [vmem:[%s1 + $0x18] sm:$0xff]
    %v51 = vld [vmem:[%s3] sm:$0x1]
    %v53 = vlaneseq
    %v54 = vshrl.u32 %v53, 7
    %v55 = vsub.s32 0, %v54
    %v56 = vrot.slane %v51, %v55
    %vm58 = vcmask 261120
    %v60 = vsel %vm58, %v45, 0
    %v63 = vsel %vm58, %v46, 0
    %65 = vmatprep.subr.mxu0 0.0
    %66 = vmatpush1.msra.mxu0 0.0
    %67 = vmatprep.subr.mxu0 0.0
    %68 = vmatpush1.msra.mxu0 0.0
    %69 = vmatprep.subr.mxu0 0.0
    %70 = vmatpush1.msra.mxu0 0.0
    %71 = vmatprep.subr.mxu0 0.0
    %72 = vmatpush1.msra.mxu0 0.0
    %73 = vmatprep.subr.mxu0 0.0
    %74 = vmatpush1.msra.mxu0 0.0
    %75 = vmatprep.subr.mxu0 0.0
    %76 = vmatpush1.msra.mxu0 0.0
    %77 = vmatprep.subr.mxu0 0.0
    %78 = vmatpush1.msra.mxu0 0.0
    %79 = vmatprep.subr.mxu0 0.0
    %80 = vmatpush1.msra.mxu0 0.0
    %81 = vmatprep.subr.mxu0 0.0
    %82 = vmatpush1.msra.mxu0 0.0
    %83 = vmatprep.subr.mxu0 0.0
    %84 = vmatpush1.msra.mxu0 0.0
    %85 = vmatprep.subr.mxu0 0.0
    %86 = vmatpush1.msra.mxu0 0.0
    %87 = vmatprep.subr.mxu0 0.0
    %88 = vmatpush1.msra.mxu0 0.0
    %89 = vmatprep.subr.mxu0 0.0
    %90 = vmatpush1.msra.mxu0 %v50
    %91 = vmatprep.subr.mxu0 0.0
    %92 = vmatpush1.msra.mxu0 %v49
    %93 = vmatprep.subr.mxu0 0.0
    %94 = vmatpush1.msra.mxu0 %v48
    %95 = vmatprep.subr.mxu0 0.0
    %96 = vmatpush1.msra.mxu0 %v47
    %97 = vmatprep.subr.mxu0 0.0
    %98 = vmatpush2.msra.mxu0 0.0
    %99 = vmatprep.subr.mxu0 0.0
    %100 = vmatpush2.msra.mxu0 0.0
    %101 = vmatprep.subr.mxu0 0.0
    %102 = vmatpush2.msra.mxu0 0.0
    %103 = vmatprep.subr.mxu0 0.0
    %104 = vmatpush2.msra.mxu0 0.0
    %105 = vmatprep.subr.mxu0 0.0
    %106 = vmatpush2.msra.mxu0 0.0
    %107 = vmatprep.subr.mxu0 0.0
    %108 = vmatpush2.msra.mxu0 0.0
    %109 = vmatprep.subr.mxu0 0.0
    %110 = vmatpush2.msra.mxu0 0.0
    %111 = vmatprep.subr.mxu0 0.0
    %112 = vmatpush2.msra.mxu0 0.0
    %113 = vmatprep.subr.mxu0 0.0
    %114 = vmatpush2.msra.mxu0 0.0
    %115 = vmatprep.subr.mxu0 0.0
    %116 = vmatpush2.msra.mxu0 0.0
    %117 = vmatprep.subr.mxu0 0.0
    %118 = vmatpush2.msra.mxu0 0.0
    %119 = vmatprep.subr.mxu0 0.0
    %120 = vmatpush2.msra.mxu0 0.0
    %121 = vmatprep.subr.mxu0 0.0
    %122 = vmatpush2.msra.mxu0 0.0
    %123 = vmatprep.subr.mxu0 0.0
    %124 = vmatpush2.msra.mxu0 0.0
    %125 = vmatprep.subr.mxu0 0.0
    %126 = vmatpush2.msra.mxu0 0.0
    %127 = vmatprep.subr.mxu0 0.0
    %128 = vmatpush2.msra.mxu0 0.0
    %129 = vmatprep.mubr.f32.mxu0 0.0
    %130 = vmatmul.mubr.f32.gmra.mxu0 %v60
    %v131 = vpop.f32.mrf.mxu0
    %v132 = vadd.f32 %v56, %v131
    %v133 = vpop.f32.mrf.mxu0
    %134 = vmatprep.mubr.f32.mxu0 0.0
    %135 = vmatmul.mubr.f32.gmra.mxu0 %v63
    %v136 = vpop.f32.mrf.mxu0
    %v137 = vadd.f32 %v56, %v136
    %v138 = vpop.f32.mrf.mxu0
    %139 = vdwg.mxu0
    %v140 = vld [vmem:[%s4] sm:$0xff]
    %v141 = vld [vmem:[%s4 + $0x8] sm:$0xff]
    %v142 = vld [vmem:[%s4 + $0x10] sm:$0xff]
    %v143 = vld [vmem:[%s4 + $0x18] sm:$0xff]
    %v144 = vld [vmem:[%s6] sm:$0x1]
    %v146 = vlaneseq
    %v147 = vshrl.u32 %v146, 7
    %v148 = vsub.s32 0, %v147
    %v149 = vrot.slane %v144, %v148
    %151 = vmatprep.subr.mxu0 0.0
    %152 = vmatpush1.msra.mxu0 0.0
    %153 = vmatprep.subr.mxu0 0.0
    %154 = vmatpush1.msra.mxu0 0.0
    %155 = vmatprep.subr.mxu0 0.0
    %156 = vmatpush1.msra.mxu0 0.0
    %157 = vmatprep.subr.mxu0 0.0
    %158 = vmatpush1.msra.mxu0 0.0
    %159 = vmatprep.subr.mxu0 0.0
    %160 = vmatpush1.msra.mxu0 0.0
    %161 = vmatprep.subr.mxu0 0.0
    %162 = vmatpush1.msra.mxu0 0.0
    %163 = vmatprep.subr.mxu0 0.0
    %164 = vmatpush1.msra.mxu0 0.0
    %165 = vmatprep.subr.mxu0 0.0
    %166 = vmatpush1.msra.mxu0 0.0
    %167 = vmatprep.subr.mxu0 0.0
    %168 = vmatpush1.msra.mxu0 0.0
    %169 = vmatprep.subr.mxu0 0.0
    %170 = vmatpush1.msra.mxu0 0.0
    %171 = vmatprep.subr.mxu0 0.0
    %172 = vmatpush1.msra.mxu0 0.0
    %173 = vmatprep.subr.mxu0 0.0
    %174 = vmatpush1.msra.mxu0 0.0
    %175 = vmatprep.subr.mxu0 0.0
    %176 = vmatpush1.msra.mxu0 %v143
    %177 = vmatprep.subr.mxu0 0.0
    %178 = vmatpush1.msra.mxu0 %v142
    %179 = vmatprep.subr.mxu0 0.0
    %180 = vmatpush1.msra.mxu0 %v141
    %181 = vmatprep.subr.mxu0 0.0
    %182 = vmatpush1.msra.mxu0 %v140
    %183 = vmatprep.subr.mxu0 0.0
    %184 = vmatpush2.msra.mxu0 0.0
    %185 = vmatprep.subr.mxu0 0.0
    %186 = vmatpush2.msra.mxu0 0.0
    %187 = vmatprep.subr.mxu0 0.0
    %188 = vmatpush2.msra.mxu0 0.0
    %189 = vmatprep.subr.mxu0 0.0
    %190 = vmatpush2.msra.mxu0 0.0
    %191 = vmatprep.subr.mxu0 0.0
    %192 = vmatpush2.msra.mxu0 0.0
    %193 = vmatprep.subr.mxu0 0.0
    %194 = vmatpush2.msra.mxu0 0.0
    %195 = vmatprep.subr.mxu0 0.0
    %196 = vmatpush2.msra.mxu0 0.0
    %197 = vmatprep.subr.mxu0 0.0
    %198 = vmatpush2.msra.mxu0 0.0
    %199 = vmatprep.subr.mxu0 0.0
    %200 = vmatpush2.msra.mxu0 0.0
    %201 = vmatprep.subr.mxu0 0.0
    %202 = vmatpush2.msra.mxu0 0.0
    %203 = vmatprep.subr.mxu0 0.0
    %204 = vmatpush2.msra.mxu0 0.0
    %205 = vmatprep.subr.mxu0 0.0
    %206 = vmatpush2.msra.mxu0 0.0
    %207 = vmatprep.subr.mxu0 0.0
    %208 = vmatpush2.msra.mxu0 0.0
    %209 = vmatprep.subr.mxu0 0.0
    %210 = vmatpush2.msra.mxu0 0.0
    %211 = vmatprep.subr.mxu0 0.0
    %212 = vmatpush2.msra.mxu0 0.0
    %213 = vmatprep.subr.mxu0 0.0
    %214 = vmatpush2.msra.mxu0 0.0
    %215 = vmatprep.mubr.f32.mxu0 0.0
    %216 = vmatmul.mubr.f32.gmra.mxu0 %v60
    %v217 = vpop.f32.mrf.mxu0
    %v218 = vadd.f32 %v149, %v217
    %v219 = vpop.f32.mrf.mxu0
    %220 = vmatprep.mubr.f32.mxu0 0.0
    %221 = vmatmul.mubr.f32.gmra.mxu0 %v63
    %v222 = vpop.f32.mrf.mxu0
    %v223 = vadd.f32 %v149, %v222
    %v224 = vpop.f32.mrf.mxu0
    %225 = vdwg.mxu0
    %v226 = vld [vmem:[%s2] sm:$0xff]
    %v227 = vld [vmem:[%s2 + $0x8] sm:$0xff]
    %v228 = vld [vmem:[%s2 + $0x10] sm:$0xff]
    %v229 = vld [vmem:[%s2 + $0x18] sm:$0xff]
    %v230 = vld [vmem:[%s5] sm:$0xff]
    %v231 = vld [vmem:[%s5 + $0x8] sm:$0xff]
    %v232 = vld [vmem:[%s5 + $0x10] sm:$0xff]
    %v233 = vld [vmem:[%s5 + $0x18] sm:$0xff]
    %v234 = vld [vmem:[%s7] sm:$0xff]
    %v235 = vld [vmem:[%s7 + $0x8] sm:$0xff]
    %v236 = vld [vmem:[%s7 + $0x10] sm:$0xff]
    %v237 = vld [vmem:[%s7 + $0x18] sm:$0xff]
    %v238 = vld [vmem:[%s8] sm:$0xff]
    %v239 = vld [vmem:[%s8 + $0x8] sm:$0xff]
    %v240 = vld [vmem:[%s8 + $0x10] sm:$0xff]
    %v241 = vld [vmem:[%s8 + $0x18] sm:$0xff]
    %v243 = vsel %vm58, 0.0, 0
    %245 = vmatprep.subr.mxu0 0.0
    %246 = vmatpush1.msra.mxu0 0.0
    %247 = vmatprep.subr.mxu0 0.0
    %248 = vmatpush1.msra.mxu0 0.0
    %249 = vmatprep.subr.mxu0 0.0
    %250 = vmatpush1.msra.mxu0 0.0
    %251 = vmatprep.subr.mxu0 0.0
    %252 = vmatpush1.msra.mxu0 0.0
    %253 = vmatprep.subr.mxu0 0.0
    %254 = vmatpush1.msra.mxu0 0.0
    %255 = vmatprep.subr.mxu0 0.0
    %256 = vmatpush1.msra.mxu0 0.0
    %257 = vmatprep.subr.mxu0 0.0
    %258 = vmatpush1.msra.mxu0 0.0
    %259 = vmatprep.subr.mxu0 0.0
    %260 = vmatpush1.msra.mxu0 0.0
    %261 = vmatprep.subr.mxu0 0.0
    %262 = vmatpush1.msra.mxu0 0.0
    %263 = vmatprep.subr.mxu0 0.0
    %264 = vmatpush1.msra.mxu0 0.0
    %265 = vmatprep.subr.mxu0 0.0
    %266 = vmatpush1.msra.mxu0 0.0
    %267 = vmatprep.subr.mxu0 0.0
    %268 = vmatpush1.msra.mxu0 0.0
    %269 = vmatprep.subr.mxu0 0.0
    %270 = vmatpush1.msra.mxu0 %v229
    %271 = vmatprep.subr.mxu0 0.0
    %272 = vmatpush1.msra.mxu0 %v228
    %273 = vmatprep.subr.mxu0 0.0
    %274 = vmatpush1.msra.mxu0 %v227
    %275 = vmatprep.subr.mxu0 0.0
    %276 = vmatpush1.msra.mxu0 %v226
    %277 = vmatprep.subr.mxu0 0.0
    %278 = vmatpush2.msra.mxu0 0.0
    %279 = vmatprep.subr.mxu0 0.0
    %280 = vmatpush2.msra.mxu0 0.0
    %281 = vmatprep.subr.mxu0 0.0
    %282 = vmatpush2.msra.mxu0 0.0
    %283 = vmatprep.subr.mxu0 0.0
    %284 = vmatpush2.msra.mxu0 0.0
    %285 = vmatprep.subr.mxu0 0.0
    %286 = vmatpush2.msra.mxu0 0.0
    %287 = vmatprep.subr.mxu0 0.0
    %288 = vmatpush2.msra.mxu0 0.0
    %289 = vmatprep.subr.mxu0 0.0
    %290 = vmatpush2.msra.mxu0 0.0
    %291 = vmatprep.subr.mxu0 0.0
    %292 = vmatpush2.msra.mxu0 0.0
    %293 = vmatprep.subr.mxu0 0.0
    %294 = vmatpush2.msra.mxu0 0.0
    %295 = vmatprep.subr.mxu0 0.0
    %296 = vmatpush2.msra.mxu0 0.0
    %297 = vmatprep.subr.mxu0 0.0
    %298 = vmatpush2.msra.mxu0 0.0
    %299 = vmatprep.subr.mxu0 0.0
    %300 = vmatpush2.msra.mxu0 0.0
    %301 = vmatprep.subr.mxu0 0.0
    %302 = vmatpush2.msra.mxu0 0.0
    %303 = vmatprep.subr.mxu0 0.0
    %304 = vmatpush2.msra.mxu0 0.0
    %305 = vmatprep.subr.mxu0 0.0
    %306 = vmatpush2.msra.mxu0 0.0
    %307 = vmatprep.subr.mxu0 0.0
    %308 = vmatpush2.msra.mxu0 0.0
    %309 = vmatprep.mubr.f32.mxu0 0.0
    %310 = vmatmul.mubr.f32.gmra.mxu0 %v243
    %v311 = vpop.f32.mrf.mxu0
    %v312 = vadd.f32 0.0, %v311
    %v313 = vpop.f32.mrf.mxu0
    %314 = vdwg.mxu0
    %v315 = vadd.f32 %v132, %v312
    %v316 = vxor.u32 %v315, 2147483648
    %v317 = vmul.f32 %v316, 1.442695
    %v318 = vpow.pop %v317
    %v319 = vadd.f32 %v318, 1.0
    %v320 = vrcp.pop %v319
    %v321 = vmul.f32 1.0, %v320
    %v322 = vtanh.pop %v315
    %v323 = vmul.f32 %v321, 0.0
    %325 = vrot.lane.b32.xlu0 %v322, 64
    %v326 = vpop.permute.xlu0 %325
    %v328 = vmul.f32 %v321, %v326
    %330 = vrot.lane.b32.xlu0 %v328, 32
    %v331 = vpop.permute.xlu0 %330
    %v333 = vadd.f32 %v323, %v331
    %v334 = vtanh.pop %v333
    %336 = vrot.lane.b32.xlu0 %v334, 64
    %v337 = vpop.permute.xlu0 %336
    %v339 = vmul.f32 %v321, %v337
    %340 = vmatprep.subr.mxu0 0.0
    %341 = vmatpush1.msra.mxu0 0.0
    %342 = vmatprep.subr.mxu0 0.0
    %343 = vmatpush1.msra.mxu0 0.0
    %344 = vmatprep.subr.mxu0 0.0
    %345 = vmatpush1.msra.mxu0 0.0
    %346 = vmatprep.subr.mxu0 0.0
    %347 = vmatpush1.msra.mxu0 0.0
    %348 = vmatprep.subr.mxu0 0.0
    %349 = vmatpush1.msra.mxu0 0.0
    %350 = vmatprep.subr.mxu0 0.0
    %351 = vmatpush1.msra.mxu0 0.0
    %352 = vmatprep.subr.mxu0 0.0
    %353 = vmatpush1.msra.mxu0 0.0
    %354 = vmatprep.subr.mxu0 0.0
    %355 = vmatpush1.msra.mxu0 0.0
    %356 = vmatprep.subr.mxu0 0.0
    %357 = vmatpush1.msra.mxu0 0.0
    %358 = vmatprep.subr.mxu0 0.0
    %359 = vmatpush1.msra.mxu0 0.0
    %360 = vmatprep.subr.mxu0 0.0
    %361 = vmatpush1.msra.mxu0 0.0
    %362 = vmatprep.subr.mxu0 0.0
    %363 = vmatpush1.msra.mxu0 0.0
    %364 = vmatprep.subr.mxu0 0.0
    %365 = vmatpush1.msra.mxu0 %v233
    %366 = vmatprep.subr.mxu0 0.0
    %367 = vmatpush1.msra.mxu0 %v232
    %368 = vmatprep.subr.mxu0 0.0
    %369 = vmatpush1.msra.mxu0 %v231
    %370 = vmatprep.subr.mxu0 0.0
    %371 = vmatpush1.msra.mxu0 %v230
    %372 = vmatprep.subr.mxu0 0.0
    %373 = vmatpush2.msra.mxu0 0.0
    %374 = vmatprep.subr.mxu0 0.0
    %375 = vmatpush2.msra.mxu0 0.0
    %376 = vmatprep.subr.mxu0 0.0
    %377 = vmatpush2.msra.mxu0 0.0
    %378 = vmatprep.subr.mxu0 0.0
    %379 = vmatpush2.msra.mxu0 0.0
    %380 = vmatprep.subr.mxu0 0.0
    %381 = vmatpush2.msra.mxu0 0.0
    %382 = vmatprep.subr.mxu0 0.0
    %383 = vmatpush2.msra.mxu0 0.0
    %384 = vmatprep.subr.mxu0 0.0
    %385 = vmatpush2.msra.mxu0 0.0
    %386 = vmatprep.subr.mxu0 0.0
    %387 = vmatpush2.msra.mxu0 0.0
    %388 = vmatprep.subr.mxu0 0.0
    %389 = vmatpush2.msra.mxu0 0.0
    %390 = vmatprep.subr.mxu0 0.0
    %391 = vmatpush2.msra.mxu0 0.0
    %392 = vmatprep.subr.mxu0 0.0
    %393 = vmatpush2.msra.mxu0 0.0
    %394 = vmatprep.subr.mxu0 0.0
    %395 = vmatpush2.msra.mxu0 0.0
    %396 = vmatprep.subr.mxu0 0.0
    %397 = vmatpush2.msra.mxu0 0.0
    %398 = vmatprep.subr.mxu0 0.0
    %399 = vmatpush2.msra.mxu0 0.0
    %400 = vmatprep.subr.mxu0 0.0
    %401 = vmatpush2.msra.mxu0 0.0
    %402 = vmatprep.subr.mxu0 0.0
    %403 = vmatpush2.msra.mxu0 0.0
    %404 = vmatprep.mubr.f32.mxu0 0.0
    %405 = vmatmul.mubr.f32.gmra.mxu0 %v243
    %v406 = vpop.f32.mrf.mxu0
    %v407 = vadd.f32 0.0, %v406
    %v408 = vpop.f32.mrf.mxu0
    %409 = vdwg.mxu0
    %v411 = vrot.slane %v407, 2
    %v413 = vadd.f32 %v223, %v411
    %v414 = vxor.u32 %v413, 2147483648
    %v415 = vmul.f32 %v414, 1.442695
    %v416 = vpow.pop %v415
    %v417 = vadd.f32 %v416, 1.0
    %v418 = vrcp.pop %v417
    %v419 = vmul.f32 1.0, %v418
    %v420 = vtanh.pop %v413
    %v421 = vmul.f32 %v419, 0.0
    %423 = vrot.lane.b32.xlu0 %v420, 64
    %v424 = vpop.permute.xlu0 %423
    %v426 = vmul.f32 %v419, %v424
    %428 = vrot.lane.b32.xlu0 %v426, 32
    %v429 = vpop.permute.xlu0 %428
    %v431 = vadd.f32 %v421, %v429
    %v432 = vtanh.pop %v431
    %434 = vrot.lane.b32.xlu0 %v432, 64
    %v435 = vpop.permute.xlu0 %434
    %v437 = vmul.f32 %v419, %v435
    %439 = vrot.lane.b32.xlu0 %v339, 32
    %v440 = vpop.permute.xlu0 %439
    %v441 = vsel %vm58, %v440, 0
    %443 = vmatprep.subr.mxu0 0.0
    %444 = vmatpush1.msra.mxu0 0.0
    %445 = vmatprep.subr.mxu0 0.0
    %446 = vmatpush1.msra.mxu0 0.0
    %447 = vmatprep.subr.mxu0 0.0
    %448 = vmatpush1.msra.mxu0 0.0
    %449 = vmatprep.subr.mxu0 0.0
    %450 = vmatpush1.msra.mxu0 0.0
    %451 = vmatprep.subr.mxu0 0.0
    %452 = vmatpush1.msra.mxu0 0.0
    %453 = vmatprep.subr.mxu0 0.0
    %454 = vmatpush1.msra.mxu0 0.0
    %455 = vmatprep.subr.mxu0 0.0
    %456 = vmatpush1.msra.mxu0 0.0
    %457 = vmatprep.subr.mxu0 0.0
    %458 = vmatpush1.msra.mxu0 0.0
    %459 = vmatprep.subr.mxu0 0.0
    %460 = vmatpush1.msra.mxu0 0.0
    %461 = vmatprep.subr.mxu0 0.0
    %462 = vmatpush1.msra.mxu0 0.0
    %463 = vmatprep.subr.mxu0 0.0
    %464 = vmatpush1.msra.mxu0 0.0
    %465 = vmatprep.subr.mxu0 0.0
    %466 = vmatpush1.msra.mxu0 0.0
    %467 = vmatprep.subr.mxu0 0.0
    %468 = vmatpush1.msra.mxu0 %v229
    %469 = vmatprep.subr.mxu0 0.0
    %470 = vmatpush1.msra.mxu0 %v228
    %471 = vmatprep.subr.mxu0 0.0
    %472 = vmatpush1.msra.mxu0 %v227
    %473 = vmatprep.subr.mxu0 0.0
    %474 = vmatpush1.msra.mxu0 %v226
    %475 = vmatprep.subr.mxu0 0.0
    %476 = vmatpush2.msra.mxu0 0.0
    %477 = vmatprep.subr.mxu0 0.0
    %478 = vmatpush2.msra.mxu0 0.0
    %479 = vmatprep.subr.mxu0 0.0
    %480 = vmatpush2.msra.mxu0 0.0
    %481 = vmatprep.subr.mxu0 0.0
    %482 = vmatpush2.msra.mxu0 0.0
    %483 = vmatprep.subr.mxu0 0.0
    %484 = vmatpush2.msra.mxu0 0.0
    %485 = vmatprep.subr.mxu0 0.0
    %486 = vmatpush2.msra.mxu0 0.0
    %487 = vmatprep.subr.mxu0 0.0
    %488 = vmatpush2.msra.mxu0 0.0
    %489 = vmatprep.subr.mxu0 0.0
    %490 = vmatpush2.msra.mxu0 0.0
    %491 = vmatprep.subr.mxu0 0.0
    %492 = vmatpush2.msra.mxu0 0.0
    %493 = vmatprep.subr.mxu0 0.0
    %494 = vmatpush2.msra.mxu0 0.0
    %495 = vmatprep.subr.mxu0 0.0
    %496 = vmatpush2.msra.mxu0 0.0
    %497 = vmatprep.subr.mxu0 0.0
    %498 = vmatpush2.msra.mxu0 0.0
    %499 = vmatprep.subr.mxu0 0.0
    %500 = vmatpush2.msra.mxu0 0.0
    %501 = vmatprep.subr.mxu0 0.0
    %502 = vmatpush2.msra.mxu0 0.0
    %503 = vmatprep.subr.mxu0 0.0
    %504 = vmatpush2.msra.mxu0 0.0
    %505 = vmatprep.subr.mxu0 0.0
    %506 = vmatpush2.msra.mxu0 0.0
    %507 = vmatprep.mubr.f32.mxu0 0.0
    %508 = vmatmul.mubr.f32.gmra.mxu0 %v441
    %v509 = vpop.f32.mrf.mxu0
    %v510 = vadd.f32 0.0, %v509
    %v511 = vpop.f32.mrf.mxu0
    %512 = vdwg.mxu0
    %v514 = vrot.slane %v510, 6
    %v516 = vadd.f32 %v132, %v514
    %v517 = vxor.u32 %v516, 2147483648
    %v518 = vmul.f32 %v517, 1.442695
    %v519 = vpow.pop %v518
    %v520 = vadd.f32 %v519, 1.0
    %v521 = vrcp.pop %v520
    %v522 = vmul.f32 1.0, %v521
    %v523 = vtanh.pop %v516
    %v525 = vrot.slane %v333, 6
    %v527 = vmul.f32 %v522, %v525
    %529 = vrot.lane.b32.xlu0 %v523, 64
    %v530 = vpop.permute.xlu0 %529
    %v532 = vmul.f32 %v522, %v530
    %534 = vrot.lane.b32.xlu0 %v532, 32
    %v535 = vpop.permute.xlu0 %534
    %v537 = vadd.f32 %v527, %v535
    %v538 = vtanh.pop %v537
    %540 = vrot.lane.b32.xlu0 %v538, 64
    %v541 = vpop.permute.xlu0 %540
    %v543 = vmul.f32 %v522, %v541
    %v545 = vrot.slane %v437, 6
    %546 = vrot.lane.b32.xlu0 %v545, 32
    %v547 = vpop.permute.xlu0 %546
    %v548 = vsel %vm58, %v547, 0
    %550 = vmatprep.subr.mxu0 0.0
    %551 = vmatpush1.msra.mxu0 0.0
    %552 = vmatprep.subr.mxu0 0.0
    %553 = vmatpush1.msra.mxu0 0.0
    %554 = vmatprep.subr.mxu0 0.0
    %555 = vmatpush1.msra.mxu0 0.0
    %556 = vmatprep.subr.mxu0 0.0
    %557 = vmatpush1.msra.mxu0 0.0
    %558 = vmatprep.subr.mxu0 0.0
    %559 = vmatpush1.msra.mxu0 0.0
    %560 = vmatprep.subr.mxu0 0.0
    %561 = vmatpush1.msra.mxu0 0.0
    %562 = vmatprep.subr.mxu0 0.0
    %563 = vmatpush1.msra.mxu0 0.0
    %564 = vmatprep.subr.mxu0 0.0
    %565 = vmatpush1.msra.mxu0 0.0
    %566 = vmatprep.subr.mxu0 0.0
    %567 = vmatpush1.msra.mxu0 0.0
    %568 = vmatprep.subr.mxu0 0.0
    %569 = vmatpush1.msra.mxu0 0.0
    %570 = vmatprep.subr.mxu0 0.0
    %571 = vmatpush1.msra.mxu0 0.0
    %572 = vmatprep.subr.mxu0 0.0
    %573 = vmatpush1.msra.mxu0 0.0
    %574 = vmatprep.subr.mxu0 0.0
    %575 = vmatpush1.msra.mxu0 %v233
    %576 = vmatprep.subr.mxu0 0.0
    %577 = vmatpush1.msra.mxu0 %v232
    %578 = vmatprep.subr.mxu0 0.0
    %579 = vmatpush1.msra.mxu0 %v231
    %580 = vmatprep.subr.mxu0 0.0
    %581 = vmatpush1.msra.mxu0 %v230
    %582 = vmatprep.subr.mxu0 0.0
    %583 = vmatpush2.msra.mxu0 0.0
    %584 = vmatprep.subr.mxu0 0.0
    %585 = vmatpush2.msra.mxu0 0.0
    %586 = vmatprep.subr.mxu0 0.0
    %587 = vmatpush2.msra.mxu0 0.0
    %588 = vmatprep.subr.mxu0 0.0
    %589 = vmatpush2.msra.mxu0 0.0
    %590 = vmatprep.subr.mxu0 0.0
    %591 = vmatpush2.msra.mxu0 0.0
    %592 = vmatprep.subr.mxu0 0.0
    %593 = vmatpush2.msra.mxu0 0.0
    %594 = vmatprep.subr.mxu0 0.0
    %595 = vmatpush2.msra.mxu0 0.0
    %596 = vmatprep.subr.mxu0 0.0
    %597 = vmatpush2.msra.mxu0 0.0
    %598 = vmatprep.subr.mxu0 0.0
    %599 = vmatpush2.msra.mxu0 0.0
    %600 = vmatprep.subr.mxu0 0.0
    %601 = vmatpush2.msra.mxu0 0.0
    %602 = vmatprep.subr.mxu0 0.0
    %603 = vmatpush2.msra.mxu0 0.0
    %604 = vmatprep.subr.mxu0 0.0
    %605 = vmatpush2.msra.mxu0 0.0
    %606 = vmatprep.subr.mxu0 0.0
    %607 = vmatpush2.msra.mxu0 0.0
    %608 = vmatprep.subr.mxu0 0.0
    %609 = vmatpush2.msra.mxu0 0.0
    %610 = vmatprep.subr.mxu0 0.0
    %611 = vmatpush2.msra.mxu0 0.0
    %612 = vmatprep.subr.mxu0 0.0
    %613 = vmatpush2.msra.mxu0 0.0
    %614 = vmatprep.mubr.f32.mxu0 0.0
    %615 = vmatmul.mubr.f32.gmra.mxu0 %v548
    %v616 = vpop.f32.mrf.mxu0
    %v617 = vadd.f32 0.0, %v616
    %v618 = vpop.f32.mrf.mxu0
    %619 = vdwg.mxu0
    %v621 = vrot.slane %v617, 4
    %v623 = vadd.f32 %v223, %v621
    %v624 = vxor.u32 %v623, 2147483648
    %v625 = vmul.f32 %v624, 1.442695
    %v626 = vpow.pop %v625
    %v627 = vadd.f32 %v626, 1.0
    %v628 = vrcp.pop %v627
    %v629 = vmul.f32 1.0, %v628
    %v630 = vtanh.pop %v623
    %v632 = vrot.slane %v431, 2
    %v634 = vmul.f32 %v629, %v632
    %636 = vrot.lane.b32.xlu0 %v630, 64
    %v637 = vpop.permute.xlu0 %636
    %v639 = vmul.f32 %v629, %v637
    %641 = vrot.lane.b32.xlu0 %v639, 32
    %v642 = vpop.permute.xlu0 %641
    %v644 = vadd.f32 %v634, %v642
    %v645 = vtanh.pop %v644
    %647 = vrot.lane.b32.xlu0 %v645, 64
    %v648 = vpop.permute.xlu0 %647
    %v650 = vmul.f32 %v629, %v648
    %v652 = vrot.slane %v543, 2
    %653 = vrot.lane.b32.xlu0 %v652, 32
    %v654 = vpop.permute.xlu0 %653
    %v655 = vsel %vm58, %v654, 0
    %657 = vmatprep.subr.mxu0 0.0
    %658 = vmatpush1.msra.mxu0 0.0
    %659 = vmatprep.subr.mxu0 0.0
    %660 = vmatpush1.msra.mxu0 0.0
    %661 = vmatprep.subr.mxu0 0.0
    %662 = vmatpush1.msra.mxu0 0.0
    %663 = vmatprep.subr.mxu0 0.0
    %664 = vmatpush1.msra.mxu0 0.0
    %665 = vmatprep.subr.mxu0 0.0
    %666 = vmatpush1.msra.mxu0 0.0
    %667 = vmatprep.subr.mxu0 0.0
    %668 = vmatpush1.msra.mxu0 0.0
    %669 = vmatprep.subr.mxu0 0.0
    %670 = vmatpush1.msra.mxu0 0.0
    %671 = vmatprep.subr.mxu0 0.0
    %672 = vmatpush1.msra.mxu0 0.0
    %673 = vmatprep.subr.mxu0 0.0
    %674 = vmatpush1.msra.mxu0 0.0
    %675 = vmatprep.subr.mxu0 0.0
    %676 = vmatpush1.msra.mxu0 0.0
    %677 = vmatprep.subr.mxu0 0.0
    %678 = vmatpush1.msra.mxu0 0.0
    %679 = vmatprep.subr.mxu0 0.0
    %680 = vmatpush1.msra.mxu0 0.0
    %681 = vmatprep.subr.mxu0 0.0
    %682 = vmatpush1.msra.mxu0 %v229
    %683 = vmatprep.subr.mxu0 0.0
    %684 = vmatpush1.msra.mxu0 %v228
    %685 = vmatprep.subr.mxu0 0.0
    %686 = vmatpush1.msra.mxu0 %v227
    %687 = vmatprep.subr.mxu0 0.0
    %688 = vmatpush1.msra.mxu0 %v226
    %689 = vmatprep.subr.mxu0 0.0
    %690 = vmatpush2.msra.mxu0 0.0
    %691 = vmatprep.subr.mxu0 0.0
    %692 = vmatpush2.msra.mxu0 0.0
    %693 = vmatprep.subr.mxu0 0.0
    %694 = vmatpush2.msra.mxu0 0.0
    %695 = vmatprep.subr.mxu0 0.0
    %696 = vmatpush2.msra.mxu0 0.0
    %697 = vmatprep.subr.mxu0 0.0
    %698 = vmatpush2.msra.mxu0 0.0
    %699 = vmatprep.subr.mxu0 0.0
    %700 = vmatpush2.msra.mxu0 0.0
    %701 = vmatprep.subr.mxu0 0.0
    %702 = vmatpush2.msra.mxu0 0.0
    %703 = vmatprep.subr.mxu0 0.0
    %704 = vmatpush2.msra.mxu0 0.0
    %705 = vmatprep.subr.mxu0 0.0
    %706 = vmatpush2.msra.mxu0 0.0
    %707 = vmatprep.subr.mxu0 0.0
    %708 = vmatpush2.msra.mxu0 0.0
    %709 = vmatprep.subr.mxu0 0.0
    %710 = vmatpush2.msra.mxu0 0.0
    %711 = vmatprep.subr.mxu0 0.0
    %712 = vmatpush2.msra.mxu0 0.0
    %713 = vmatprep.subr.mxu0 0.0
    %714 = vmatpush2.msra.mxu0 0.0
    %715 = vmatprep.subr.mxu0 0.0
    %716 = vmatpush2.msra.mxu0 0.0
    %717 = vmatprep.subr.mxu0 0.0
    %718 = vmatpush2.msra.mxu0 0.0
    %719 = vmatprep.subr.mxu0 0.0
    %720 = vmatpush2.msra.mxu0 0.0
    %721 = vmatprep.mubr.f32.mxu0 0.0
    %722 = vmatmul.mubr.f32.gmra.mxu0 %v655
    %v723 = vpop.f32.mrf.mxu0
    %v724 = vadd.f32 0.0, %v723
    %v725 = vpop.f32.mrf.mxu0
    %726 = vdwg.mxu0
    %v728 = vrot.slane %v724, 4
    %v730 = vadd.f32 %v132, %v728
    %v731 = vxor.u32 %v730, 2147483648
    %v732 = vmul.f32 %v731, 1.442695
    %v733 = vpow.pop %v732
    %v734 = vadd.f32 %v733, 1.0
    %v735 = vrcp.pop %v734
    %v736 = vmul.f32 1.0, %v735
    %v737 = vtanh.pop %v730
    %v739 = vrot.slane %v537, 6
    %v741 = vmul.f32 %v736, %v739
    %743 = vrot.lane.b32.xlu0 %v737, 64
    %v744 = vpop.permute.xlu0 %743
    %v746 = vmul.f32 %v736, %v744
    %748 = vrot.lane.b32.xlu0 %v746, 32
    %v749 = vpop.permute.xlu0 %748
    %v751 = vadd.f32 %v741, %v749
    %v752 = vtanh.pop %v751
    %754 = vrot.lane.b32.xlu0 %v752, 64
    %v755 = vpop.permute.xlu0 %754
    %v757 = vmul.f32 %v736, %v755
    %v759 = vrot.slane %v650, 4
    %760 = vrot.lane.b32.xlu0 %v759, 32
    %v761 = vpop.permute.xlu0 %760
    %v762 = vsel %vm58, %v761, 0
    %764 = vmatprep.subr.mxu0 0.0
    %765 = vmatpush1.msra.mxu0 0.0
    %766 = vmatprep.subr.mxu0 0.0
    %767 = vmatpush1.msra.mxu0 0.0
    %768 = vmatprep.subr.mxu0 0.0
    %769 = vmatpush1.msra.mxu0 0.0
    %770 = vmatprep.subr.mxu0 0.0
    %771 = vmatpush1.msra.mxu0 0.0
    %772 = vmatprep.subr.mxu0 0.0
    %773 = vmatpush1.msra.mxu0 0.0
    %774 = vmatprep.subr.mxu0 0.0
    %775 = vmatpush1.msra.mxu0 0.0
    %776 = vmatprep.subr.mxu0 0.0
    %777 = vmatpush1.msra.mxu0 0.0
    %778 = vmatprep.subr.mxu0 0.0
    %779 = vmatpush1.msra.mxu0 0.0
    %780 = vmatprep.subr.mxu0 0.0
    %781 = vmatpush1.msra.mxu0 0.0
    %782 = vmatprep.subr.mxu0 0.0
    %783 = vmatpush1.msra.mxu0 0.0
    %784 = vmatprep.subr.mxu0 0.0
    %785 = vmatpush1.msra.mxu0 0.0
    %786 = vmatprep.subr.mxu0 0.0
    %787 = vmatpush1.msra.mxu0 0.0
    %788 = vmatprep.subr.mxu0 0.0
    %789 = vmatpush1.msra.mxu0 %v233
    %790 = vmatprep.subr.mxu0 0.0
    %791 = vmatpush1.msra.mxu0 %v232
    %792 = vmatprep.subr.mxu0 0.0
    %793 = vmatpush1.msra.mxu0 %v231
    %794 = vmatprep.subr.mxu0 0.0
    %795 = vmatpush1.msra.mxu0 %v230
    %796 = vmatprep.subr.mxu0 0.0
    %797 = vmatpush2.msra.mxu0 0.0
    %798 = vmatprep.subr.mxu0 0.0
    %799 = vmatpush2.msra.mxu0 0.0
    %800 = vmatprep.subr.mxu0 0.0
    %801 = vmatpush2.msra.mxu0 0.0
    %802 = vmatprep.subr.mxu0 0.0
    %803 = vmatpush2.msra.mxu0 0.0
    %804 = vmatprep.subr.mxu0 0.0
    %805 = vmatpush2.msra.mxu0 0.0
    %806 = vmatprep.subr.mxu0 0.0
    %807 = vmatpush2.msra.mxu0 0.0
    %808 = vmatprep.subr.mxu0 0.0
    %809 = vmatpush2.msra.mxu0 0.0
    %810 = vmatprep.subr.mxu0 0.0
    %811 = vmatpush2.msra.mxu0 0.0
    %812 = vmatprep.subr.mxu0 0.0
    %813 = vmatpush2.msra.mxu0 0.0
    %814 = vmatprep.subr.mxu0 0.0
    %815 = vmatpush2.msra.mxu0 0.0
    %816 = vmatprep.subr.mxu0 0.0
    %817 = vmatpush2.msra.mxu0 0.0
    %818 = vmatprep.subr.mxu0 0.0
    %819 = vmatpush2.msra.mxu0 0.0
    %820 = vmatprep.subr.mxu0 0.0
    %821 = vmatpush2.msra.mxu0 0.0
    %822 = vmatprep.subr.mxu0 0.0
    %823 = vmatpush2.msra.mxu0 0.0
    %824 = vmatprep.subr.mxu0 0.0
    %825 = vmatpush2.msra.mxu0 0.0
    %826 = vmatprep.subr.mxu0 0.0
    %827 = vmatpush2.msra.mxu0 0.0
    %828 = vmatprep.mubr.f32.mxu0 0.0
    %829 = vmatmul.mubr.f32.gmra.mxu0 %v762
    %v830 = vpop.f32.mrf.mxu0
    %v831 = vadd.f32 0.0, %v830
    %v832 = vpop.f32.mrf.mxu0
    %833 = vdwg.mxu0
    %v835 = vrot.slane %v831, 6
    %v837 = vadd.f32 %v223, %v835
    %v838 = vxor.u32 %v837, 2147483648
    %v839 = vmul.f32 %v838, 1.442695
    %v840 = vpow.pop %v839
    %v841 = vadd.f32 %v840, 1.0
    %v842 = vrcp.pop %v841
    %v843 = vmul.f32 1.0, %v842
    %v844 = vtanh.pop %v837
    %v846 = vrot.slane %v644, 2
    %v848 = vmul.f32 %v843, %v846
    %850 = vrot.lane.b32.xlu0 %v844, 64
    %v851 = vpop.permute.xlu0 %850
    %v853 = vmul.f32 %v843, %v851
    %855 = vrot.lane.b32.xlu0 %v853, 32
    %v856 = vpop.permute.xlu0 %855
    %v858 = vadd.f32 %v848, %v856
    %v859 = vtanh.pop %v858
    %861 = vrot.lane.b32.xlu0 %v859, 64
    %v862 = vpop.permute.xlu0 %861
    %v864 = vmul.f32 %v843, %v862
    %v866 = vrot.slane %v757, 4
    %867 = vrot.lane.b32.xlu0 %v866, 32
    %v868 = vpop.permute.xlu0 %867
    %v869 = vsel %vm58, %v868, 0
    %871 = vmatprep.subr.mxu0 0.0
    %872 = vmatpush1.msra.mxu0 0.0
    %873 = vmatprep.subr.mxu0 0.0
    %874 = vmatpush1.msra.mxu0 0.0
    %875 = vmatprep.subr.mxu0 0.0
    %876 = vmatpush1.msra.mxu0 0.0
    %877 = vmatprep.subr.mxu0 0.0
    %878 = vmatpush1.msra.mxu0 0.0
    %879 = vmatprep.subr.mxu0 0.0
    %880 = vmatpush1.msra.mxu0 0.0
    %881 = vmatprep.subr.mxu0 0.0
    %882 = vmatpush1.msra.mxu0 0.0
    %883 = vmatprep.subr.mxu0 0.0
    %884 = vmatpush1.msra.mxu0 0.0
    %885 = vmatprep.subr.mxu0 0.0
    %886 = vmatpush1.msra.mxu0 0.0
    %887 = vmatprep.subr.mxu0 0.0
    %888 = vmatpush1.msra.mxu0 0.0
    %889 = vmatprep.subr.mxu0 0.0
    %890 = vmatpush1.msra.mxu0 0.0
    %891 = vmatprep.subr.mxu0 0.0
    %892 = vmatpush1.msra.mxu0 0.0
    %893 = vmatprep.subr.mxu0 0.0
    %894 = vmatpush1.msra.mxu0 0.0
    %895 = vmatprep.subr.mxu0 0.0
    %896 = vmatpush1.msra.mxu0 %v229
    %897 = vmatprep.subr.mxu0 0.0
    %898 = vmatpush1.msra.mxu0 %v228
    %899 = vmatprep.subr.mxu0 0.0
    %900 = vmatpush1.msra.mxu0 %v227
    %901 = vmatprep.subr.mxu0 0.0
    %902 = vmatpush1.msra.mxu0 %v226
    %903 = vmatprep.subr.mxu0 0.0
    %904 = vmatpush2.msra.mxu0 0.0
    %905 = vmatprep.subr.mxu0 0.0
    %906 = vmatpush2.msra.mxu0 0.0
    %907 = vmatprep.subr.mxu0 0.0
    %908 = vmatpush2.msra.mxu0 0.0
    %909 = vmatprep.subr.mxu0 0.0
    %910 = vmatpush2.msra.mxu0 0.0
    %911 = vmatprep.subr.mxu0 0.0
    %912 = vmatpush2.msra.mxu0 0.0
    %913 = vmatprep.subr.mxu0 0.0
    %914 = vmatpush2.msra.mxu0 0.0
    %915 = vmatprep.subr.mxu0 0.0
    %916 = vmatpush2.msra.mxu0 0.0
    %917 = vmatprep.subr.mxu0 0.0
    %918 = vmatpush2.msra.mxu0 0.0
    %919 = vmatprep.subr.mxu0 0.0
    %920 = vmatpush2.msra.mxu0 0.0
    %921 = vmatprep.subr.mxu0 0.0
    %922 = vmatpush2.msra.mxu0 0.0
    %923 = vmatprep.subr.mxu0 0.0
    %924 = vmatpush2.msra.mxu0 0.0
    %925 = vmatprep.subr.mxu0 0.0
    %926 = vmatpush2.msra.mxu0 0.0
    %927 = vmatprep.subr.mxu0 0.0
    %928 = vmatpush2.msra.mxu0 0.0
    %929 = vmatprep.subr.mxu0 0.0
    %930 = vmatpush2.msra.mxu0 0.0
    %931 = vmatprep.subr.mxu0 0.0
    %932 = vmatpush2.msra.mxu0 0.0
    %933 = vmatprep.subr.mxu0 0.0
    %934 = vmatpush2.msra.mxu0 0.0
    %935 = vmatprep.mubr.f32.mxu0 0.0
    %936 = vmatmul.mubr.f32.gmra.mxu0 %v869
    %v937 = vpop.f32.mrf.mxu0
    %v938 = vadd.f32 0.0, %v937
    %v939 = vpop.f32.mrf.mxu0
    %940 = vdwg.mxu0
    %v942 = vrot.slane %v938, 2
    %v944 = vadd.f32 %v132, %v942
    %v945 = vxor.u32 %v944, 2147483648
    %v946 = vmul.f32 %v945, 1.442695
    %v947 = vpow.pop %v946
    %v948 = vadd.f32 %v947, 1.0
    %v949 = vrcp.pop %v948
    %v950 = vmul.f32 1.0, %v949
    %v951 = vtanh.pop %v944
    %v953 = vrot.slane %v751, 6
    %v955 = vmul.f32 %v950, %v953
    %957 = vrot.lane.b32.xlu0 %v951, 64
    %v958 = vpop.permute.xlu0 %957
    %v960 = vmul.f32 %v950, %v958
    %962 = vrot.lane.b32.xlu0 %v960, 32
    %v963 = vpop.permute.xlu0 %962
    %v965 = vadd.f32 %v955, %v963
    %v966 = vtanh.pop %v965
    %968 = vrot.lane.b32.xlu0 %v966, 64
    %v969 = vpop.permute.xlu0 %968
    %v971 = vmul.f32 %v950, %v969
    %v973 = vrot.slane %v864, 2
    %974 = vrot.lane.b32.xlu0 %v973, 32
    %v975 = vpop.permute.xlu0 %974
    %v976 = vsel %vm58, %v975, 0
    %978 = vmatprep.subr.mxu0 0.0
    %979 = vmatpush1.msra.mxu0 0.0
    %980 = vmatprep.subr.mxu0 0.0
    %981 = vmatpush1.msra.mxu0 0.0
    %982 = vmatprep.subr.mxu0 0.0
    %983 = vmatpush1.msra.mxu0 0.0
    %984 = vmatprep.subr.mxu0 0.0
    %985 = vmatpush1.msra.mxu0 0.0
    %986 = vmatprep.subr.mxu0 0.0
    %987 = vmatpush1.msra.mxu0 0.0
    %988 = vmatprep.subr.mxu0 0.0
    %989 = vmatpush1.msra.mxu0 0.0
    %990 = vmatprep.subr.mxu0 0.0
    %991 = vmatpush1.msra.mxu0 0.0
    %992 = vmatprep.subr.mxu0 0.0
    %993 = vmatpush1.msra.mxu0 0.0
    %994 = vmatprep.subr.mxu0 0.0
    %995 = vmatpush1.msra.mxu0 0.0
    %996 = vmatprep.subr.mxu0 0.0
    %997 = vmatpush1.msra.mxu0 0.0
    %998 = vmatprep.subr.mxu0 0.0
    %999 = vmatpush1.msra.mxu0 0.0
    %1000 = vmatprep.subr.mxu0 0.0
    %1001 = vmatpush1.msra.mxu0 0.0
    %1002 = vmatprep.subr.mxu0 0.0
    %1003 = vmatpush1.msra.mxu0 %v233
    %1004 = vmatprep.subr.mxu0 0.0
    %1005 = vmatpush1.msra.mxu0 %v232
    %1006 = vmatprep.subr.mxu0 0.0
    %1007 = vmatpush1.msra.mxu0 %v231
    %1008 = vmatprep.subr.mxu0 0.0
    %1009 = vmatpush1.msra.mxu0 %v230
    %1010 = vmatprep.subr.mxu0 0.0
    %1011 = vmatpush2.msra.mxu0 0.0
    %1012 = vmatprep.subr.mxu0 0.0
    %1013 = vmatpush2.msra.mxu0 0.0
    %1014 = vmatprep.subr.mxu0 0.0
    %1015 = vmatpush2.msra.mxu0 0.0
    %1016 = vmatprep.subr.mxu0 0.0
    %1017 = vmatpush2.msra.mxu0 0.0
    %1018 = vmatprep.subr.mxu0 0.0
    %1019 = vmatpush2.msra.mxu0 0.0
    %1020 = vmatprep.subr.mxu0 0.0
    %1021 = vmatpush2.msra.mxu0 0.0
    %1022 = vmatprep.subr.mxu0 0.0
    %1023 = vmatpush2.msra.mxu0 0.0
    %1024 = vmatprep.subr.mxu0 0.0
    %1025 = vmatpush2.msra.mxu0 0.0
    %1026 = vmatprep.subr.mxu0 0.0
    %1027 = vmatpush2.msra.mxu0 0.0
    %1028 = vmatprep.subr.mxu0 0.0
    %1029 = vmatpush2.msra.mxu0 0.0
    %1030 = vmatprep.subr.mxu0 0.0
    %1031 = vmatpush2.msra.mxu0 0.0
    %1032 = vmatprep.subr.mxu0 0.0
    %1033 = vmatpush2.msra.mxu0 0.0
    %1034 = vmatprep.subr.mxu0 0.0
    %1035 = vmatpush2.msra.mxu0 0.0
    %1036 = vmatprep.subr.mxu0 0.0
    %1037 = vmatpush2.msra.mxu0 0.0
    %1038 = vmatprep.subr.mxu0 0.0
    %1039 = vmatpush2.msra.mxu0 0.0
    %1040 = vmatprep.subr.mxu0 0.0
    %1041 = vmatpush2.msra.mxu0 0.0
    %1042 = vmatprep.mubr.f32.mxu0 0.0
    %1043 = vmatmul.mubr.f32.gmra.mxu0 %v976
    %v1044 = vpop.f32.mrf.mxu0
    %v1045 = vadd.f32 0.0, %v1044
    %v1046 = vpop.f32.mrf.mxu0
    %1047 = vdwg.mxu0
    %v1048 = vadd.f32 %v223, %v1045
    %v1049 = vxor.u32 %v1048, 2147483648
    %v1050 = vmul.f32 %v1049, 1.442695
    %v1051 = vpow.pop %v1050
    %v1052 = vadd.f32 %v1051, 1.0
    %v1053 = vrcp.pop %v1052
    %v1054 = vmul.f32 1.0, %v1053
    %v1055 = vtanh.pop %v1048
    %v1057 = vrot.slane %v858, 2
    %v1059 = vmul.f32 %v1054, %v1057
    %1061 = vrot.lane.b32.xlu0 %v1055, 64
    %v1062 = vpop.permute.xlu0 %1061
    %v1064 = vmul.f32 %v1054, %v1062
    %1066 = vrot.lane.b32.xlu0 %v1064, 32
    %v1067 = vpop.permute.xlu0 %1066
    %v1069 = vadd.f32 %v1059, %v1067
    %v1070 = vtanh.pop %v1069
    %1072 = vrot.lane.b32.xlu0 %v1070, 64
    %v1073 = vpop.permute.xlu0 %1072
    %v1075 = vmul.f32 %v1054, %v1073
    %v1077 = vrot.slane %v971, 6
    %1078 = vrot.lane.b32.xlu0 %v1077, 32
    %v1079 = vpop.permute.xlu0 %1078
    %v1080 = vsel %vm58, %v1079, 0
    %1082 = vmatprep.subr.mxu0 0.0
    %1083 = vmatpush1.msra.mxu0 0.0
    %1084 = vmatprep.subr.mxu0 0.0
    %1085 = vmatpush1.msra.mxu0 0.0
    %1086 = vmatprep.subr.mxu0 0.0
    %1087 = vmatpush1.msra.mxu0 0.0
    %1088 = vmatprep.subr.mxu0 0.0
    %1089 = vmatpush1.msra.mxu0 0.0
    %1090 = vmatprep.subr.mxu0 0.0
    %1091 = vmatpush1.msra.mxu0 0.0
    %1092 = vmatprep.subr.mxu0 0.0
    %1093 = vmatpush1.msra.mxu0 0.0
    %1094 = vmatprep.subr.mxu0 0.0
    %1095 = vmatpush1.msra.mxu0 0.0
    %1096 = vmatprep.subr.mxu0 0.0
    %1097 = vmatpush1.msra.mxu0 0.0
    %1098 = vmatprep.subr.mxu0 0.0
    %1099 = vmatpush1.msra.mxu0 0.0
    %1100 = vmatprep.subr.mxu0 0.0
    %1101 = vmatpush1.msra.mxu0 0.0
    %1102 = vmatprep.subr.mxu0 0.0
    %1103 = vmatpush1.msra.mxu0 0.0
    %1104 = vmatprep.subr.mxu0 0.0
    %1105 = vmatpush1.msra.mxu0 0.0
    %1106 = vmatprep.subr.mxu0 0.0
    %1107 = vmatpush1.msra.mxu0 %v229
    %1108 = vmatprep.subr.mxu0 0.0
    %1109 = vmatpush1.msra.mxu0 %v228
    %1110 = vmatprep.subr.mxu0 0.0
    %1111 = vmatpush1.msra.mxu0 %v227
    %1112 = vmatprep.subr.mxu0 0.0
    %1113 = vmatpush1.msra.mxu0 %v226
    %1114 = vmatprep.subr.mxu0 0.0
    %1115 = vmatpush2.msra.mxu0 0.0
    %1116 = vmatprep.subr.mxu0 0.0
    %1117 = vmatpush2.msra.mxu0 0.0
    %1118 = vmatprep.subr.mxu0 0.0
    %1119 = vmatpush2.msra.mxu0 0.0
    %1120 = vmatprep.subr.mxu0 0.0
    %1121 = vmatpush2.msra.mxu0 0.0
    %1122 = vmatprep.subr.mxu0 0.0
    %1123 = vmatpush2.msra.mxu0 0.0
    %1124 = vmatprep.subr.mxu0 0.0
    %1125 = vmatpush2.msra.mxu0 0.0
    %1126 = vmatprep.subr.mxu0 0.0
    %1127 = vmatpush2.msra.mxu0 0.0
    %1128 = vmatprep.subr.mxu0 0.0
    %1129 = vmatpush2.msra.mxu0 0.0
    %1130 = vmatprep.subr.mxu0 0.0
    %1131 = vmatpush2.msra.mxu0 0.0
    %1132 = vmatprep.subr.mxu0 0.0
    %1133 = vmatpush2.msra.mxu0 0.0
    %1134 = vmatprep.subr.mxu0 0.0
    %1135 = vmatpush2.msra.mxu0 0.0
    %1136 = vmatprep.subr.mxu0 0.0
    %1137 = vmatpush2.msra.mxu0 0.0
    %1138 = vmatprep.subr.mxu0 0.0
    %1139 = vmatpush2.msra.mxu0 0.0
    %1140 = vmatprep.subr.mxu0 0.0
    %1141 = vmatpush2.msra.mxu0 0.0
    %1142 = vmatprep.subr.mxu0 0.0
    %1143 = vmatpush2.msra.mxu0 0.0
    %1144 = vmatprep.subr.mxu0 0.0
    %1145 = vmatpush2.msra.mxu0 0.0
    %1146 = vmatprep.mubr.f32.mxu0 0.0
    %1147 = vmatmul.mubr.f32.gmra.mxu0 %v1080
    %v1148 = vpop.f32.mrf.mxu0
    %v1149 = vadd.f32 0.0, %v1148
    %v1150 = vpop.f32.mrf.mxu0
    %1151 = vdwg.mxu0
    %v1152 = vadd.f32 %v137, %v1149
    %v1153 = vxor.u32 %v1152, 2147483648
    %v1154 = vmul.f32 %v1153, 1.442695
    %v1155 = vpow.pop %v1154
    %v1156 = vadd.f32 %v1155, 1.0
    %v1157 = vrcp.pop %v1156
    %v1158 = vmul.f32 1.0, %v1157
    %v1159 = vtanh.pop %v1152
    %v1161 = vrot.slane %v965, 6
    %v1163 = vmul.f32 %v1158, %v1161
    %1165 = vrot.lane.b32.xlu0 %v1159, 64
    %v1166 = vpop.permute.xlu0 %1165
    %v1168 = vmul.f32 %v1158, %v1166
    %1170 = vrot.lane.b32.xlu0 %v1168, 32
    %v1171 = vpop.permute.xlu0 %1170
    %v1173 = vadd.f32 %v1163, %v1171
    %v1174 = vtanh.pop %v1173
    %1176 = vrot.lane.b32.xlu0 %v1174, 64
    %v1177 = vpop.permute.xlu0 %1176
    %v1179 = vmul.f32 %v1158, %v1177
    %1181 = vrot.lane.b32.xlu0 %v1179, 32
    %v1182 = vpop.permute.xlu0 %1181
    %v1183 = vsel %vm58, %v1182, 0
    %1185 = vmatprep.subr.mxu0 0.0
    %1186 = vmatpush1.msra.mxu0 0.0
    %1187 = vmatprep.subr.mxu0 0.0
    %1188 = vmatpush1.msra.mxu0 0.0
    %1189 = vmatprep.subr.mxu0 0.0
    %1190 = vmatpush1.msra.mxu0 0.0
    %1191 = vmatprep.subr.mxu0 0.0
    %1192 = vmatpush1.msra.mxu0 0.0
    %1193 = vmatprep.subr.mxu0 0.0
    %1194 = vmatpush1.msra.mxu0 0.0
    %1195 = vmatprep.subr.mxu0 0.0
    %1196 = vmatpush1.msra.mxu0 0.0
    %1197 = vmatprep.subr.mxu0 0.0
    %1198 = vmatpush1.msra.mxu0 0.0
    %1199 = vmatprep.subr.mxu0 0.0
    %1200 = vmatpush1.msra.mxu0 0.0
    %1201 = vmatprep.subr.mxu0 0.0
    %1202 = vmatpush1.msra.mxu0 0.0
    %1203 = vmatprep.subr.mxu0 0.0
    %1204 = vmatpush1.msra.mxu0 0.0
    %1205 = vmatprep.subr.mxu0 0.0
    %1206 = vmatpush1.msra.mxu0 0.0
    %1207 = vmatprep.subr.mxu0 0.0
    %1208 = vmatpush1.msra.mxu0 0.0
    %1209 = vmatprep.subr.mxu0 0.0
    %1210 = vmatpush1.msra.mxu0 %v237
    %1211 = vmatprep.subr.mxu0 0.0
    %1212 = vmatpush1.msra.mxu0 %v236
    %1213 = vmatprep.subr.mxu0 0.0
    %1214 = vmatpush1.msra.mxu0 %v235
    %1215 = vmatprep.subr.mxu0 0.0
    %1216 = vmatpush1.msra.mxu0 %v234
    %1217 = vmatprep.subr.mxu0 0.0
    %1218 = vmatpush2.msra.mxu0 0.0
    %1219 = vmatprep.subr.mxu0 0.0
    %1220 = vmatpush2.msra.mxu0 0.0
    %1221 = vmatprep.subr.mxu0 0.0
    %1222 = vmatpush2.msra.mxu0 0.0
    %1223 = vmatprep.subr.mxu0 0.0
    %1224 = vmatpush2.msra.mxu0 0.0
    %1225 = vmatprep.subr.mxu0 0.0
    %1226 = vmatpush2.msra.mxu0 0.0
    %1227 = vmatprep.subr.mxu0 0.0
    %1228 = vmatpush2.msra.mxu0 0.0
    %1229 = vmatprep.subr.mxu0 0.0
    %1230 = vmatpush2.msra.mxu0 0.0
    %1231 = vmatprep.subr.mxu0 0.0
    %1232 = vmatpush2.msra.mxu0 0.0
    %1233 = vmatprep.subr.mxu0 0.0
    %1234 = vmatpush2.msra.mxu0 0.0
    %1235 = vmatprep.subr.mxu0 0.0
    %1236 = vmatpush2.msra.mxu0 0.0
    %1237 = vmatprep.subr.mxu0 0.0
    %1238 = vmatpush2.msra.mxu0 0.0
    %1239 = vmatprep.subr.mxu0 0.0
    %1240 = vmatpush2.msra.mxu0 0.0
    %1241 = vmatprep.subr.mxu0 0.0
    %1242 = vmatpush2.msra.mxu0 0.0
    %1243 = vmatprep.subr.mxu0 0.0
    %1244 = vmatpush2.msra.mxu0 0.0
    %1245 = vmatprep.subr.mxu0 0.0
    %1246 = vmatpush2.msra.mxu0 0.0
    %1247 = vmatprep.subr.mxu0 0.0
    %1248 = vmatpush2.msra.mxu0 0.0
    %1249 = vmatprep.mubr.f32.mxu0 0.0
    %1250 = vmatmul.mubr.f32.gmra.mxu0 %v1183
    %v1251 = vpop.f32.mrf.mxu0
    %v1252 = vadd.f32 0.0, %v1251
    %v1253 = vpop.f32.mrf.mxu0
    %1254 = vdwg.mxu0
    %1256 = vrot.lane.b32.xlu0 %v1075, 32
    %v1257 = vpop.permute.xlu0 %1256
    %v1258 = vsel %vm58, %v1257, 0
    %1260 = vmatprep.subr.mxu0 0.0
    %1261 = vmatpush1.msra.mxu0 0.0
    %1262 = vmatprep.subr.mxu0 0.0
    %1263 = vmatpush1.msra.mxu0 0.0
    %1264 = vmatprep.subr.mxu0 0.0
    %1265 = vmatpush1.msra.mxu0 0.0
    %1266 = vmatprep.subr.mxu0 0.0
    %1267 = vmatpush1.msra.mxu0 0.0
    %1268 = vmatprep.subr.mxu0 0.0
    %1269 = vmatpush1.msra.mxu0 0.0
    %1270 = vmatprep.subr.mxu0 0.0
    %1271 = vmatpush1.msra.mxu0 0.0
    %1272 = vmatprep.subr.mxu0 0.0
    %1273 = vmatpush1.msra.mxu0 0.0
    %1274 = vmatprep.subr.mxu0 0.0
    %1275 = vmatpush1.msra.mxu0 0.0
    %1276 = vmatprep.subr.mxu0 0.0
    %1277 = vmatpush1.msra.mxu0 0.0
    %1278 = vmatprep.subr.mxu0 0.0
    %1279 = vmatpush1.msra.mxu0 0.0
    %1280 = vmatprep.subr.mxu0 0.0
    %1281 = vmatpush1.msra.mxu0 0.0
    %1282 = vmatprep.subr.mxu0 0.0
    %1283 = vmatpush1.msra.mxu0 0.0
    %1284 = vmatprep.subr.mxu0 0.0
    %1285 = vmatpush1.msra.mxu0 %v241
    %1286 = vmatprep.subr.mxu0 0.0
    %1287 = vmatpush1.msra.mxu0 %v240
    %1288 = vmatprep.subr.mxu0 0.0
    %1289 = vmatpush1.msra.mxu0 %v239
    %1290 = vmatprep.subr.mxu0 0.0
    %1291 = vmatpush1.msra.mxu0 %v238
    %1292 = vmatprep.subr.mxu0 0.0
    %1293 = vmatpush2.msra.mxu0 0.0
    %1294 = vmatprep.subr.mxu0 0.0
    %1295 = vmatpush2.msra.mxu0 0.0
    %1296 = vmatprep.subr.mxu0 0.0
    %1297 = vmatpush2.msra.mxu0 0.0
    %1298 = vmatprep.subr.mxu0 0.0
    %1299 = vmatpush2.msra.mxu0 0.0
    %1300 = vmatprep.subr.mxu0 0.0
    %1301 = vmatpush2.msra.mxu0 0.0
    %1302 = vmatprep.subr.mxu0 0.0
    %1303 = vmatpush2.msra.mxu0 0.0
    %1304 = vmatprep.subr.mxu0 0.0
    %1305 = vmatpush2.msra.mxu0 0.0
    %1306 = vmatprep.subr.mxu0 0.0
    %1307 = vmatpush2.msra.mxu0 0.0
    %1308 = vmatprep.subr.mxu0 0.0
    %1309 = vmatpush2.msra.mxu0 0.0
    %1310 = vmatprep.subr.mxu0 0.0
    %1311 = vmatpush2.msra.mxu0 0.0
    %1312 = vmatprep.subr.mxu0 0.0
    %1313 = vmatpush2.msra.mxu0 0.0
    %1314 = vmatprep.subr.mxu0 0.0
    %1315 = vmatpush2.msra.mxu0 0.0
    %1316 = vmatprep.subr.mxu0 0.0
    %1317 = vmatpush2.msra.mxu0 0.0
    %1318 = vmatprep.subr.mxu0 0.0
    %1319 = vmatpush2.msra.mxu0 0.0
    %1320 = vmatprep.subr.mxu0 0.0
    %1321 = vmatpush2.msra.mxu0 0.0
    %1322 = vmatprep.subr.mxu0 0.0
    %1323 = vmatpush2.msra.mxu0 0.0
    %1324 = vmatprep.mubr.f32.mxu0 0.0
    %1325 = vmatmul.mubr.f32.gmra.mxu0 %v1258
    %v1326 = vpop.f32.mrf.mxu0
    %v1327 = vadd.f32 %v1252, %v1326
    %v1328 = vpop.f32.mrf.mxu0
    %1329 = vdwg.mxu0
    %1330 = vmatprep.subr.mxu0 0.0
    %1331 = vmatpush1.msra.mxu0 0.0
    %1332 = vmatprep.subr.mxu0 0.0
    %1333 = vmatpush1.msra.mxu0 0.0
    %1334 = vmatprep.subr.mxu0 0.0
    %1335 = vmatpush1.msra.mxu0 0.0
    %1336 = vmatprep.subr.mxu0 0.0
    %1337 = vmatpush1.msra.mxu0 0.0
    %1338 = vmatprep.subr.mxu0 0.0
    %1339 = vmatpush1.msra.mxu0 0.0
    %1340 = vmatprep.subr.mxu0 0.0
    %1341 = vmatpush1.msra.mxu0 0.0
    %1342 = vmatprep.subr.mxu0 0.0
    %1343 = vmatpush1.msra.mxu0 0.0
    %1344 = vmatprep.subr.mxu0 0.0
    %1345 = vmatpush1.msra.mxu0 0.0
    %1346 = vmatprep.subr.mxu0 0.0
    %1347 = vmatpush1.msra.mxu0 0.0
    %1348 = vmatprep.subr.mxu0 0.0
    %1349 = vmatpush1.msra.mxu0 0.0
    %1350 = vmatprep.subr.mxu0 0.0
    %1351 = vmatpush1.msra.mxu0 0.0
    %1352 = vmatprep.subr.mxu0 0.0
    %1353 = vmatpush1.msra.mxu0 0.0
    %1354 = vmatprep.subr.mxu0 0.0
    %1355 = vmatpush1.msra.mxu0 %v233
    %1356 = vmatprep.subr.mxu0 0.0
    %1357 = vmatpush1.msra.mxu0 %v232
    %1358 = vmatprep.subr.mxu0 0.0
    %1359 = vmatpush1.msra.mxu0 %v231
    %1360 = vmatprep.subr.mxu0 0.0
    %1361 = vmatpush1.msra.mxu0 %v230
    %1362 = vmatprep.subr.mxu0 0.0
    %1363 = vmatpush2.msra.mxu0 0.0
    %1364 = vmatprep.subr.mxu0 0.0
    %1365 = vmatpush2.msra.mxu0 0.0
    %1366 = vmatprep.subr.mxu0 0.0
    %1367 = vmatpush2.msra.mxu0 0.0
    %1368 = vmatprep.subr.mxu0 0.0
    %1369 = vmatpush2.msra.mxu0 0.0
    %1370 = vmatprep.subr.mxu0 0.0
    %1371 = vmatpush2.msra.mxu0 0.0
    %1372 = vmatprep.subr.mxu0 0.0
    %1373 = vmatpush2.msra.mxu0 0.0
    %1374 = vmatprep.subr.mxu0 0.0
    %1375 = vmatpush2.msra.mxu0 0.0
    %1376 = vmatprep.subr.mxu0 0.0
    %1377 = vmatpush2.msra.mxu0 0.0
    %1378 = vmatprep.subr.mxu0 0.0
    %1379 = vmatpush2.msra.mxu0 0.0
    %1380 = vmatprep.subr.mxu0 0.0
    %1381 = vmatpush2.msra.mxu0 0.0
    %1382 = vmatprep.subr.mxu0 0.0
    %1383 = vmatpush2.msra.mxu0 0.0
    %1384 = vmatprep.subr.mxu0 0.0
    %1385 = vmatpush2.msra.mxu0 0.0
    %1386 = vmatprep.subr.mxu0 0.0
    %1387 = vmatpush2.msra.mxu0 0.0
    %1388 = vmatprep.subr.mxu0 0.0
    %1389 = vmatpush2.msra.mxu0 0.0
    %1390 = vmatprep.subr.mxu0 0.0
    %1391 = vmatpush2.msra.mxu0 0.0
    %1392 = vmatprep.subr.mxu0 0.0
    %1393 = vmatpush2.msra.mxu0 0.0
    %1394 = vmatprep.mubr.f32.mxu0 0.0
    %1395 = vmatmul.mubr.f32.gmra.mxu0 %v1258
    %v1396 = vpop.f32.mrf.mxu0
    %v1397 = vadd.f32 0.0, %v1396
    %v1398 = vpop.f32.mrf.mxu0
    %1399 = vdwg.mxu0
    %v1401 = vrot.slane %v1397, 2
    %v1403 = vadd.f32 %v218, %v1401
    %v1404 = vxor.u32 %v1403, 2147483648
    %v1405 = vmul.f32 %v1404, 1.442695
    %v1406 = vpow.pop %v1405
    %v1407 = vadd.f32 %v1406, 1.0
    %v1408 = vrcp.pop %v1407
    %v1409 = vmul.f32 1.0, %v1408
    %v1410 = vtanh.pop %v1403
    %v1412 = vrot.slane %v1069, 2
    %v1414 = vmul.f32 %v1409, %v1412
    %1416 = vrot.lane.b32.xlu0 %v1410, 64
    %v1417 = vpop.permute.xlu0 %1416
    %v1419 = vmul.f32 %v1409, %v1417
    %1421 = vrot.lane.b32.xlu0 %v1419, 32
    %v1422 = vpop.permute.xlu0 %1421
    %v1424 = vadd.f32 %v1414, %v1422
    %v1425 = vtanh.pop %v1424
    %1427 = vrot.lane.b32.xlu0 %v1425, 64
    %v1428 = vpop.permute.xlu0 %1427
    %v1430 = vmul.f32 %v1409, %v1428
    %v1432 = vrot.slane %v1430, 6
    %1433 = vrot.lane.b32.xlu0 %v1432, 32
    %v1434 = vpop.permute.xlu0 %1433
    %v1435 = vsel %vm58, %v1434, 0
    %1437 = vmatprep.subr.mxu0 0.0
    %1438 = vmatpush1.msra.mxu0 0.0
    %1439 = vmatprep.subr.mxu0 0.0
    %1440 = vmatpush1.msra.mxu0 0.0
    %1441 = vmatprep.subr.mxu0 0.0
    %1442 = vmatpush1.msra.mxu0 0.0
    %1443 = vmatprep.subr.mxu0 0.0
    %1444 = vmatpush1.msra.mxu0 0.0
    %1445 = vmatprep.subr.mxu0 0.0
    %1446 = vmatpush1.msra.mxu0 0.0
    %1447 = vmatprep.subr.mxu0 0.0
    %1448 = vmatpush1.msra.mxu0 0.0
    %1449 = vmatprep.subr.mxu0 0.0
    %1450 = vmatpush1.msra.mxu0 0.0
    %1451 = vmatprep.subr.mxu0 0.0
    %1452 = vmatpush1.msra.mxu0 0.0
    %1453 = vmatprep.subr.mxu0 0.0
    %1454 = vmatpush1.msra.mxu0 0.0
    %1455 = vmatprep.subr.mxu0 0.0
    %1456 = vmatpush1.msra.mxu0 0.0
    %1457 = vmatprep.subr.mxu0 0.0
    %1458 = vmatpush1.msra.mxu0 0.0
    %1459 = vmatprep.subr.mxu0 0.0
    %1460 = vmatpush1.msra.mxu0 0.0
    %1461 = vmatprep.subr.mxu0 0.0
    %1462 = vmatpush1.msra.mxu0 %v241
    %1463 = vmatprep.subr.mxu0 0.0
    %1464 = vmatpush1.msra.mxu0 %v240
    %1465 = vmatprep.subr.mxu0 0.0
    %1466 = vmatpush1.msra.mxu0 %v239
    %1467 = vmatprep.subr.mxu0 0.0
    %1468 = vmatpush1.msra.mxu0 %v238
    %1469 = vmatprep.subr.mxu0 0.0
    %1470 = vmatpush2.msra.mxu0 0.0
    %1471 = vmatprep.subr.mxu0 0.0
    %1472 = vmatpush2.msra.mxu0 0.0
    %1473 = vmatprep.subr.mxu0 0.0
    %1474 = vmatpush2.msra.mxu0 0.0
    %1475 = vmatprep.subr.mxu0 0.0
    %1476 = vmatpush2.msra.mxu0 0.0
    %1477 = vmatprep.subr.mxu0 0.0
    %1478 = vmatpush2.msra.mxu0 0.0
    %1479 = vmatprep.subr.mxu0 0.0
    %1480 = vmatpush2.msra.mxu0 0.0
    %1481 = vmatprep.subr.mxu0 0.0
    %1482 = vmatpush2.msra.mxu0 0.0
    %1483 = vmatprep.subr.mxu0 0.0
    %1484 = vmatpush2.msra.mxu0 0.0
    %1485 = vmatprep.subr.mxu0 0.0
    %1486 = vmatpush2.msra.mxu0 0.0
    %1487 = vmatprep.subr.mxu0 0.0
    %1488 = vmatpush2.msra.mxu0 0.0
    %1489 = vmatprep.subr.mxu0 0.0
    %1490 = vmatpush2.msra.mxu0 0.0
    %1491 = vmatprep.subr.mxu0 0.0
    %1492 = vmatpush2.msra.mxu0 0.0
    %1493 = vmatprep.subr.mxu0 0.0
    %1494 = vmatpush2.msra.mxu0 0.0
    %1495 = vmatprep.subr.mxu0 0.0
    %1496 = vmatpush2.msra.mxu0 0.0
    %1497 = vmatprep.subr.mxu0 0.0
    %1498 = vmatpush2.msra.mxu0 0.0
    %1499 = vmatprep.subr.mxu0 0.0
    %1500 = vmatpush2.msra.mxu0 0.0
    %1501 = vmatprep.mubr.f32.mxu0 0.0
    %1502 = vmatmul.mubr.f32.gmra.mxu0 %v1435
    %v1503 = vpop.f32.mrf.mxu0
    %v1504 = vadd.f32 0.0, %v1503
    %v1505 = vpop.f32.mrf.mxu0
    %1506 = vdwg.mxu0
    %1507 = vmatprep.subr.mxu0 0.0
    %1508 = vmatpush1.msra.mxu0 0.0
    %1509 = vmatprep.subr.mxu0 0.0
    %1510 = vmatpush1.msra.mxu0 0.0
    %1511 = vmatprep.subr.mxu0 0.0
    %1512 = vmatpush1.msra.mxu0 0.0
    %1513 = vmatprep.subr.mxu0 0.0
    %1514 = vmatpush1.msra.mxu0 0.0
    %1515 = vmatprep.subr.mxu0 0.0
    %1516 = vmatpush1.msra.mxu0 0.0
    %1517 = vmatprep.subr.mxu0 0.0
    %1518 = vmatpush1.msra.mxu0 0.0
    %1519 = vmatprep.subr.mxu0 0.0
    %1520 = vmatpush1.msra.mxu0 0.0
    %1521 = vmatprep.subr.mxu0 0.0
    %1522 = vmatpush1.msra.mxu0 0.0
    %1523 = vmatprep.subr.mxu0 0.0
    %1524 = vmatpush1.msra.mxu0 0.0
    %1525 = vmatprep.subr.mxu0 0.0
    %1526 = vmatpush1.msra.mxu0 0.0
    %1527 = vmatprep.subr.mxu0 0.0
    %1528 = vmatpush1.msra.mxu0 0.0
    %1529 = vmatprep.subr.mxu0 0.0
    %1530 = vmatpush1.msra.mxu0 0.0
    %1531 = vmatprep.subr.mxu0 0.0
    %1532 = vmatpush1.msra.mxu0 %v237
    %1533 = vmatprep.subr.mxu0 0.0
    %1534 = vmatpush1.msra.mxu0 %v236
    %1535 = vmatprep.subr.mxu0 0.0
    %1536 = vmatpush1.msra.mxu0 %v235
    %1537 = vmatprep.subr.mxu0 0.0
    %1538 = vmatpush1.msra.mxu0 %v234
    %1539 = vmatprep.subr.mxu0 0.0
    %1540 = vmatpush2.msra.mxu0 0.0
    %1541 = vmatprep.subr.mxu0 0.0
    %1542 = vmatpush2.msra.mxu0 0.0
    %1543 = vmatprep.subr.mxu0 0.0
    %1544 = vmatpush2.msra.mxu0 0.0
    %1545 = vmatprep.subr.mxu0 0.0
    %1546 = vmatpush2.msra.mxu0 0.0
    %1547 = vmatprep.subr.mxu0 0.0
    %1548 = vmatpush2.msra.mxu0 0.0
    %1549 = vmatprep.subr.mxu0 0.0
    %1550 = vmatpush2.msra.mxu0 0.0
    %1551 = vmatprep.subr.mxu0 0.0
    %1552 = vmatpush2.msra.mxu0 0.0
    %1553 = vmatprep.subr.mxu0 0.0
    %1554 = vmatpush2.msra.mxu0 0.0
    %1555 = vmatprep.subr.mxu0 0.0
    %1556 = vmatpush2.msra.mxu0 0.0
    %1557 = vmatprep.subr.mxu0 0.0
    %1558 = vmatpush2.msra.mxu0 0.0
    %1559 = vmatprep.subr.mxu0 0.0
    %1560 = vmatpush2.msra.mxu0 0.0
    %1561 = vmatprep.subr.mxu0 0.0
    %1562 = vmatpush2.msra.mxu0 0.0
    %1563 = vmatprep.subr.mxu0 0.0
    %1564 = vmatpush2.msra.mxu0 0.0
    %1565 = vmatprep.subr.mxu0 0.0
    %1566 = vmatpush2.msra.mxu0 0.0
    %1567 = vmatprep.subr.mxu0 0.0
    %1568 = vmatpush2.msra.mxu0 0.0
    %1569 = vmatprep.subr.mxu0 0.0
    %1570 = vmatpush2.msra.mxu0 0.0
    %1571 = vmatprep.mubr.f32.mxu0 0.0
    %1572 = vmatmul.mubr.f32.gmra.mxu0 %v1080
    %v1573 = vpop.f32.mrf.mxu0
    %v1574 = vadd.f32 %v1504, %v1573
    %v1575 = vpop.f32.mrf.mxu0
    %1576 = vdwg.mxu0
    %1577 = vmatprep.subr.mxu0 0.0
    %1578 = vmatpush1.msra.mxu0 0.0
    %1579 = vmatprep.subr.mxu0 0.0
    %1580 = vmatpush1.msra.mxu0 0.0
    %1581 = vmatprep.subr.mxu0 0.0
    %1582 = vmatpush1.msra.mxu0 0.0
    %1583 = vmatprep.subr.mxu0 0.0
    %1584 = vmatpush1.msra.mxu0 0.0
    %1585 = vmatprep.subr.mxu0 0.0
    %1586 = vmatpush1.msra.mxu0 0.0
    %1587 = vmatprep.subr.mxu0 0.0
    %1588 = vmatpush1.msra.mxu0 0.0
    %1589 = vmatprep.subr.mxu0 0.0
    %1590 = vmatpush1.msra.mxu0 0.0
    %1591 = vmatprep.subr.mxu0 0.0
    %1592 = vmatpush1.msra.mxu0 0.0
    %1593 = vmatprep.subr.mxu0 0.0
    %1594 = vmatpush1.msra.mxu0 0.0
    %1595 = vmatprep.subr.mxu0 0.0
    %1596 = vmatpush1.msra.mxu0 0.0
    %1597 = vmatprep.subr.mxu0 0.0
    %1598 = vmatpush1.msra.mxu0 0.0
    %1599 = vmatprep.subr.mxu0 0.0
    %1600 = vmatpush1.msra.mxu0 0.0
    %1601 = vmatprep.subr.mxu0 0.0
    %1602 = vmatpush1.msra.mxu0 %v229
    %1603 = vmatprep.subr.mxu0 0.0
    %1604 = vmatpush1.msra.mxu0 %v228
    %1605 = vmatprep.subr.mxu0 0.0
    %1606 = vmatpush1.msra.mxu0 %v227
    %1607 = vmatprep.subr.mxu0 0.0
    %1608 = vmatpush1.msra.mxu0 %v226
    %1609 = vmatprep.subr.mxu0 0.0
    %1610 = vmatpush2.msra.mxu0 0.0
    %1611 = vmatprep.subr.mxu0 0.0
    %1612 = vmatpush2.msra.mxu0 0.0
    %1613 = vmatprep.subr.mxu0 0.0
    %1614 = vmatpush2.msra.mxu0 0.0
    %1615 = vmatprep.subr.mxu0 0.0
    %1616 = vmatpush2.msra.mxu0 0.0
    %1617 = vmatprep.subr.mxu0 0.0
    %1618 = vmatpush2.msra.mxu0 0.0
    %1619 = vmatprep.subr.mxu0 0.0
    %1620 = vmatpush2.msra.mxu0 0.0
    %1621 = vmatprep.subr.mxu0 0.0
    %1622 = vmatpush2.msra.mxu0 0.0
    %1623 = vmatprep.subr.mxu0 0.0
    %1624 = vmatpush2.msra.mxu0 0.0
    %1625 = vmatprep.subr.mxu0 0.0
    %1626 = vmatpush2.msra.mxu0 0.0
    %1627 = vmatprep.subr.mxu0 0.0
    %1628 = vmatpush2.msra.mxu0 0.0
    %1629 = vmatprep.subr.mxu0 0.0
    %1630 = vmatpush2.msra.mxu0 0.0
    %1631 = vmatprep.subr.mxu0 0.0
    %1632 = vmatpush2.msra.mxu0 0.0
    %1633 = vmatprep.subr.mxu0 0.0
    %1634 = vmatpush2.msra.mxu0 0.0
    %1635 = vmatprep.subr.mxu0 0.0
    %1636 = vmatpush2.msra.mxu0 0.0
    %1637 = vmatprep.subr.mxu0 0.0
    %1638 = vmatpush2.msra.mxu0 0.0
    %1639 = vmatprep.subr.mxu0 0.0
    %1640 = vmatpush2.msra.mxu0 0.0
    %1641 = vmatprep.mubr.f32.mxu0 0.0
    %1642 = vmatmul.mubr.f32.gmra.mxu0 %v1183
    %v1643 = vpop.f32.mrf.mxu0
    %v1644 = vadd.f32 0.0, %v1643
    %v1645 = vpop.f32.mrf.mxu0
    %1646 = vdwg.mxu0
    %v1648 = vrot.slane %v1644, 6
    %v1650 = vadd.f32 %v137, %v1648
    %v1651 = vxor.u32 %v1650, 2147483648
    %v1652 = vmul.f32 %v1651, 1.442695
    %v1653 = vpow.pop %v1652
    %v1654 = vadd.f32 %v1653, 1.0
    %v1655 = vrcp.pop %v1654
    %v1656 = vmul.f32 1.0, %v1655
    %v1657 = vtanh.pop %v1650
    %v1659 = vrot.slane %v1173, 6
    %v1661 = vmul.f32 %v1656, %v1659
    %1663 = vrot.lane.b32.xlu0 %v1657, 64
    %v1664 = vpop.permute.xlu0 %1663
    %v1666 = vmul.f32 %v1656, %v1664
    %1668 = vrot.lane.b32.xlu0 %v1666, 32
    %v1669 = vpop.permute.xlu0 %1668
    %v1671 = vadd.f32 %v1661, %v1669
    %v1672 = vtanh.pop %v1671
    %1674 = vrot.lane.b32.xlu0 %v1672, 64
    %v1675 = vpop.permute.xlu0 %1674
    %v1677 = vmul.f32 %v1656, %v1675
    %v1679 = vrot.slane %v1677, 2
    %1680 = vrot.lane.b32.xlu0 %v1679, 32
    %v1681 = vpop.permute.xlu0 %1680
    %v1682 = vsel %vm58, %v1681, 0
    %1684 = vmatprep.subr.mxu0 0.0
    %1685 = vmatpush1.msra.mxu0 0.0
    %1686 = vmatprep.subr.mxu0 0.0
    %1687 = vmatpush1.msra.mxu0 0.0
    %1688 = vmatprep.subr.mxu0 0.0
    %1689 = vmatpush1.msra.mxu0 0.0
    %1690 = vmatprep.subr.mxu0 0.0
    %1691 = vmatpush1.msra.mxu0 0.0
    %1692 = vmatprep.subr.mxu0 0.0
    %1693 = vmatpush1.msra.mxu0 0.0
    %1694 = vmatprep.subr.mxu0 0.0
    %1695 = vmatpush1.msra.mxu0 0.0
    %1696 = vmatprep.subr.mxu0 0.0
    %1697 = vmatpush1.msra.mxu0 0.0
    %1698 = vmatprep.subr.mxu0 0.0
    %1699 = vmatpush1.msra.mxu0 0.0
    %1700 = vmatprep.subr.mxu0 0.0
    %1701 = vmatpush1.msra.mxu0 0.0
    %1702 = vmatprep.subr.mxu0 0.0
    %1703 = vmatpush1.msra.mxu0 0.0
    %1704 = vmatprep.subr.mxu0 0.0
    %1705 = vmatpush1.msra.mxu0 0.0
    %1706 = vmatprep.subr.mxu0 0.0
    %1707 = vmatpush1.msra.mxu0 0.0
    %1708 = vmatprep.subr.mxu0 0.0
    %1709 = vmatpush1.msra.mxu0 %v237
    %1710 = vmatprep.subr.mxu0 0.0
    %1711 = vmatpush1.msra.mxu0 %v236
    %1712 = vmatprep.subr.mxu0 0.0
    %1713 = vmatpush1.msra.mxu0 %v235
    %1714 = vmatprep.subr.mxu0 0.0
    %1715 = vmatpush1.msra.mxu0 %v234
    %1716 = vmatprep.subr.mxu0 0.0
    %1717 = vmatpush2.msra.mxu0 0.0
    %1718 = vmatprep.subr.mxu0 0.0
    %1719 = vmatpush2.msra.mxu0 0.0
    %1720 = vmatprep.subr.mxu0 0.0
    %1721 = vmatpush2.msra.mxu0 0.0
    %1722 = vmatprep.subr.mxu0 0.0
    %1723 = vmatpush2.msra.mxu0 0.0
    %1724 = vmatprep.subr.mxu0 0.0
    %1725 = vmatpush2.msra.mxu0 0.0
    %1726 = vmatprep.subr.mxu0 0.0
    %1727 = vmatpush2.msra.mxu0 0.0
    %1728 = vmatprep.subr.mxu0 0.0
    %1729 = vmatpush2.msra.mxu0 0.0
    %1730 = vmatprep.subr.mxu0 0.0
    %1731 = vmatpush2.msra.mxu0 0.0
    %1732 = vmatprep.subr.mxu0 0.0
    %1733 = vmatpush2.msra.mxu0 0.0
    %1734 = vmatprep.subr.mxu0 0.0
    %1735 = vmatpush2.msra.mxu0 0.0
    %1736 = vmatprep.subr.mxu0 0.0
    %1737 = vmatpush2.msra.mxu0 0.0
    %1738 = vmatprep.subr.mxu0 0.0
    %1739 = vmatpush2.msra.mxu0 0.0
    %1740 = vmatprep.subr.mxu0 0.0
    %1741 = vmatpush2.msra.mxu0 0.0
    %1742 = vmatprep.subr.mxu0 0.0
    %1743 = vmatpush2.msra.mxu0 0.0
    %1744 = vmatprep.subr.mxu0 0.0
    %1745 = vmatpush2.msra.mxu0 0.0
    %1746 = vmatprep.subr.mxu0 0.0
    %1747 = vmatpush2.msra.mxu0 0.0
    %1748 = vmatprep.mubr.f32.mxu0 0.0
    %1749 = vmatmul.mubr.f32.gmra.mxu0 %v1682
    %v1750 = vpop.f32.mrf.mxu0
    %v1751 = vadd.f32 0.0, %v1750
    %v1752 = vpop.f32.mrf.mxu0
    %1753 = vdwg.mxu0
    %1754 = vmatprep.subr.mxu0 0.0
    %1755 = vmatpush1.msra.mxu0 0.0
    %1756 = vmatprep.subr.mxu0 0.0
    %1757 = vmatpush1.msra.mxu0 0.0
    %1758 = vmatprep.subr.mxu0 0.0
    %1759 = vmatpush1.msra.mxu0 0.0
    %1760 = vmatprep.subr.mxu0 0.0
    %1761 = vmatpush1.msra.mxu0 0.0
    %1762 = vmatprep.subr.mxu0 0.0
    %1763 = vmatpush1.msra.mxu0 0.0
    %1764 = vmatprep.subr.mxu0 0.0
    %1765 = vmatpush1.msra.mxu0 0.0
    %1766 = vmatprep.subr.mxu0 0.0
    %1767 = vmatpush1.msra.mxu0 0.0
    %1768 = vmatprep.subr.mxu0 0.0
    %1769 = vmatpush1.msra.mxu0 0.0
    %1770 = vmatprep.subr.mxu0 0.0
    %1771 = vmatpush1.msra.mxu0 0.0
    %1772 = vmatprep.subr.mxu0 0.0
    %1773 = vmatpush1.msra.mxu0 0.0
    %1774 = vmatprep.subr.mxu0 0.0
    %1775 = vmatpush1.msra.mxu0 0.0
    %1776 = vmatprep.subr.mxu0 0.0
    %1777 = vmatpush1.msra.mxu0 0.0
    %1778 = vmatprep.subr.mxu0 0.0
    %1779 = vmatpush1.msra.mxu0 %v241
    %1780 = vmatprep.subr.mxu0 0.0
    %1781 = vmatpush1.msra.mxu0 %v240
    %1782 = vmatprep.subr.mxu0 0.0
    %1783 = vmatpush1.msra.mxu0 %v239
    %1784 = vmatprep.subr.mxu0 0.0
    %1785 = vmatpush1.msra.mxu0 %v238
    %1786 = vmatprep.subr.mxu0 0.0
    %1787 = vmatpush2.msra.mxu0 0.0
    %1788 = vmatprep.subr.mxu0 0.0
    %1789 = vmatpush2.msra.mxu0 0.0
    %1790 = vmatprep.subr.mxu0 0.0
    %1791 = vmatpush2.msra.mxu0 0.0
    %1792 = vmatprep.subr.mxu0 0.0
    %1793 = vmatpush2.msra.mxu0 0.0
    %1794 = vmatprep.subr.mxu0 0.0
    %1795 = vmatpush2.msra.mxu0 0.0
    %1796 = vmatprep.subr.mxu0 0.0
    %1797 = vmatpush2.msra.mxu0 0.0
    %1798 = vmatprep.subr.mxu0 0.0
    %1799 = vmatpush2.msra.mxu0 0.0
    %1800 = vmatprep.subr.mxu0 0.0
    %1801 = vmatpush2.msra.mxu0 0.0
    %1802 = vmatprep.subr.mxu0 0.0
    %1803 = vmatpush2.msra.mxu0 0.0
    %1804 = vmatprep.subr.mxu0 0.0
    %1805 = vmatpush2.msra.mxu0 0.0
    %1806 = vmatprep.subr.mxu0 0.0
    %1807 = vmatpush2.msra.mxu0 0.0
    %1808 = vmatprep.subr.mxu0 0.0
    %1809 = vmatpush2.msra.mxu0 0.0
    %1810 = vmatprep.subr.mxu0 0.0
    %1811 = vmatpush2.msra.mxu0 0.0
    %1812 = vmatprep.subr.mxu0 0.0
    %1813 = vmatpush2.msra.mxu0 0.0
    %1814 = vmatprep.subr.mxu0 0.0
    %1815 = vmatpush2.msra.mxu0 0.0
    %1816 = vmatprep.subr.mxu0 0.0
    %1817 = vmatpush2.msra.mxu0 0.0
    %1818 = vmatprep.mubr.f32.mxu0 0.0
    %1819 = vmatmul.mubr.f32.gmra.mxu0 %v976
    %v1820 = vpop.f32.mrf.mxu0
    %v1821 = vadd.f32 %v1751, %v1820
    %v1822 = vpop.f32.mrf.mxu0
    %1823 = vdwg.mxu0
    %1824 = vmatprep.subr.mxu0 0.0
    %1825 = vmatpush1.msra.mxu0 0.0
    %1826 = vmatprep.subr.mxu0 0.0
    %1827 = vmatpush1.msra.mxu0 0.0
    %1828 = vmatprep.subr.mxu0 0.0
    %1829 = vmatpush1.msra.mxu0 0.0
    %1830 = vmatprep.subr.mxu0 0.0
    %1831 = vmatpush1.msra.mxu0 0.0
    %1832 = vmatprep.subr.mxu0 0.0
    %1833 = vmatpush1.msra.mxu0 0.0
    %1834 = vmatprep.subr.mxu0 0.0
    %1835 = vmatpush1.msra.mxu0 0.0
    %1836 = vmatprep.subr.mxu0 0.0
    %1837 = vmatpush1.msra.mxu0 0.0
    %1838 = vmatprep.subr.mxu0 0.0
    %1839 = vmatpush1.msra.mxu0 0.0
    %1840 = vmatprep.subr.mxu0 0.0
    %1841 = vmatpush1.msra.mxu0 0.0
    %1842 = vmatprep.subr.mxu0 0.0
    %1843 = vmatpush1.msra.mxu0 0.0
    %1844 = vmatprep.subr.mxu0 0.0
    %1845 = vmatpush1.msra.mxu0 0.0
    %1846 = vmatprep.subr.mxu0 0.0
    %1847 = vmatpush1.msra.mxu0 0.0
    %1848 = vmatprep.subr.mxu0 0.0
    %1849 = vmatpush1.msra.mxu0 %v233
    %1850 = vmatprep.subr.mxu0 0.0
    %1851 = vmatpush1.msra.mxu0 %v232
    %1852 = vmatprep.subr.mxu0 0.0
    %1853 = vmatpush1.msra.mxu0 %v231
    %1854 = vmatprep.subr.mxu0 0.0
    %1855 = vmatpush1.msra.mxu0 %v230
    %1856 = vmatprep.subr.mxu0 0.0
    %1857 = vmatpush2.msra.mxu0 0.0
    %1858 = vmatprep.subr.mxu0 0.0
    %1859 = vmatpush2.msra.mxu0 0.0
    %1860 = vmatprep.subr.mxu0 0.0
    %1861 = vmatpush2.msra.mxu0 0.0
    %1862 = vmatprep.subr.mxu0 0.0
    %1863 = vmatpush2.msra.mxu0 0.0
    %1864 = vmatprep.subr.mxu0 0.0
    %1865 = vmatpush2.msra.mxu0 0.0
    %1866 = vmatprep.subr.mxu0 0.0
    %1867 = vmatpush2.msra.mxu0 0.0
    %1868 = vmatprep.subr.mxu0 0.0
    %1869 = vmatpush2.msra.mxu0 0.0
    %1870 = vmatprep.subr.mxu0 0.0
    %1871 = vmatpush2.msra.mxu0 0.0
    %1872 = vmatprep.subr.mxu0 0.0
    %1873 = vmatpush2.msra.mxu0 0.0
    %1874 = vmatprep.subr.mxu0 0.0
    %1875 = vmatpush2.msra.mxu0 0.0
    %1876 = vmatprep.subr.mxu0 0.0
    %1877 = vmatpush2.msra.mxu0 0.0
    %1878 = vmatprep.subr.mxu0 0.0
    %1879 = vmatpush2.msra.mxu0 0.0
    %1880 = vmatprep.subr.mxu0 0.0
    %1881 = vmatpush2.msra.mxu0 0.0
    %1882 = vmatprep.subr.mxu0 0.0
    %1883 = vmatpush2.msra.mxu0 0.0
    %1884 = vmatprep.subr.mxu0 0.0
    %1885 = vmatpush2.msra.mxu0 0.0
    %1886 = vmatprep.subr.mxu0 0.0
    %1887 = vmatpush2.msra.mxu0 0.0
    %1888 = vmatprep.mubr.f32.mxu0 0.0
    %1889 = vmatmul.mubr.f32.gmra.mxu0 %v1435
    %v1890 = vpop.f32.mrf.mxu0
    %v1891 = vadd.f32 0.0, %v1890
    %v1892 = vpop.f32.mrf.mxu0
    %1893 = vdwg.mxu0
    %v1895 = vrot.slane %v1891, 4
    %v1897 = vadd.f32 %v218, %v1895
    %v1898 = vxor.u32 %v1897, 2147483648
    %v1899 = vmul.f32 %v1898, 1.442695
    %v1900 = vpow.pop %v1899
    %v1901 = vadd.f32 %v1900, 1.0
    %v1902 = vrcp.pop %v1901
    %v1903 = vmul.f32 1.0, %v1902
    %v1904 = vtanh.pop %v1897
    %v1906 = vrot.slane %v1424, 2
    %v1908 = vmul.f32 %v1903, %v1906
    %1910 = vrot.lane.b32.xlu0 %v1904, 64
    %v1911 = vpop.permute.xlu0 %1910
    %v1913 = vmul.f32 %v1903, %v1911
    %1915 = vrot.lane.b32.xlu0 %v1913, 32
    %v1916 = vpop.permute.xlu0 %1915
    %v1918 = vadd.f32 %v1908, %v1916
    %v1919 = vtanh.pop %v1918
    %1921 = vrot.lane.b32.xlu0 %v1919, 64
    %v1922 = vpop.permute.xlu0 %1921
    %v1924 = vmul.f32 %v1903, %v1922
    %v1926 = vrot.slane %v1924, 4
    %1927 = vrot.lane.b32.xlu0 %v1926, 32
    %v1928 = vpop.permute.xlu0 %1927
    %v1929 = vsel %vm58, %v1928, 0
    %1931 = vmatprep.subr.mxu0 0.0
    %1932 = vmatpush1.msra.mxu0 0.0
    %1933 = vmatprep.subr.mxu0 0.0
    %1934 = vmatpush1.msra.mxu0 0.0
    %1935 = vmatprep.subr.mxu0 0.0
    %1936 = vmatpush1.msra.mxu0 0.0
    %1937 = vmatprep.subr.mxu0 0.0
    %1938 = vmatpush1.msra.mxu0 0.0
    %1939 = vmatprep.subr.mxu0 0.0
    %1940 = vmatpush1.msra.mxu0 0.0
    %1941 = vmatprep.subr.mxu0 0.0
    %1942 = vmatpush1.msra.mxu0 0.0
    %1943 = vmatprep.subr.mxu0 0.0
    %1944 = vmatpush1.msra.mxu0 0.0
    %1945 = vmatprep.subr.mxu0 0.0
    %1946 = vmatpush1.msra.mxu0 0.0
    %1947 = vmatprep.subr.mxu0 0.0
    %1948 = vmatpush1.msra.mxu0 0.0
    %1949 = vmatprep.subr.mxu0 0.0
    %1950 = vmatpush1.msra.mxu0 0.0
    %1951 = vmatprep.subr.mxu0 0.0
    %1952 = vmatpush1.msra.mxu0 0.0
    %1953 = vmatprep.subr.mxu0 0.0
    %1954 = vmatpush1.msra.mxu0 0.0
    %1955 = vmatprep.subr.mxu0 0.0
    %1956 = vmatpush1.msra.mxu0 %v241
    %1957 = vmatprep.subr.mxu0 0.0
    %1958 = vmatpush1.msra.mxu0 %v240
    %1959 = vmatprep.subr.mxu0 0.0
    %1960 = vmatpush1.msra.mxu0 %v239
    %1961 = vmatprep.subr.mxu0 0.0
    %1962 = vmatpush1.msra.mxu0 %v238
    %1963 = vmatprep.subr.mxu0 0.0
    %1964 = vmatpush2.msra.mxu0 0.0
    %1965 = vmatprep.subr.mxu0 0.0
    %1966 = vmatpush2.msra.mxu0 0.0
    %1967 = vmatprep.subr.mxu0 0.0
    %1968 = vmatpush2.msra.mxu0 0.0
    %1969 = vmatprep.subr.mxu0 0.0
    %1970 = vmatpush2.msra.mxu0 0.0
    %1971 = vmatprep.subr.mxu0 0.0
    %1972 = vmatpush2.msra.mxu0 0.0
    %1973 = vmatprep.subr.mxu0 0.0
    %1974 = vmatpush2.msra.mxu0 0.0
    %1975 = vmatprep.subr.mxu0 0.0
    %1976 = vmatpush2.msra.mxu0 0.0
    %1977 = vmatprep.subr.mxu0 0.0
    %1978 = vmatpush2.msra.mxu0 0.0
    %1979 = vmatprep.subr.mxu0 0.0
    %1980 = vmatpush2.msra.mxu0 0.0
    %1981 = vmatprep.subr.mxu0 0.0
    %1982 = vmatpush2.msra.mxu0 0.0
    %1983 = vmatprep.subr.mxu0 0.0
    %1984 = vmatpush2.msra.mxu0 0.0
    %1985 = vmatprep.subr.mxu0 0.0
    %1986 = vmatpush2.msra.mxu0 0.0
    %1987 = vmatprep.subr.mxu0 0.0
    %1988 = vmatpush2.msra.mxu0 0.0
    %1989 = vmatprep.subr.mxu0 0.0
    %1990 = vmatpush2.msra.mxu0 0.0
    %1991 = vmatprep.subr.mxu0 0.0
    %1992 = vmatpush2.msra.mxu0 0.0
    %1993 = vmatprep.subr.mxu0 0.0
    %1994 = vmatpush2.msra.mxu0 0.0
    %1995 = vmatprep.mubr.f32.mxu0 0.0
    %1996 = vmatmul.mubr.f32.gmra.mxu0 %v1929
    %v1997 = vpop.f32.mrf.mxu0
    %v1998 = vadd.f32 0.0, %v1997
    %v1999 = vpop.f32.mrf.mxu0
    %2000 = vdwg.mxu0
    %2001 = vmatprep.subr.mxu0 0.0
    %2002 = vmatpush1.msra.mxu0 0.0
    %2003 = vmatprep.subr.mxu0 0.0
    %2004 = vmatpush1.msra.mxu0 0.0
    %2005 = vmatprep.subr.mxu0 0.0
    %2006 = vmatpush1.msra.mxu0 0.0
    %2007 = vmatprep.subr.mxu0 0.0
    %2008 = vmatpush1.msra.mxu0 0.0
    %2009 = vmatprep.subr.mxu0 0.0
    %2010 = vmatpush1.msra.mxu0 0.0
    %2011 = vmatprep.subr.mxu0 0.0
    %2012 = vmatpush1.msra.mxu0 0.0
    %2013 = vmatprep.subr.mxu0 0.0
    %2014 = vmatpush1.msra.mxu0 0.0
    %2015 = vmatprep.subr.mxu0 0.0
    %2016 = vmatpush1.msra.mxu0 0.0
    %2017 = vmatprep.subr.mxu0 0.0
    %2018 = vmatpush1.msra.mxu0 0.0
    %2019 = vmatprep.subr.mxu0 0.0
    %2020 = vmatpush1.msra.mxu0 0.0
    %2021 = vmatprep.subr.mxu0 0.0
    %2022 = vmatpush1.msra.mxu0 0.0
    %2023 = vmatprep.subr.mxu0 0.0
    %2024 = vmatpush1.msra.mxu0 0.0
    %2025 = vmatprep.subr.mxu0 0.0
    %2026 = vmatpush1.msra.mxu0 %v237
    %2027 = vmatprep.subr.mxu0 0.0
    %2028 = vmatpush1.msra.mxu0 %v236
    %2029 = vmatprep.subr.mxu0 0.0
    %2030 = vmatpush1.msra.mxu0 %v235
    %2031 = vmatprep.subr.mxu0 0.0
    %2032 = vmatpush1.msra.mxu0 %v234
    %2033 = vmatprep.subr.mxu0 0.0
    %2034 = vmatpush2.msra.mxu0 0.0
    %2035 = vmatprep.subr.mxu0 0.0
    %2036 = vmatpush2.msra.mxu0 0.0
    %2037 = vmatprep.subr.mxu0 0.0
    %2038 = vmatpush2.msra.mxu0 0.0
    %2039 = vmatprep.subr.mxu0 0.0
    %2040 = vmatpush2.msra.mxu0 0.0
    %2041 = vmatprep.subr.mxu0 0.0
    %2042 = vmatpush2.msra.mxu0 0.0
    %2043 = vmatprep.subr.mxu0 0.0
    %2044 = vmatpush2.msra.mxu0 0.0
    %2045 = vmatprep.subr.mxu0 0.0
    %2046 = vmatpush2.msra.mxu0 0.0
    %2047 = vmatprep.subr.mxu0 0.0
    %2048 = vmatpush2.msra.mxu0 0.0
    %2049 = vmatprep.subr.mxu0 0.0
    %2050 = vmatpush2.msra.mxu0 0.0
    %2051 = vmatprep.subr.mxu0 0.0
    %2052 = vmatpush2.msra.mxu0 0.0
    %2053 = vmatprep.subr.mxu0 0.0
    %2054 = vmatpush2.msra.mxu0 0.0
    %2055 = vmatprep.subr.mxu0 0.0
    %2056 = vmatpush2.msra.mxu0 0.0
    %2057 = vmatprep.subr.mxu0 0.0
    %2058 = vmatpush2.msra.mxu0 0.0
    %2059 = vmatprep.subr.mxu0 0.0
    %2060 = vmatpush2.msra.mxu0 0.0
    %2061 = vmatprep.subr.mxu0 0.0
    %2062 = vmatpush2.msra.mxu0 0.0
    %2063 = vmatprep.subr.mxu0 0.0
    %2064 = vmatpush2.msra.mxu0 0.0
    %2065 = vmatprep.mubr.f32.mxu0 0.0
    %2066 = vmatmul.mubr.f32.gmra.mxu0 %v869
    %v2067 = vpop.f32.mrf.mxu0
    %v2068 = vadd.f32 %v1998, %v2067
    %v2069 = vpop.f32.mrf.mxu0
    %2070 = vdwg.mxu0
    %2071 = vmatprep.subr.mxu0 0.0
    %2072 = vmatpush1.msra.mxu0 0.0
    %2073 = vmatprep.subr.mxu0 0.0
    %2074 = vmatpush1.msra.mxu0 0.0
    %2075 = vmatprep.subr.mxu0 0.0
    %2076 = vmatpush1.msra.mxu0 0.0
    %2077 = vmatprep.subr.mxu0 0.0
    %2078 = vmatpush1.msra.mxu0 0.0
    %2079 = vmatprep.subr.mxu0 0.0
    %2080 = vmatpush1.msra.mxu0 0.0
    %2081 = vmatprep.subr.mxu0 0.0
    %2082 = vmatpush1.msra.mxu0 0.0
    %2083 = vmatprep.subr.mxu0 0.0
    %2084 = vmatpush1.msra.mxu0 0.0
    %2085 = vmatprep.subr.mxu0 0.0
    %2086 = vmatpush1.msra.mxu0 0.0
    %2087 = vmatprep.subr.mxu0 0.0
    %2088 = vmatpush1.msra.mxu0 0.0
    %2089 = vmatprep.subr.mxu0 0.0
    %2090 = vmatpush1.msra.mxu0 0.0
    %2091 = vmatprep.subr.mxu0 0.0
    %2092 = vmatpush1.msra.mxu0 0.0
    %2093 = vmatprep.subr.mxu0 0.0
    %2094 = vmatpush1.msra.mxu0 0.0
    %2095 = vmatprep.subr.mxu0 0.0
    %2096 = vmatpush1.msra.mxu0 %v229
    %2097 = vmatprep.subr.mxu0 0.0
    %2098 = vmatpush1.msra.mxu0 %v228
    %2099 = vmatprep.subr.mxu0 0.0
    %2100 = vmatpush1.msra.mxu0 %v227
    %2101 = vmatprep.subr.mxu0 0.0
    %2102 = vmatpush1.msra.mxu0 %v226
    %2103 = vmatprep.subr.mxu0 0.0
    %2104 = vmatpush2.msra.mxu0 0.0
    %2105 = vmatprep.subr.mxu0 0.0
    %2106 = vmatpush2.msra.mxu0 0.0
    %2107 = vmatprep.subr.mxu0 0.0
    %2108 = vmatpush2.msra.mxu0 0.0
    %2109 = vmatprep.subr.mxu0 0.0
    %2110 = vmatpush2.msra.mxu0 0.0
    %2111 = vmatprep.subr.mxu0 0.0
    %2112 = vmatpush2.msra.mxu0 0.0
    %2113 = vmatprep.subr.mxu0 0.0
    %2114 = vmatpush2.msra.mxu0 0.0
    %2115 = vmatprep.subr.mxu0 0.0
    %2116 = vmatpush2.msra.mxu0 0.0
    %2117 = vmatprep.subr.mxu0 0.0
    %2118 = vmatpush2.msra.mxu0 0.0
    %2119 = vmatprep.subr.mxu0 0.0
    %2120 = vmatpush2.msra.mxu0 0.0
    %2121 = vmatprep.subr.mxu0 0.0
    %2122 = vmatpush2.msra.mxu0 0.0
    %2123 = vmatprep.subr.mxu0 0.0
    %2124 = vmatpush2.msra.mxu0 0.0
    %2125 = vmatprep.subr.mxu0 0.0
    %2126 = vmatpush2.msra.mxu0 0.0
    %2127 = vmatprep.subr.mxu0 0.0
    %2128 = vmatpush2.msra.mxu0 0.0
    %2129 = vmatprep.subr.mxu0 0.0
    %2130 = vmatpush2.msra.mxu0 0.0
    %2131 = vmatprep.subr.mxu0 0.0
    %2132 = vmatpush2.msra.mxu0 0.0
    %2133 = vmatprep.subr.mxu0 0.0
    %2134 = vmatpush2.msra.mxu0 0.0
    %2135 = vmatprep.mubr.f32.mxu0 0.0
    %2136 = vmatmul.mubr.f32.gmra.mxu0 %v1682
    %v2137 = vpop.f32.mrf.mxu0
    %v2138 = vadd.f32 0.0, %v2137
    %v2139 = vpop.f32.mrf.mxu0
    %2140 = vdwg.mxu0
    %v2142 = vrot.slane %v2138, 4
    %v2144 = vadd.f32 %v137, %v2142
    %v2145 = vxor.u32 %v2144, 2147483648
    %v2146 = vmul.f32 %v2145, 1.442695
    %v2147 = vpow.pop %v2146
    %v2148 = vadd.f32 %v2147, 1.0
    %v2149 = vrcp.pop %v2148
    %v2150 = vmul.f32 1.0, %v2149
    %v2151 = vtanh.pop %v2144
    %v2153 = vrot.slane %v1671, 6
    %v2155 = vmul.f32 %v2150, %v2153
    %2157 = vrot.lane.b32.xlu0 %v2151, 64
    %v2158 = vpop.permute.xlu0 %2157
    %v2160 = vmul.f32 %v2150, %v2158
    %2162 = vrot.lane.b32.xlu0 %v2160, 32
    %v2163 = vpop.permute.xlu0 %2162
    %v2165 = vadd.f32 %v2155, %v2163
    %v2166 = vtanh.pop %v2165
    %2168 = vrot.lane.b32.xlu0 %v2166, 64
    %v2169 = vpop.permute.xlu0 %2168
    %v2171 = vmul.f32 %v2150, %v2169
    %v2173 = vrot.slane %v2171, 4
    %2174 = vrot.lane.b32.xlu0 %v2173, 32
    %v2175 = vpop.permute.xlu0 %2174
    %v2176 = vsel %vm58, %v2175, 0
    %2178 = vmatprep.subr.mxu0 0.0
    %2179 = vmatpush1.msra.mxu0 0.0
    %2180 = vmatprep.subr.mxu0 0.0
    %2181 = vmatpush1.msra.mxu0 0.0
    %2182 = vmatprep.subr.mxu0 0.0
    %2183 = vmatpush1.msra.mxu0 0.0
    %2184 = vmatprep.subr.mxu0 0.0
    %2185 = vmatpush1.msra.mxu0 0.0
    %2186 = vmatprep.subr.mxu0 0.0
    %2187 = vmatpush1.msra.mxu0 0.0
    %2188 = vmatprep.subr.mxu0 0.0
    %2189 = vmatpush1.msra.mxu0 0.0
    %2190 = vmatprep.subr.mxu0 0.0
    %2191 = vmatpush1.msra.mxu0 0.0
    %2192 = vmatprep.subr.mxu0 0.0
    %2193 = vmatpush1.msra.mxu0 0.0
    %2194 = vmatprep.subr.mxu0 0.0
    %2195 = vmatpush1.msra.mxu0 0.0
    %2196 = vmatprep.subr.mxu0 0.0
    %2197 = vmatpush1.msra.mxu0 0.0
    %2198 = vmatprep.subr.mxu0 0.0
    %2199 = vmatpush1.msra.mxu0 0.0
    %2200 = vmatprep.subr.mxu0 0.0
    %2201 = vmatpush1.msra.mxu0 0.0
    %2202 = vmatprep.subr.mxu0 0.0
    %2203 = vmatpush1.msra.mxu0 %v237
    %2204 = vmatprep.subr.mxu0 0.0
    %2205 = vmatpush1.msra.mxu0 %v236
    %2206 = vmatprep.subr.mxu0 0.0
    %2207 = vmatpush1.msra.mxu0 %v235
    %2208 = vmatprep.subr.mxu0 0.0
    %2209 = vmatpush1.msra.mxu0 %v234
    %2210 = vmatprep.subr.mxu0 0.0
    %2211 = vmatpush2.msra.mxu0 0.0
    %2212 = vmatprep.subr.mxu0 0.0
    %2213 = vmatpush2.msra.mxu0 0.0
    %2214 = vmatprep.subr.mxu0 0.0
    %2215 = vmatpush2.msra.mxu0 0.0
    %2216 = vmatprep.subr.mxu0 0.0
    %2217 = vmatpush2.msra.mxu0 0.0
    %2218 = vmatprep.subr.mxu0 0.0
    %2219 = vmatpush2.msra.mxu0 0.0
    %2220 = vmatprep.subr.mxu0 0.0
    %2221 = vmatpush2.msra.mxu0 0.0
    %2222 = vmatprep.subr.mxu0 0.0
    %2223 = vmatpush2.msra.mxu0 0.0
    %2224 = vmatprep.subr.mxu0 0.0
    %2225 = vmatpush2.msra.mxu0 0.0
    %2226 = vmatprep.subr.mxu0 0.0
    %2227 = vmatpush2.msra.mxu0 0.0
    %2228 = vmatprep.subr.mxu0 0.0
    %2229 = vmatpush2.msra.mxu0 0.0
    %2230 = vmatprep.subr.mxu0 0.0
    %2231 = vmatpush2.msra.mxu0 0.0
    %2232 = vmatprep.subr.mxu0 0.0
    %2233 = vmatpush2.msra.mxu0 0.0
    %2234 = vmatprep.subr.mxu0 0.0
    %2235 = vmatpush2.msra.mxu0 0.0
    %2236 = vmatprep.subr.mxu0 0.0
    %2237 = vmatpush2.msra.mxu0 0.0
    %2238 = vmatprep.subr.mxu0 0.0
    %2239 = vmatpush2.msra.mxu0 0.0
    %2240 = vmatprep.subr.mxu0 0.0
    %2241 = vmatpush2.msra.mxu0 0.0
    %2242 = vmatprep.mubr.f32.mxu0 0.0
    %2243 = vmatmul.mubr.f32.gmra.mxu0 %v2176
    %v2244 = vpop.f32.mrf.mxu0
    %v2245 = vadd.f32 0.0, %v2244
    %v2246 = vpop.f32.mrf.mxu0
    %2247 = vdwg.mxu0
    %2248 = vmatprep.subr.mxu0 0.0
    %2249 = vmatpush1.msra.mxu0 0.0
    %2250 = vmatprep.subr.mxu0 0.0
    %2251 = vmatpush1.msra.mxu0 0.0
    %2252 = vmatprep.subr.mxu0 0.0
    %2253 = vmatpush1.msra.mxu0 0.0
    %2254 = vmatprep.subr.mxu0 0.0
    %2255 = vmatpush1.msra.mxu0 0.0
    %2256 = vmatprep.subr.mxu0 0.0
    %2257 = vmatpush1.msra.mxu0 0.0
    %2258 = vmatprep.subr.mxu0 0.0
    %2259 = vmatpush1.msra.mxu0 0.0
    %2260 = vmatprep.subr.mxu0 0.0
    %2261 = vmatpush1.msra.mxu0 0.0
    %2262 = vmatprep.subr.mxu0 0.0
    %2263 = vmatpush1.msra.mxu0 0.0
    %2264 = vmatprep.subr.mxu0 0.0
    %2265 = vmatpush1.msra.mxu0 0.0
    %2266 = vmatprep.subr.mxu0 0.0
    %2267 = vmatpush1.msra.mxu0 0.0
    %2268 = vmatprep.subr.mxu0 0.0
    %2269 = vmatpush1.msra.mxu0 0.0
    %2270 = vmatprep.subr.mxu0 0.0
    %2271 = vmatpush1.msra.mxu0 0.0
    %2272 = vmatprep.subr.mxu0 0.0
    %2273 = vmatpush1.msra.mxu0 %v241
    %2274 = vmatprep.subr.mxu0 0.0
    %2275 = vmatpush1.msra.mxu0 %v240
    %2276 = vmatprep.subr.mxu0 0.0
    %2277 = vmatpush1.msra.mxu0 %v239
    %2278 = vmatprep.subr.mxu0 0.0
    %2279 = vmatpush1.msra.mxu0 %v238
    %2280 = vmatprep.subr.mxu0 0.0
    %2281 = vmatpush2.msra.mxu0 0.0
    %2282 = vmatprep.subr.mxu0 0.0
    %2283 = vmatpush2.msra.mxu0 0.0
    %2284 = vmatprep.subr.mxu0 0.0
    %2285 = vmatpush2.msra.mxu0 0.0
    %2286 = vmatprep.subr.mxu0 0.0
    %2287 = vmatpush2.msra.mxu0 0.0
    %2288 = vmatprep.subr.mxu0 0.0
    %2289 = vmatpush2.msra.mxu0 0.0
    %2290 = vmatprep.subr.mxu0 0.0
    %2291 = vmatpush2.msra.mxu0 0.0
    %2292 = vmatprep.subr.mxu0 0.0
    %2293 = vmatpush2.msra.mxu0 0.0
    %2294 = vmatprep.subr.mxu0 0.0
    %2295 = vmatpush2.msra.mxu0 0.0
    %2296 = vmatprep.subr.mxu0 0.0
    %2297 = vmatpush2.msra.mxu0 0.0
    %2298 = vmatprep.subr.mxu0 0.0
    %2299 = vmatpush2.msra.mxu0 0.0
    %2300 = vmatprep.subr.mxu0 0.0
    %2301 = vmatpush2.msra.mxu0 0.0
    %2302 = vmatprep.subr.mxu0 0.0
    %2303 = vmatpush2.msra.mxu0 0.0
    %2304 = vmatprep.subr.mxu0 0.0
    %2305 = vmatpush2.msra.mxu0 0.0
    %2306 = vmatprep.subr.mxu0 0.0
    %2307 = vmatpush2.msra.mxu0 0.0
    %2308 = vmatprep.subr.mxu0 0.0
    %2309 = vmatpush2.msra.mxu0 0.0
    %2310 = vmatprep.subr.mxu0 0.0
    %2311 = vmatpush2.msra.mxu0 0.0
    %2312 = vmatprep.mubr.f32.mxu0 0.0
    %2313 = vmatmul.mubr.f32.gmra.mxu0 %v762
    %v2314 = vpop.f32.mrf.mxu0
    %v2315 = vadd.f32 %v2245, %v2314
    %v2316 = vpop.f32.mrf.mxu0
    %2317 = vdwg.mxu0
    %2318 = vmatprep.subr.mxu0 0.0
    %2319 = vmatpush1.msra.mxu0 0.0
    %2320 = vmatprep.subr.mxu0 0.0
    %2321 = vmatpush1.msra.mxu0 0.0
    %2322 = vmatprep.subr.mxu0 0.0
    %2323 = vmatpush1.msra.mxu0 0.0
    %2324 = vmatprep.subr.mxu0 0.0
    %2325 = vmatpush1.msra.mxu0 0.0
    %2326 = vmatprep.subr.mxu0 0.0
    %2327 = vmatpush1.msra.mxu0 0.0
    %2328 = vmatprep.subr.mxu0 0.0
    %2329 = vmatpush1.msra.mxu0 0.0
    %2330 = vmatprep.subr.mxu0 0.0
    %2331 = vmatpush1.msra.mxu0 0.0
    %2332 = vmatprep.subr.mxu0 0.0
    %2333 = vmatpush1.msra.mxu0 0.0
    %2334 = vmatprep.subr.mxu0 0.0
    %2335 = vmatpush1.msra.mxu0 0.0
    %2336 = vmatprep.subr.mxu0 0.0
    %2337 = vmatpush1.msra.mxu0 0.0
    %2338 = vmatprep.subr.mxu0 0.0
    %2339 = vmatpush1.msra.mxu0 0.0
    %2340 = vmatprep.subr.mxu0 0.0
    %2341 = vmatpush1.msra.mxu0 0.0
    %2342 = vmatprep.subr.mxu0 0.0
    %2343 = vmatpush1.msra.mxu0 %v233
    %2344 = vmatprep.subr.mxu0 0.0
    %2345 = vmatpush1.msra.mxu0 %v232
    %2346 = vmatprep.subr.mxu0 0.0
    %2347 = vmatpush1.msra.mxu0 %v231
    %2348 = vmatprep.subr.mxu0 0.0
    %2349 = vmatpush1.msra.mxu0 %v230
    %2350 = vmatprep.subr.mxu0 0.0
    %2351 = vmatpush2.msra.mxu0 0.0
    %2352 = vmatprep.subr.mxu0 0.0
    %2353 = vmatpush2.msra.mxu0 0.0
    %2354 = vmatprep.subr.mxu0 0.0
    %2355 = vmatpush2.msra.mxu0 0.0
    %2356 = vmatprep.subr.mxu0 0.0
    %2357 = vmatpush2.msra.mxu0 0.0
    %2358 = vmatprep.subr.mxu0 0.0
    %2359 = vmatpush2.msra.mxu0 0.0
    %2360 = vmatprep.subr.mxu0 0.0
    %2361 = vmatpush2.msra.mxu0 0.0
    %2362 = vmatprep.subr.mxu0 0.0
    %2363 = vmatpush2.msra.mxu0 0.0
    %2364 = vmatprep.subr.mxu0 0.0
    %2365 = vmatpush2.msra.mxu0 0.0
    %2366 = vmatprep.subr.mxu0 0.0
    %2367 = vmatpush2.msra.mxu0 0.0
    %2368 = vmatprep.subr.mxu0 0.0
    %2369 = vmatpush2.msra.mxu0 0.0
    %2370 = vmatprep.subr.mxu0 0.0
    %2371 = vmatpush2.msra.mxu0 0.0
    %2372 = vmatprep.subr.mxu0 0.0
    %2373 = vmatpush2.msra.mxu0 0.0
    %2374 = vmatprep.subr.mxu0 0.0
    %2375 = vmatpush2.msra.mxu0 0.0
    %2376 = vmatprep.subr.mxu0 0.0
    %2377 = vmatpush2.msra.mxu0 0.0
    %2378 = vmatprep.subr.mxu0 0.0
    %2379 = vmatpush2.msra.mxu0 0.0
    %2380 = vmatprep.subr.mxu0 0.0
    %2381 = vmatpush2.msra.mxu0 0.0
    %2382 = vmatprep.mubr.f32.mxu0 0.0
    %2383 = vmatmul.mubr.f32.gmra.mxu0 %v1929
    %v2384 = vpop.f32.mrf.mxu0
    %v2385 = vadd.f32 0.0, %v2384
    %v2386 = vpop.f32.mrf.mxu0
    %2387 = vdwg.mxu0
    %v2389 = vrot.slane %v2385, 6
    %v2391 = vadd.f32 %v218, %v2389
    %v2392 = vxor.u32 %v2391, 2147483648
    %v2393 = vmul.f32 %v2392, 1.442695
    %v2394 = vpow.pop %v2393
    %v2395 = vadd.f32 %v2394, 1.0
    %v2396 = vrcp.pop %v2395
    %v2397 = vmul.f32 1.0, %v2396
    %v2398 = vtanh.pop %v2391
    %v2400 = vrot.slane %v1918, 2
    %v2402 = vmul.f32 %v2397, %v2400
    %2404 = vrot.lane.b32.xlu0 %v2398, 64
    %v2405 = vpop.permute.xlu0 %2404
    %v2407 = vmul.f32 %v2397, %v2405
    %2409 = vrot.lane.b32.xlu0 %v2407, 32
    %v2410 = vpop.permute.xlu0 %2409
    %v2412 = vadd.f32 %v2402, %v2410
    %v2413 = vtanh.pop %v2412
    %2415 = vrot.lane.b32.xlu0 %v2413, 64
    %v2416 = vpop.permute.xlu0 %2415
    %v2418 = vmul.f32 %v2397, %v2416
    %v2420 = vrot.slane %v2418, 2
    %2421 = vrot.lane.b32.xlu0 %v2420, 32
    %v2422 = vpop.permute.xlu0 %2421
    %v2423 = vsel %vm58, %v2422, 0
    %2425 = vmatprep.subr.mxu0 0.0
    %2426 = vmatpush1.msra.mxu0 0.0
    %2427 = vmatprep.subr.mxu0 0.0
    %2428 = vmatpush1.msra.mxu0 0.0
    %2429 = vmatprep.subr.mxu0 0.0
    %2430 = vmatpush1.msra.mxu0 0.0
    %2431 = vmatprep.subr.mxu0 0.0
    %2432 = vmatpush1.msra.mxu0 0.0
    %2433 = vmatprep.subr.mxu0 0.0
    %2434 = vmatpush1.msra.mxu0 0.0
    %2435 = vmatprep.subr.mxu0 0.0
    %2436 = vmatpush1.msra.mxu0 0.0
    %2437 = vmatprep.subr.mxu0 0.0
    %2438 = vmatpush1.msra.mxu0 0.0
    %2439 = vmatprep.subr.mxu0 0.0
    %2440 = vmatpush1.msra.mxu0 0.0
    %2441 = vmatprep.subr.mxu0 0.0
    %2442 = vmatpush1.msra.mxu0 0.0
    %2443 = vmatprep.subr.mxu0 0.0
    %2444 = vmatpush1.msra.mxu0 0.0
    %2445 = vmatprep.subr.mxu0 0.0
    %2446 = vmatpush1.msra.mxu0 0.0
    %2447 = vmatprep.subr.mxu0 0.0
    %2448 = vmatpush1.msra.mxu0 0.0
    %2449 = vmatprep.subr.mxu0 0.0
    %2450 = vmatpush1.msra.mxu0 %v241
    %2451 = vmatprep.subr.mxu0 0.0
    %2452 = vmatpush1.msra.mxu0 %v240
    %2453 = vmatprep.subr.mxu0 0.0
    %2454 = vmatpush1.msra.mxu0 %v239
    %2455 = vmatprep.subr.mxu0 0.0
    %2456 = vmatpush1.msra.mxu0 %v238
    %2457 = vmatprep.subr.mxu0 0.0
    %2458 = vmatpush2.msra.mxu0 0.0
    %2459 = vmatprep.subr.mxu0 0.0
    %2460 = vmatpush2.msra.mxu0 0.0
    %2461 = vmatprep.subr.mxu0 0.0
    %2462 = vmatpush2.msra.mxu0 0.0
    %2463 = vmatprep.subr.mxu0 0.0
    %2464 = vmatpush2.msra.mxu0 0.0
    %2465 = vmatprep.subr.mxu0 0.0
    %2466 = vmatpush2.msra.mxu0 0.0
    %2467 = vmatprep.subr.mxu0 0.0
    %2468 = vmatpush2.msra.mxu0 0.0
    %2469 = vmatprep.subr.mxu0 0.0
    %2470 = vmatpush2.msra.mxu0 0.0
    %2471 = vmatprep.subr.mxu0 0.0
    %2472 = vmatpush2.msra.mxu0 0.0
    %2473 = vmatprep.subr.mxu0 0.0
    %2474 = vmatpush2.msra.mxu0 0.0
    %2475 = vmatprep.subr.mxu0 0.0
    %2476 = vmatpush2.msra.mxu0 0.0
    %2477 = vmatprep.subr.mxu0 0.0
    %2478 = vmatpush2.msra.mxu0 0.0
    %2479 = vmatprep.subr.mxu0 0.0
    %2480 = vmatpush2.msra.mxu0 0.0
    %2481 = vmatprep.subr.mxu0 0.0
    %2482 = vmatpush2.msra.mxu0 0.0
    %2483 = vmatprep.subr.mxu0 0.0
    %2484 = vmatpush2.msra.mxu0 0.0
    %2485 = vmatprep.subr.mxu0 0.0
    %2486 = vmatpush2.msra.mxu0 0.0
    %2487 = vmatprep.subr.mxu0 0.0
    %2488 = vmatpush2.msra.mxu0 0.0
    %2489 = vmatprep.mubr.f32.mxu0 0.0
    %2490 = vmatmul.mubr.f32.gmra.mxu0 %v2423
    %v2491 = vpop.f32.mrf.mxu0
    %v2492 = vadd.f32 0.0, %v2491
    %v2493 = vpop.f32.mrf.mxu0
    %2494 = vdwg.mxu0
    %2495 = vmatprep.subr.mxu0 0.0
    %2496 = vmatpush1.msra.mxu0 0.0
    %2497 = vmatprep.subr.mxu0 0.0
    %2498 = vmatpush1.msra.mxu0 0.0
    %2499 = vmatprep.subr.mxu0 0.0
    %2500 = vmatpush1.msra.mxu0 0.0
    %2501 = vmatprep.subr.mxu0 0.0
    %2502 = vmatpush1.msra.mxu0 0.0
    %2503 = vmatprep.subr.mxu0 0.0
    %2504 = vmatpush1.msra.mxu0 0.0
    %2505 = vmatprep.subr.mxu0 0.0
    %2506 = vmatpush1.msra.mxu0 0.0
    %2507 = vmatprep.subr.mxu0 0.0
    %2508 = vmatpush1.msra.mxu0 0.0
    %2509 = vmatprep.subr.mxu0 0.0
    %2510 = vmatpush1.msra.mxu0 0.0
    %2511 = vmatprep.subr.mxu0 0.0
    %2512 = vmatpush1.msra.mxu0 0.0
    %2513 = vmatprep.subr.mxu0 0.0
    %2514 = vmatpush1.msra.mxu0 0.0
    %2515 = vmatprep.subr.mxu0 0.0
    %2516 = vmatpush1.msra.mxu0 0.0
    %2517 = vmatprep.subr.mxu0 0.0
    %2518 = vmatpush1.msra.mxu0 0.0
    %2519 = vmatprep.subr.mxu0 0.0
    %2520 = vmatpush1.msra.mxu0 %v237
    %2521 = vmatprep.subr.mxu0 0.0
    %2522 = vmatpush1.msra.mxu0 %v236
    %2523 = vmatprep.subr.mxu0 0.0
    %2524 = vmatpush1.msra.mxu0 %v235
    %2525 = vmatprep.subr.mxu0 0.0
    %2526 = vmatpush1.msra.mxu0 %v234
    %2527 = vmatprep.subr.mxu0 0.0
    %2528 = vmatpush2.msra.mxu0 0.0
    %2529 = vmatprep.subr.mxu0 0.0
    %2530 = vmatpush2.msra.mxu0 0.0
    %2531 = vmatprep.subr.mxu0 0.0
    %2532 = vmatpush2.msra.mxu0 0.0
    %2533 = vmatprep.subr.mxu0 0.0
    %2534 = vmatpush2.msra.mxu0 0.0
    %2535 = vmatprep.subr.mxu0 0.0
    %2536 = vmatpush2.msra.mxu0 0.0
    %2537 = vmatprep.subr.mxu0 0.0
    %2538 = vmatpush2.msra.mxu0 0.0
    %2539 = vmatprep.subr.mxu0 0.0
    %2540 = vmatpush2.msra.mxu0 0.0
    %2541 = vmatprep.subr.mxu0 0.0
    %2542 = vmatpush2.msra.mxu0 0.0
    %2543 = vmatprep.subr.mxu0 0.0
    %2544 = vmatpush2.msra.mxu0 0.0
    %2545 = vmatprep.subr.mxu0 0.0
    %2546 = vmatpush2.msra.mxu0 0.0
    %2547 = vmatprep.subr.mxu0 0.0
    %2548 = vmatpush2.msra.mxu0 0.0
    %2549 = vmatprep.subr.mxu0 0.0
    %2550 = vmatpush2.msra.mxu0 0.0
    %2551 = vmatprep.subr.mxu0 0.0
    %2552 = vmatpush2.msra.mxu0 0.0
    %2553 = vmatprep.subr.mxu0 0.0
    %2554 = vmatpush2.msra.mxu0 0.0
    %2555 = vmatprep.subr.mxu0 0.0
    %2556 = vmatpush2.msra.mxu0 0.0
    %2557 = vmatprep.subr.mxu0 0.0
    %2558 = vmatpush2.msra.mxu0 0.0
    %2559 = vmatprep.mubr.f32.mxu0 0.0
    %2560 = vmatmul.mubr.f32.gmra.mxu0 %v655
    %v2561 = vpop.f32.mrf.mxu0
    %v2562 = vadd.f32 %v2492, %v2561
    %v2563 = vpop.f32.mrf.mxu0
    %2564 = vdwg.mxu0
    %2565 = vmatprep.subr.mxu0 0.0
    %2566 = vmatpush1.msra.mxu0 0.0
    %2567 = vmatprep.subr.mxu0 0.0
    %2568 = vmatpush1.msra.mxu0 0.0
    %2569 = vmatprep.subr.mxu0 0.0
    %2570 = vmatpush1.msra.mxu0 0.0
    %2571 = vmatprep.subr.mxu0 0.0
    %2572 = vmatpush1.msra.mxu0 0.0
    %2573 = vmatprep.subr.mxu0 0.0
    %2574 = vmatpush1.msra.mxu0 0.0
    %2575 = vmatprep.subr.mxu0 0.0
    %2576 = vmatpush1.msra.mxu0 0.0
    %2577 = vmatprep.subr.mxu0 0.0
    %2578 = vmatpush1.msra.mxu0 0.0
    %2579 = vmatprep.subr.mxu0 0.0
    %2580 = vmatpush1.msra.mxu0 0.0
    %2581 = vmatprep.subr.mxu0 0.0
    %2582 = vmatpush1.msra.mxu0 0.0
    %2583 = vmatprep.subr.mxu0 0.0
    %2584 = vmatpush1.msra.mxu0 0.0
    %2585 = vmatprep.subr.mxu0 0.0
    %2586 = vmatpush1.msra.mxu0 0.0
    %2587 = vmatprep.subr.mxu0 0.0
    %2588 = vmatpush1.msra.mxu0 0.0
    %2589 = vmatprep.subr.mxu0 0.0
    %2590 = vmatpush1.msra.mxu0 %v229
    %2591 = vmatprep.subr.mxu0 0.0
    %2592 = vmatpush1.msra.mxu0 %v228
    %2593 = vmatprep.subr.mxu0 0.0
    %2594 = vmatpush1.msra.mxu0 %v227
    %2595 = vmatprep.subr.mxu0 0.0
    %2596 = vmatpush1.msra.mxu0 %v226
    %2597 = vmatprep.subr.mxu0 0.0
    %2598 = vmatpush2.msra.mxu0 0.0
    %2599 = vmatprep.subr.mxu0 0.0
    %2600 = vmatpush2.msra.mxu0 0.0
    %2601 = vmatprep.subr.mxu0 0.0
    %2602 = vmatpush2.msra.mxu0 0.0
    %2603 = vmatprep.subr.mxu0 0.0
    %2604 = vmatpush2.msra.mxu0 0.0
    %2605 = vmatprep.subr.mxu0 0.0
    %2606 = vmatpush2.msra.mxu0 0.0
    %2607 = vmatprep.subr.mxu0 0.0
    %2608 = vmatpush2.msra.mxu0 0.0
    %2609 = vmatprep.subr.mxu0 0.0
    %2610 = vmatpush2.msra.mxu0 0.0
    %2611 = vmatprep.subr.mxu0 0.0
    %2612 = vmatpush2.msra.mxu0 0.0
    %2613 = vmatprep.subr.mxu0 0.0
    %2614 = vmatpush2.msra.mxu0 0.0
    %2615 = vmatprep.subr.mxu0 0.0
    %2616 = vmatpush2.msra.mxu0 0.0
    %2617 = vmatprep.subr.mxu0 0.0
    %2618 = vmatpush2.msra.mxu0 0.0
    %2619 = vmatprep.subr.mxu0 0.0
    %2620 = vmatpush2.msra.mxu0 0.0
    %2621 = vmatprep.subr.mxu0 0.0
    %2622 = vmatpush2.msra.mxu0 0.0
    %2623 = vmatprep.subr.mxu0 0.0
    %2624 = vmatpush2.msra.mxu0 0.0
    %2625 = vmatprep.subr.mxu0 0.0
    %2626 = vmatpush2.msra.mxu0 0.0
    %2627 = vmatprep.subr.mxu0 0.0
    %2628 = vmatpush2.msra.mxu0 0.0
    %2629 = vmatprep.mubr.f32.mxu0 0.0
    %2630 = vmatmul.mubr.f32.gmra.mxu0 %v2176
    %v2631 = vpop.f32.mrf.mxu0
    %v2632 = vadd.f32 0.0, %v2631
    %v2633 = vpop.f32.mrf.mxu0
    %2634 = vdwg.mxu0
    %v2636 = vrot.slane %v2632, 2
    %v2638 = vadd.f32 %v137, %v2636
    %v2639 = vxor.u32 %v2638, 2147483648
    %v2640 = vmul.f32 %v2639, 1.442695
    %v2641 = vpow.pop %v2640
    %v2642 = vadd.f32 %v2641, 1.0
    %v2643 = vrcp.pop %v2642
    %v2644 = vmul.f32 1.0, %v2643
    %v2645 = vtanh.pop %v2638
    %v2647 = vrot.slane %v2165, 6
    %v2649 = vmul.f32 %v2644, %v2647
    %2651 = vrot.lane.b32.xlu0 %v2645, 64
    %v2652 = vpop.permute.xlu0 %2651
    %v2654 = vmul.f32 %v2644, %v2652
    %2656 = vrot.lane.b32.xlu0 %v2654, 32
    %v2657 = vpop.permute.xlu0 %2656
    %v2659 = vadd.f32 %v2649, %v2657
    %v2660 = vtanh.pop %v2659
    %2662 = vrot.lane.b32.xlu0 %v2660, 64
    %v2663 = vpop.permute.xlu0 %2662
    %v2665 = vmul.f32 %v2644, %v2663
    %v2667 = vrot.slane %v2665, 6
    %2668 = vrot.lane.b32.xlu0 %v2667, 32
    %v2669 = vpop.permute.xlu0 %2668
    %v2670 = vsel %vm58, %v2669, 0
    %2672 = vmatprep.subr.mxu0 0.0
    %2673 = vmatpush1.msra.mxu0 0.0
    %2674 = vmatprep.subr.mxu0 0.0
    %2675 = vmatpush1.msra.mxu0 0.0
    %2676 = vmatprep.subr.mxu0 0.0
    %2677 = vmatpush1.msra.mxu0 0.0
    %2678 = vmatprep.subr.mxu0 0.0
    %2679 = vmatpush1.msra.mxu0 0.0
    %2680 = vmatprep.subr.mxu0 0.0
    %2681 = vmatpush1.msra.mxu0 0.0
    %2682 = vmatprep.subr.mxu0 0.0
    %2683 = vmatpush1.msra.mxu0 0.0
    %2684 = vmatprep.subr.mxu0 0.0
    %2685 = vmatpush1.msra.mxu0 0.0
    %2686 = vmatprep.subr.mxu0 0.0
    %2687 = vmatpush1.msra.mxu0 0.0
    %2688 = vmatprep.subr.mxu0 0.0
    %2689 = vmatpush1.msra.mxu0 0.0
    %2690 = vmatprep.subr.mxu0 0.0
    %2691 = vmatpush1.msra.mxu0 0.0
    %2692 = vmatprep.subr.mxu0 0.0
    %2693 = vmatpush1.msra.mxu0 0.0
    %2694 = vmatprep.subr.mxu0 0.0
    %2695 = vmatpush1.msra.mxu0 0.0
    %2696 = vmatprep.subr.mxu0 0.0
    %2697 = vmatpush1.msra.mxu0 %v237
    %2698 = vmatprep.subr.mxu0 0.0
    %2699 = vmatpush1.msra.mxu0 %v236
    %2700 = vmatprep.subr.mxu0 0.0
    %2701 = vmatpush1.msra.mxu0 %v235
    %2702 = vmatprep.subr.mxu0 0.0
    %2703 = vmatpush1.msra.mxu0 %v234
    %2704 = vmatprep.subr.mxu0 0.0
    %2705 = vmatpush2.msra.mxu0 0.0
    %2706 = vmatprep.subr.mxu0 0.0
    %2707 = vmatpush2.msra.mxu0 0.0
    %2708 = vmatprep.subr.mxu0 0.0
    %2709 = vmatpush2.msra.mxu0 0.0
    %2710 = vmatprep.subr.mxu0 0.0
    %2711 = vmatpush2.msra.mxu0 0.0
    %2712 = vmatprep.subr.mxu0 0.0
    %2713 = vmatpush2.msra.mxu0 0.0
    %2714 = vmatprep.subr.mxu0 0.0
    %2715 = vmatpush2.msra.mxu0 0.0
    %2716 = vmatprep.subr.mxu0 0.0
    %2717 = vmatpush2.msra.mxu0 0.0
    %2718 = vmatprep.subr.mxu0 0.0
    %2719 = vmatpush2.msra.mxu0 0.0
    %2720 = vmatprep.subr.mxu0 0.0
    %2721 = vmatpush2.msra.mxu0 0.0
    %2722 = vmatprep.subr.mxu0 0.0
    %2723 = vmatpush2.msra.mxu0 0.0
    %2724 = vmatprep.subr.mxu0 0.0
    %2725 = vmatpush2.msra.mxu0 0.0
    %2726 = vmatprep.subr.mxu0 0.0
    %2727 = vmatpush2.msra.mxu0 0.0
    %2728 = vmatprep.subr.mxu0 0.0
    %2729 = vmatpush2.msra.mxu0 0.0
    %2730 = vmatprep.subr.mxu0 0.0
    %2731 = vmatpush2.msra.mxu0 0.0
    %2732 = vmatprep.subr.mxu0 0.0
    %2733 = vmatpush2.msra.mxu0 0.0
    %2734 = vmatprep.subr.mxu0 0.0
    %2735 = vmatpush2.msra.mxu0 0.0
    %2736 = vmatprep.mubr.f32.mxu0 0.0
    %2737 = vmatmul.mubr.f32.gmra.mxu0 %v2670
    %v2738 = vpop.f32.mrf.mxu0
    %v2739 = vadd.f32 0.0, %v2738
    %v2740 = vpop.f32.mrf.mxu0
    %2741 = vdwg.mxu0
    %2742 = vmatprep.subr.mxu0 0.0
    %2743 = vmatpush1.msra.mxu0 0.0
    %2744 = vmatprep.subr.mxu0 0.0
    %2745 = vmatpush1.msra.mxu0 0.0
    %2746 = vmatprep.subr.mxu0 0.0
    %2747 = vmatpush1.msra.mxu0 0.0
    %2748 = vmatprep.subr.mxu0 0.0
    %2749 = vmatpush1.msra.mxu0 0.0
    %2750 = vmatprep.subr.mxu0 0.0
    %2751 = vmatpush1.msra.mxu0 0.0
    %2752 = vmatprep.subr.mxu0 0.0
    %2753 = vmatpush1.msra.mxu0 0.0
    %2754 = vmatprep.subr.mxu0 0.0
    %2755 = vmatpush1.msra.mxu0 0.0
    %2756 = vmatprep.subr.mxu0 0.0
    %2757 = vmatpush1.msra.mxu0 0.0
    %2758 = vmatprep.subr.mxu0 0.0
    %2759 = vmatpush1.msra.mxu0 0.0
    %2760 = vmatprep.subr.mxu0 0.0
    %2761 = vmatpush1.msra.mxu0 0.0
    %2762 = vmatprep.subr.mxu0 0.0
    %2763 = vmatpush1.msra.mxu0 0.0
    %2764 = vmatprep.subr.mxu0 0.0
    %2765 = vmatpush1.msra.mxu0 0.0
    %2766 = vmatprep.subr.mxu0 0.0
    %2767 = vmatpush1.msra.mxu0 %v241
    %2768 = vmatprep.subr.mxu0 0.0
    %2769 = vmatpush1.msra.mxu0 %v240
    %2770 = vmatprep.subr.mxu0 0.0
    %2771 = vmatpush1.msra.mxu0 %v239
    %2772 = vmatprep.subr.mxu0 0.0
    %2773 = vmatpush1.msra.mxu0 %v238
    %2774 = vmatprep.subr.mxu0 0.0
    %2775 = vmatpush2.msra.mxu0 0.0
    %2776 = vmatprep.subr.mxu0 0.0
    %2777 = vmatpush2.msra.mxu0 0.0
    %2778 = vmatprep.subr.mxu0 0.0
    %2779 = vmatpush2.msra.mxu0 0.0
    %2780 = vmatprep.subr.mxu0 0.0
    %2781 = vmatpush2.msra.mxu0 0.0
    %2782 = vmatprep.subr.mxu0 0.0
    %2783 = vmatpush2.msra.mxu0 0.0
    %2784 = vmatprep.subr.mxu0 0.0
    %2785 = vmatpush2.msra.mxu0 0.0
    %2786 = vmatprep.subr.mxu0 0.0
    %2787 = vmatpush2.msra.mxu0 0.0
    %2788 = vmatprep.subr.mxu0 0.0
    %2789 = vmatpush2.msra.mxu0 0.0
    %2790 = vmatprep.subr.mxu0 0.0
    %2791 = vmatpush2.msra.mxu0 0.0
    %2792 = vmatprep.subr.mxu0 0.0
    %2793 = vmatpush2.msra.mxu0 0.0
    %2794 = vmatprep.subr.mxu0 0.0
    %2795 = vmatpush2.msra.mxu0 0.0
    %2796 = vmatprep.subr.mxu0 0.0
    %2797 = vmatpush2.msra.mxu0 0.0
    %2798 = vmatprep.subr.mxu0 0.0
    %2799 = vmatpush2.msra.mxu0 0.0
    %2800 = vmatprep.subr.mxu0 0.0
    %2801 = vmatpush2.msra.mxu0 0.0
    %2802 = vmatprep.subr.mxu0 0.0
    %2803 = vmatpush2.msra.mxu0 0.0
    %2804 = vmatprep.subr.mxu0 0.0
    %2805 = vmatpush2.msra.mxu0 0.0
    %2806 = vmatprep.mubr.f32.mxu0 0.0
    %2807 = vmatmul.mubr.f32.gmra.mxu0 %v548
    %v2808 = vpop.f32.mrf.mxu0
    %v2809 = vadd.f32 %v2739, %v2808
    %v2810 = vpop.f32.mrf.mxu0
    %2811 = vdwg.mxu0
    %2812 = vmatprep.subr.mxu0 0.0
    %2813 = vmatpush1.msra.mxu0 0.0
    %2814 = vmatprep.subr.mxu0 0.0
    %2815 = vmatpush1.msra.mxu0 0.0
    %2816 = vmatprep.subr.mxu0 0.0
    %2817 = vmatpush1.msra.mxu0 0.0
    %2818 = vmatprep.subr.mxu0 0.0
    %2819 = vmatpush1.msra.mxu0 0.0
    %2820 = vmatprep.subr.mxu0 0.0
    %2821 = vmatpush1.msra.mxu0 0.0
    %2822 = vmatprep.subr.mxu0 0.0
    %2823 = vmatpush1.msra.mxu0 0.0
    %2824 = vmatprep.subr.mxu0 0.0
    %2825 = vmatpush1.msra.mxu0 0.0
    %2826 = vmatprep.subr.mxu0 0.0
    %2827 = vmatpush1.msra.mxu0 0.0
    %2828 = vmatprep.subr.mxu0 0.0
    %2829 = vmatpush1.msra.mxu0 0.0
    %2830 = vmatprep.subr.mxu0 0.0
    %2831 = vmatpush1.msra.mxu0 0.0
    %2832 = vmatprep.subr.mxu0 0.0
    %2833 = vmatpush1.msra.mxu0 0.0
    %2834 = vmatprep.subr.mxu0 0.0
    %2835 = vmatpush1.msra.mxu0 0.0
    %2836 = vmatprep.subr.mxu0 0.0
    %2837 = vmatpush1.msra.mxu0 %v233
    %2838 = vmatprep.subr.mxu0 0.0
    %2839 = vmatpush1.msra.mxu0 %v232
    %2840 = vmatprep.subr.mxu0 0.0
    %2841 = vmatpush1.msra.mxu0 %v231
    %2842 = vmatprep.subr.mxu0 0.0
    %2843 = vmatpush1.msra.mxu0 %v230
    %2844 = vmatprep.subr.mxu0 0.0
    %2845 = vmatpush2.msra.mxu0 0.0
    %2846 = vmatprep.subr.mxu0 0.0
    %2847 = vmatpush2.msra.mxu0 0.0
    %2848 = vmatprep.subr.mxu0 0.0
    %2849 = vmatpush2.msra.mxu0 0.0
    %2850 = vmatprep.subr.mxu0 0.0
    %2851 = vmatpush2.msra.mxu0 0.0
    %2852 = vmatprep.subr.mxu0 0.0
    %2853 = vmatpush2.msra.mxu0 0.0
    %2854 = vmatprep.subr.mxu0 0.0
    %2855 = vmatpush2.msra.mxu0 0.0
    %2856 = vmatprep.subr.mxu0 0.0
    %2857 = vmatpush2.msra.mxu0 0.0
    %2858 = vmatprep.subr.mxu0 0.0
    %2859 = vmatpush2.msra.mxu0 0.0
    %2860 = vmatprep.subr.mxu0 0.0
    %2861 = vmatpush2.msra.mxu0 0.0
    %2862 = vmatprep.subr.mxu0 0.0
    %2863 = vmatpush2.msra.mxu0 0.0
    %2864 = vmatprep.subr.mxu0 0.0
    %2865 = vmatpush2.msra.mxu0 0.0
    %2866 = vmatprep.subr.mxu0 0.0
    %2867 = vmatpush2.msra.mxu0 0.0
    %2868 = vmatprep.subr.mxu0 0.0
    %2869 = vmatpush2.msra.mxu0 0.0
    %2870 = vmatprep.subr.mxu0 0.0
    %2871 = vmatpush2.msra.mxu0 0.0
    %2872 = vmatprep.subr.mxu0 0.0
    %2873 = vmatpush2.msra.mxu0 0.0
    %2874 = vmatprep.subr.mxu0 0.0
    %2875 = vmatpush2.msra.mxu0 0.0
    %2876 = vmatprep.mubr.f32.mxu0 0.0
    %2877 = vmatmul.mubr.f32.gmra.mxu0 %v2423
    %v2878 = vpop.f32.mrf.mxu0
    %v2879 = vadd.f32 0.0, %v2878
    %v2880 = vpop.f32.mrf.mxu0
    %2881 = vdwg.mxu0
    %v2882 = vadd.f32 %v218, %v2879
    %v2883 = vxor.u32 %v2882, 2147483648
    %v2884 = vmul.f32 %v2883, 1.442695
    %v2885 = vpow.pop %v2884
    %v2886 = vadd.f32 %v2885, 1.0
    %v2887 = vrcp.pop %v2886
    %v2888 = vmul.f32 1.0, %v2887
    %v2889 = vtanh.pop %v2882
    %v2891 = vrot.slane %v2412, 2
    %v2893 = vmul.f32 %v2888, %v2891
    %2895 = vrot.lane.b32.xlu0 %v2889, 64
    %v2896 = vpop.permute.xlu0 %2895
    %v2898 = vmul.f32 %v2888, %v2896
    %2900 = vrot.lane.b32.xlu0 %v2898, 32
    %v2901 = vpop.permute.xlu0 %2900
    %v2903 = vadd.f32 %v2893, %v2901
    %v2904 = vtanh.pop %v2903
    %2906 = vrot.lane.b32.xlu0 %v2904, 64
    %v2907 = vpop.permute.xlu0 %2906
    %v2909 = vmul.f32 %v2888, %v2907
    %2911 = vrot.lane.b32.xlu0 %v2909, 32
    %v2912 = vpop.permute.xlu0 %2911
    %v2913 = vsel %vm58, %v2912, 0
    %2915 = vmatprep.subr.mxu0 0.0
    %2916 = vmatpush1.msra.mxu0 0.0
    %2917 = vmatprep.subr.mxu0 0.0
    %2918 = vmatpush1.msra.mxu0 0.0
    %2919 = vmatprep.subr.mxu0 0.0
    %2920 = vmatpush1.msra.mxu0 0.0
    %2921 = vmatprep.subr.mxu0 0.0
    %2922 = vmatpush1.msra.mxu0 0.0
    %2923 = vmatprep.subr.mxu0 0.0
    %2924 = vmatpush1.msra.mxu0 0.0
    %2925 = vmatprep.subr.mxu0 0.0
    %2926 = vmatpush1.msra.mxu0 0.0
    %2927 = vmatprep.subr.mxu0 0.0
    %2928 = vmatpush1.msra.mxu0 0.0
    %2929 = vmatprep.subr.mxu0 0.0
    %2930 = vmatpush1.msra.mxu0 0.0
    %2931 = vmatprep.subr.mxu0 0.0
    %2932 = vmatpush1.msra.mxu0 0.0
    %2933 = vmatprep.subr.mxu0 0.0
    %2934 = vmatpush1.msra.mxu0 0.0
    %2935 = vmatprep.subr.mxu0 0.0
    %2936 = vmatpush1.msra.mxu0 0.0
    %2937 = vmatprep.subr.mxu0 0.0
    %2938 = vmatpush1.msra.mxu0 0.0
    %2939 = vmatprep.subr.mxu0 0.0
    %2940 = vmatpush1.msra.mxu0 %v241
    %2941 = vmatprep.subr.mxu0 0.0
    %2942 = vmatpush1.msra.mxu0 %v240
    %2943 = vmatprep.subr.mxu0 0.0
    %2944 = vmatpush1.msra.mxu0 %v239
    %2945 = vmatprep.subr.mxu0 0.0
    %2946 = vmatpush1.msra.mxu0 %v238
    %2947 = vmatprep.subr.mxu0 0.0
    %2948 = vmatpush2.msra.mxu0 0.0
    %2949 = vmatprep.subr.mxu0 0.0
    %2950 = vmatpush2.msra.mxu0 0.0
    %2951 = vmatprep.subr.mxu0 0.0
    %2952 = vmatpush2.msra.mxu0 0.0
    %2953 = vmatprep.subr.mxu0 0.0
    %2954 = vmatpush2.msra.mxu0 0.0
    %2955 = vmatprep.subr.mxu0 0.0
    %2956 = vmatpush2.msra.mxu0 0.0
    %2957 = vmatprep.subr.mxu0 0.0
    %2958 = vmatpush2.msra.mxu0 0.0
    %2959 = vmatprep.subr.mxu0 0.0
    %2960 = vmatpush2.msra.mxu0 0.0
    %2961 = vmatprep.subr.mxu0 0.0
    %2962 = vmatpush2.msra.mxu0 0.0
    %2963 = vmatprep.subr.mxu0 0.0
    %2964 = vmatpush2.msra.mxu0 0.0
    %2965 = vmatprep.subr.mxu0 0.0
    %2966 = vmatpush2.msra.mxu0 0.0
    %2967 = vmatprep.subr.mxu0 0.0
    %2968 = vmatpush2.msra.mxu0 0.0
    %2969 = vmatprep.subr.mxu0 0.0
    %2970 = vmatpush2.msra.mxu0 0.0
    %2971 = vmatprep.subr.mxu0 0.0
    %2972 = vmatpush2.msra.mxu0 0.0
    %2973 = vmatprep.subr.mxu0 0.0
    %2974 = vmatpush2.msra.mxu0 0.0
    %2975 = vmatprep.subr.mxu0 0.0
    %2976 = vmatpush2.msra.mxu0 0.0
    %2977 = vmatprep.subr.mxu0 0.0
    %2978 = vmatpush2.msra.mxu0 0.0
    %2979 = vmatprep.mubr.f32.mxu0 0.0
    %2980 = vmatmul.mubr.f32.gmra.mxu0 %v2913
    %v2981 = vpop.f32.mrf.mxu0
    %v2982 = vadd.f32 0.0, %v2981
    %v2983 = vpop.f32.mrf.mxu0
    %2984 = vdwg.mxu0
    %2985 = vmatprep.subr.mxu0 0.0
    %2986 = vmatpush1.msra.mxu0 0.0
    %2987 = vmatprep.subr.mxu0 0.0
    %2988 = vmatpush1.msra.mxu0 0.0
    %2989 = vmatprep.subr.mxu0 0.0
    %2990 = vmatpush1.msra.mxu0 0.0
    %2991 = vmatprep.subr.mxu0 0.0
    %2992 = vmatpush1.msra.mxu0 0.0
    %2993 = vmatprep.subr.mxu0 0.0
    %2994 = vmatpush1.msra.mxu0 0.0
    %2995 = vmatprep.subr.mxu0 0.0
    %2996 = vmatpush1.msra.mxu0 0.0
    %2997 = vmatprep.subr.mxu0 0.0
    %2998 = vmatpush1.msra.mxu0 0.0
    %2999 = vmatprep.subr.mxu0 0.0
    %3000 = vmatpush1.msra.mxu0 0.0
    %3001 = vmatprep.subr.mxu0 0.0
    %3002 = vmatpush1.msra.mxu0 0.0
    %3003 = vmatprep.subr.mxu0 0.0
    %3004 = vmatpush1.msra.mxu0 0.0
    %3005 = vmatprep.subr.mxu0 0.0
    %3006 = vmatpush1.msra.mxu0 0.0
    %3007 = vmatprep.subr.mxu0 0.0
    %3008 = vmatpush1.msra.mxu0 0.0
    %3009 = vmatprep.subr.mxu0 0.0
    %3010 = vmatpush1.msra.mxu0 %v237
    %3011 = vmatprep.subr.mxu0 0.0
    %3012 = vmatpush1.msra.mxu0 %v236
    %3013 = vmatprep.subr.mxu0 0.0
    %3014 = vmatpush1.msra.mxu0 %v235
    %3015 = vmatprep.subr.mxu0 0.0
    %3016 = vmatpush1.msra.mxu0 %v234
    %3017 = vmatprep.subr.mxu0 0.0
    %3018 = vmatpush2.msra.mxu0 0.0
    %3019 = vmatprep.subr.mxu0 0.0
    %3020 = vmatpush2.msra.mxu0 0.0
    %3021 = vmatprep.subr.mxu0 0.0
    %3022 = vmatpush2.msra.mxu0 0.0
    %3023 = vmatprep.subr.mxu0 0.0
    %3024 = vmatpush2.msra.mxu0 0.0
    %3025 = vmatprep.subr.mxu0 0.0
    %3026 = vmatpush2.msra.mxu0 0.0
    %3027 = vmatprep.subr.mxu0 0.0
    %3028 = vmatpush2.msra.mxu0 0.0
    %3029 = vmatprep.subr.mxu0 0.0
    %3030 = vmatpush2.msra.mxu0 0.0
    %3031 = vmatprep.subr.mxu0 0.0
    %3032 = vmatpush2.msra.mxu0 0.0
    %3033 = vmatprep.subr.mxu0 0.0
    %3034 = vmatpush2.msra.mxu0 0.0
    %3035 = vmatprep.subr.mxu0 0.0
    %3036 = vmatpush2.msra.mxu0 0.0
    %3037 = vmatprep.subr.mxu0 0.0
    %3038 = vmatpush2.msra.mxu0 0.0
    %3039 = vmatprep.subr.mxu0 0.0
    %3040 = vmatpush2.msra.mxu0 0.0
    %3041 = vmatprep.subr.mxu0 0.0
    %3042 = vmatpush2.msra.mxu0 0.0
    %3043 = vmatprep.subr.mxu0 0.0
    %3044 = vmatpush2.msra.mxu0 0.0
    %3045 = vmatprep.subr.mxu0 0.0
    %3046 = vmatpush2.msra.mxu0 0.0
    %3047 = vmatprep.subr.mxu0 0.0
    %3048 = vmatpush2.msra.mxu0 0.0
    %3049 = vmatprep.mubr.f32.mxu0 0.0
    %3050 = vmatmul.mubr.f32.gmra.mxu0 %v441
    %v3051 = vpop.f32.mrf.mxu0
    %v3052 = vadd.f32 %v2982, %v3051
    %v3053 = vpop.f32.mrf.mxu0
    %3054 = vdwg.mxu0
    %v3055 = vld [vmem:[%s9] sm:$0xff]
    %v3056 = vld [vmem:[%s9 + $0x8] sm:$0xff]
    %v3057 = vld [vmem:[%s9 + $0x10] sm:$0xff]
    %v3058 = vld [vmem:[%s9 + $0x18] sm:$0xff]
    %v3059 = vld [vmem:[%s10] sm:$0x1]
    %v3061 = vlaneseq
    %v3062 = vshrl.u32 %v3061, 7
    %v3063 = vsub.s32 0, %v3062
    %v3064 = vrot.slane %v3059, %v3063
    %v3066 = vadd.f32 %v2809, %v3064
    %3067 = vmatprep.subr.mxu0 0.0
    %3068 = vmatpush1.msra.mxu0 0.0
    %3069 = vmatprep.subr.mxu0 0.0
    %3070 = vmatpush1.msra.mxu0 0.0
    %3071 = vmatprep.subr.mxu0 0.0
    %3072 = vmatpush1.msra.mxu0 0.0
    %3073 = vmatprep.subr.mxu0 0.0
    %3074 = vmatpush1.msra.mxu0 0.0
    %3075 = vmatprep.subr.mxu0 0.0
    %3076 = vmatpush1.msra.mxu0 0.0
    %3077 = vmatprep.subr.mxu0 0.0
    %3078 = vmatpush1.msra.mxu0 0.0
    %3079 = vmatprep.subr.mxu0 0.0
    %3080 = vmatpush1.msra.mxu0 0.0
    %3081 = vmatprep.subr.mxu0 0.0
    %3082 = vmatpush1.msra.mxu0 0.0
    %3083 = vmatprep.subr.mxu0 0.0
    %3084 = vmatpush1.msra.mxu0 0.0
    %3085 = vmatprep.subr.mxu0 0.0
    %3086 = vmatpush1.msra.mxu0 0.0
    %3087 = vmatprep.subr.mxu0 0.0
    %3088 = vmatpush1.msra.mxu0 0.0
    %3089 = vmatprep.subr.mxu0 0.0
    %3090 = vmatpush1.msra.mxu0 0.0
    %3091 = vmatprep.subr.mxu0 0.0
    %3092 = vmatpush1.msra.mxu0 %v3058
    %3093 = vmatprep.subr.mxu0 0.0
    %3094 = vmatpush1.msra.mxu0 %v3057
    %3095 = vmatprep.subr.mxu0 0.0
    %3096 = vmatpush1.msra.mxu0 %v3056
    %3097 = vmatprep.subr.mxu0 0.0
    %3098 = vmatpush1.msra.mxu0 %v3055
    %3099 = vmatprep.subr.mxu0 0.0
    %3100 = vmatpush2.msra.mxu0 0.0
    %3101 = vmatprep.subr.mxu0 0.0
    %3102 = vmatpush2.msra.mxu0 0.0
    %3103 = vmatprep.subr.mxu0 0.0
    %3104 = vmatpush2.msra.mxu0 0.0
    %3105 = vmatprep.subr.mxu0 0.0
    %3106 = vmatpush2.msra.mxu0 0.0
    %3107 = vmatprep.subr.mxu0 0.0
    %3108 = vmatpush2.msra.mxu0 0.0
    %3109 = vmatprep.subr.mxu0 0.0
    %3110 = vmatpush2.msra.mxu0 0.0
    %3111 = vmatprep.subr.mxu0 0.0
    %3112 = vmatpush2.msra.mxu0 0.0
    %3113 = vmatprep.subr.mxu0 0.0
    %3114 = vmatpush2.msra.mxu0 0.0
    %3115 = vmatprep.subr.mxu0 0.0
    %3116 = vmatpush2.msra.mxu0 0.0
    %3117 = vmatprep.subr.mxu0 0.0
    %3118 = vmatpush2.msra.mxu0 0.0
    %3119 = vmatprep.subr.mxu0 0.0
    %3120 = vmatpush2.msra.mxu0 0.0
    %3121 = vmatprep.subr.mxu0 0.0
    %3122 = vmatpush2.msra.mxu0 0.0
    %3123 = vmatprep.subr.mxu0 0.0
    %3124 = vmatpush2.msra.mxu0 0.0
    %3125 = vmatprep.subr.mxu0 0.0
    %3126 = vmatpush2.msra.mxu0 0.0
    %3127 = vmatprep.subr.mxu0 0.0
    %3128 = vmatpush2.msra.mxu0 0.0
    %3129 = vmatprep.subr.mxu0 0.0
    %3130 = vmatpush2.msra.mxu0 0.0
    %3131 = vmatprep.mubr.f32.mxu0 0.0
    %3132 = vmatmul.mubr.f32.gmra.mxu0 %v243
    %v3133 = vpop.f32.mrf.mxu0
    %v3134 = vadd.f32 0.0, %v3133
    %v3135 = vpop.f32.mrf.mxu0
    %3136 = vdwg.mxu0
    %v3137 = vadd.f32 %v3066, %v3134
    %v3138 = vxor.u32 %v3137, 2147483648
    %v3139 = vmul.f32 %v3138, 1.442695
    %v3140 = vpow.pop %v3139
    %v3141 = vadd.f32 %v3140, 1.0
    %v3142 = vrcp.pop %v3141
    %v3143 = vmul.f32 1.0, %v3142
    %v3144 = vtanh.pop %v3137
    %v3145 = vmul.f32 %v3143, 0.0
    %3147 = vrot.lane.b32.xlu0 %v3144, 64
    %v3148 = vpop.permute.xlu0 %3147
    %v3150 = vmul.f32 %v3143, %v3148
    %3152 = vrot.lane.b32.xlu0 %v3150, 32
    %v3153 = vpop.permute.xlu0 %3152
    %v3155 = vadd.f32 %v3145, %v3153
    %v3156 = vtanh.pop %v3155
    %3158 = vrot.lane.b32.xlu0 %v3156, 64
    %v3159 = vpop.permute.xlu0 %3158
    %v3161 = vmul.f32 %v3143, %v3159
    %v3162 = vadd.f32 %v2315, %v3064
    %3164 = vrot.lane.b32.xlu0 %v3161, 32
    %v3165 = vpop.permute.xlu0 %3164
    %v3166 = vsel %vm58, %v3165, 0
    %3168 = vmatprep.subr.mxu0 0.0
    %3169 = vmatpush1.msra.mxu0 0.0
    %3170 = vmatprep.subr.mxu0 0.0
    %3171 = vmatpush1.msra.mxu0 0.0
    %3172 = vmatprep.subr.mxu0 0.0
    %3173 = vmatpush1.msra.mxu0 0.0
    %3174 = vmatprep.subr.mxu0 0.0
    %3175 = vmatpush1.msra.mxu0 0.0
    %3176 = vmatprep.subr.mxu0 0.0
    %3177 = vmatpush1.msra.mxu0 0.0
    %3178 = vmatprep.subr.mxu0 0.0
    %3179 = vmatpush1.msra.mxu0 0.0
    %3180 = vmatprep.subr.mxu0 0.0
    %3181 = vmatpush1.msra.mxu0 0.0
    %3182 = vmatprep.subr.mxu0 0.0
    %3183 = vmatpush1.msra.mxu0 0.0
    %3184 = vmatprep.subr.mxu0 0.0
    %3185 = vmatpush1.msra.mxu0 0.0
    %3186 = vmatprep.subr.mxu0 0.0
    %3187 = vmatpush1.msra.mxu0 0.0
    %3188 = vmatprep.subr.mxu0 0.0
    %3189 = vmatpush1.msra.mxu0 0.0
    %3190 = vmatprep.subr.mxu0 0.0
    %3191 = vmatpush1.msra.mxu0 0.0
    %3192 = vmatprep.subr.mxu0 0.0
    %3193 = vmatpush1.msra.mxu0 %v3058
    %3194 = vmatprep.subr.mxu0 0.0
    %3195 = vmatpush1.msra.mxu0 %v3057
    %3196 = vmatprep.subr.mxu0 0.0
    %3197 = vmatpush1.msra.mxu0 %v3056
    %3198 = vmatprep.subr.mxu0 0.0
    %3199 = vmatpush1.msra.mxu0 %v3055
    %3200 = vmatprep.subr.mxu0 0.0
    %3201 = vmatpush2.msra.mxu0 0.0
    %3202 = vmatprep.subr.mxu0 0.0
    %3203 = vmatpush2.msra.mxu0 0.0
    %3204 = vmatprep.subr.mxu0 0.0
    %3205 = vmatpush2.msra.mxu0 0.0
    %3206 = vmatprep.subr.mxu0 0.0
    %3207 = vmatpush2.msra.mxu0 0.0
    %3208 = vmatprep.subr.mxu0 0.0
    %3209 = vmatpush2.msra.mxu0 0.0
    %3210 = vmatprep.subr.mxu0 0.0
    %3211 = vmatpush2.msra.mxu0 0.0
    %3212 = vmatprep.subr.mxu0 0.0
    %3213 = vmatpush2.msra.mxu0 0.0
    %3214 = vmatprep.subr.mxu0 0.0
    %3215 = vmatpush2.msra.mxu0 0.0
    %3216 = vmatprep.subr.mxu0 0.0
    %3217 = vmatpush2.msra.mxu0 0.0
    %3218 = vmatprep.subr.mxu0 0.0
    %3219 = vmatpush2.msra.mxu0 0.0
    %3220 = vmatprep.subr.mxu0 0.0
    %3221 = vmatpush2.msra.mxu0 0.0
    %3222 = vmatprep.subr.mxu0 0.0
    %3223 = vmatpush2.msra.mxu0 0.0
    %3224 = vmatprep.subr.mxu0 0.0
    %3225 = vmatpush2.msra.mxu0 0.0
    %3226 = vmatprep.subr.mxu0 0.0
    %3227 = vmatpush2.msra.mxu0 0.0
    %3228 = vmatprep.subr.mxu0 0.0
    %3229 = vmatpush2.msra.mxu0 0.0
    %3230 = vmatprep.subr.mxu0 0.0
    %3231 = vmatpush2.msra.mxu0 0.0
    %3232 = vmatprep.mubr.f32.mxu0 0.0
    %3233 = vmatmul.mubr.f32.gmra.mxu0 %v3166
    %v3234 = vpop.f32.mrf.mxu0
    %v3235 = vadd.f32 0.0, %v3234
    %v3236 = vpop.f32.mrf.mxu0
    %3237 = vdwg.mxu0
    %v3238 = vadd.f32 %v3162, %v3235
    %v3239 = vxor.u32 %v3238, 2147483648
    %v3240 = vmul.f32 %v3239, 1.442695
    %v3241 = vpow.pop %v3240
    %v3242 = vadd.f32 %v3241, 1.0
    %v3243 = vrcp.pop %v3242
    %v3244 = vmul.f32 1.0, %v3243
    %v3245 = vtanh.pop %v3238
    %v3246 = vmul.f32 %v3244, %v3155
    %3248 = vrot.lane.b32.xlu0 %v3245, 64
    %v3249 = vpop.permute.xlu0 %3248
    %v3251 = vmul.f32 %v3244, %v3249
    %3253 = vrot.lane.b32.xlu0 %v3251, 32
    %v3254 = vpop.permute.xlu0 %3253
    %v3256 = vadd.f32 %v3246, %v3254
    %v3257 = vtanh.pop %v3256
    %3259 = vrot.lane.b32.xlu0 %v3257, 64
    %v3260 = vpop.permute.xlu0 %3259
    %v3262 = vmul.f32 %v3244, %v3260
    %v3263 = vadd.f32 %v1821, %v3064
    %3265 = vrot.lane.b32.xlu0 %v3262, 32
    %v3266 = vpop.permute.xlu0 %3265
    %v3267 = vsel %vm58, %v3266, 0
    %3269 = vmatprep.subr.mxu0 0.0
    %3270 = vmatpush1.msra.mxu0 0.0
    %3271 = vmatprep.subr.mxu0 0.0
    %3272 = vmatpush1.msra.mxu0 0.0
    %3273 = vmatprep.subr.mxu0 0.0
    %3274 = vmatpush1.msra.mxu0 0.0
    %3275 = vmatprep.subr.mxu0 0.0
    %3276 = vmatpush1.msra.mxu0 0.0
    %3277 = vmatprep.subr.mxu0 0.0
    %3278 = vmatpush1.msra.mxu0 0.0
    %3279 = vmatprep.subr.mxu0 0.0
    %3280 = vmatpush1.msra.mxu0 0.0
    %3281 = vmatprep.subr.mxu0 0.0
    %3282 = vmatpush1.msra.mxu0 0.0
    %3283 = vmatprep.subr.mxu0 0.0
    %3284 = vmatpush1.msra.mxu0 0.0
    %3285 = vmatprep.subr.mxu0 0.0
    %3286 = vmatpush1.msra.mxu0 0.0
    %3287 = vmatprep.subr.mxu0 0.0
    %3288 = vmatpush1.msra.mxu0 0.0
    %3289 = vmatprep.subr.mxu0 0.0
    %3290 = vmatpush1.msra.mxu0 0.0
    %3291 = vmatprep.subr.mxu0 0.0
    %3292 = vmatpush1.msra.mxu0 0.0
    %3293 = vmatprep.subr.mxu0 0.0
    %3294 = vmatpush1.msra.mxu0 %v3058
    %3295 = vmatprep.subr.mxu0 0.0
    %3296 = vmatpush1.msra.mxu0 %v3057
    %3297 = vmatprep.subr.mxu0 0.0
    %3298 = vmatpush1.msra.mxu0 %v3056
    %3299 = vmatprep.subr.mxu0 0.0
    %3300 = vmatpush1.msra.mxu0 %v3055
    %3301 = vmatprep.subr.mxu0 0.0
    %3302 = vmatpush2.msra.mxu0 0.0
    %3303 = vmatprep.subr.mxu0 0.0
    %3304 = vmatpush2.msra.mxu0 0.0
    %3305 = vmatprep.subr.mxu0 0.0
    %3306 = vmatpush2.msra.mxu0 0.0
    %3307 = vmatprep.subr.mxu0 0.0
    %3308 = vmatpush2.msra.mxu0 0.0
    %3309 = vmatprep.subr.mxu0 0.0
    %3310 = vmatpush2.msra.mxu0 0.0
    %3311 = vmatprep.subr.mxu0 0.0
    %3312 = vmatpush2.msra.mxu0 0.0
    %3313 = vmatprep.subr.mxu0 0.0
    %3314 = vmatpush2.msra.mxu0 0.0
    %3315 = vmatprep.subr.mxu0 0.0
    %3316 = vmatpush2.msra.mxu0 0.0
    %3317 = vmatprep.subr.mxu0 0.0
    %3318 = vmatpush2.msra.mxu0 0.0
    %3319 = vmatprep.subr.mxu0 0.0
    %3320 = vmatpush2.msra.mxu0 0.0
    %3321 = vmatprep.subr.mxu0 0.0
    %3322 = vmatpush2.msra.mxu0 0.0
    %3323 = vmatprep.subr.mxu0 0.0
    %3324 = vmatpush2.msra.mxu0 0.0
    %3325 = vmatprep.subr.mxu0 0.0
    %3326 = vmatpush2.msra.mxu0 0.0
    %3327 = vmatprep.subr.mxu0 0.0
    %3328 = vmatpush2.msra.mxu0 0.0
    %3329 = vmatprep.subr.mxu0 0.0
    %3330 = vmatpush2.msra.mxu0 0.0
    %3331 = vmatprep.subr.mxu0 0.0
    %3332 = vmatpush2.msra.mxu0 0.0
    %3333 = vmatprep.mubr.f32.mxu0 0.0
    %3334 = vmatmul.mubr.f32.gmra.mxu0 %v3267
    %v3335 = vpop.f32.mrf.mxu0
    %v3336 = vadd.f32 0.0, %v3335
    %v3337 = vpop.f32.mrf.mxu0
    %3338 = vdwg.mxu0
    %v3339 = vadd.f32 %v3263, %v3336
    %v3340 = vxor.u32 %v3339, 2147483648
    %v3341 = vmul.f32 %v3340, 1.442695
    %v3342 = vpow.pop %v3341
    %v3343 = vadd.f32 %v3342, 1.0
    %v3344 = vrcp.pop %v3343
    %v3345 = vmul.f32 1.0, %v3344
    %v3346 = vtanh.pop %v3339
    %v3347 = vmul.f32 %v3345, %v3256
    %3349 = vrot.lane.b32.xlu0 %v3346, 64
    %v3350 = vpop.permute.xlu0 %3349
    %v3352 = vmul.f32 %v3345, %v3350
    %3354 = vrot.lane.b32.xlu0 %v3352, 32
    %v3355 = vpop.permute.xlu0 %3354
    %v3357 = vadd.f32 %v3347, %v3355
    %v3358 = vtanh.pop %v3357
    %3360 = vrot.lane.b32.xlu0 %v3358, 64
    %v3361 = vpop.permute.xlu0 %3360
    %v3363 = vmul.f32 %v3345, %v3361
    %v3364 = vadd.f32 %v1327, %v3064
    %3366 = vrot.lane.b32.xlu0 %v3363, 32
    %v3367 = vpop.permute.xlu0 %3366
    %v3368 = vsel %vm58, %v3367, 0
    %3370 = vmatprep.subr.mxu0 0.0
    %3371 = vmatpush1.msra.mxu0 0.0
    %3372 = vmatprep.subr.mxu0 0.0
    %3373 = vmatpush1.msra.mxu0 0.0
    %3374 = vmatprep.subr.mxu0 0.0
    %3375 = vmatpush1.msra.mxu0 0.0
    %3376 = vmatprep.subr.mxu0 0.0
    %3377 = vmatpush1.msra.mxu0 0.0
    %3378 = vmatprep.subr.mxu0 0.0
    %3379 = vmatpush1.msra.mxu0 0.0
    %3380 = vmatprep.subr.mxu0 0.0
    %3381 = vmatpush1.msra.mxu0 0.0
    %3382 = vmatprep.subr.mxu0 0.0
    %3383 = vmatpush1.msra.mxu0 0.0
    %3384 = vmatprep.subr.mxu0 0.0
    %3385 = vmatpush1.msra.mxu0 0.0
    %3386 = vmatprep.subr.mxu0 0.0
    %3387 = vmatpush1.msra.mxu0 0.0
    %3388 = vmatprep.subr.mxu0 0.0
    %3389 = vmatpush1.msra.mxu0 0.0
    %3390 = vmatprep.subr.mxu0 0.0
    %3391 = vmatpush1.msra.mxu0 0.0
    %3392 = vmatprep.subr.mxu0 0.0
    %3393 = vmatpush1.msra.mxu0 0.0
    %3394 = vmatprep.subr.mxu0 0.0
    %3395 = vmatpush1.msra.mxu0 %v3058
    %3396 = vmatprep.subr.mxu0 0.0
    %3397 = vmatpush1.msra.mxu0 %v3057
    %3398 = vmatprep.subr.mxu0 0.0
    %3399 = vmatpush1.msra.mxu0 %v3056
    %3400 = vmatprep.subr.mxu0 0.0
    %3401 = vmatpush1.msra.mxu0 %v3055
    %3402 = vmatprep.subr.mxu0 0.0
    %3403 = vmatpush2.msra.mxu0 0.0
    %3404 = vmatprep.subr.mxu0 0.0
    %3405 = vmatpush2.msra.mxu0 0.0
    %3406 = vmatprep.subr.mxu0 0.0
    %3407 = vmatpush2.msra.mxu0 0.0
    %3408 = vmatprep.subr.mxu0 0.0
    %3409 = vmatpush2.msra.mxu0 0.0
    %3410 = vmatprep.subr.mxu0 0.0
    %3411 = vmatpush2.msra.mxu0 0.0
    %3412 = vmatprep.subr.mxu0 0.0
    %3413 = vmatpush2.msra.mxu0 0.0
    %3414 = vmatprep.subr.mxu0 0.0
    %3415 = vmatpush2.msra.mxu0 0.0
    %3416 = vmatprep.subr.mxu0 0.0
    %3417 = vmatpush2.msra.mxu0 0.0
    %3418 = vmatprep.subr.mxu0 0.0
    %3419 = vmatpush2.msra.mxu0 0.0
    %3420 = vmatprep.subr.mxu0 0.0
    %3421 = vmatpush2.msra.mxu0 0.0
    %3422 = vmatprep.subr.mxu0 0.0
    %3423 = vmatpush2.msra.mxu0 0.0
    %3424 = vmatprep.subr.mxu0 0.0
    %3425 = vmatpush2.msra.mxu0 0.0
    %3426 = vmatprep.subr.mxu0 0.0
    %3427 = vmatpush2.msra.mxu0 0.0
    %3428 = vmatprep.subr.mxu0 0.0
    %3429 = vmatpush2.msra.mxu0 0.0
    %3430 = vmatprep.subr.mxu0 0.0
    %3431 = vmatpush2.msra.mxu0 0.0
    %3432 = vmatprep.subr.mxu0 0.0
    %3433 = vmatpush2.msra.mxu0 0.0
    %3434 = vmatprep.mubr.f32.mxu0 0.0
    %3435 = vmatmul.mubr.f32.gmra.mxu0 %v3368
    %v3436 = vpop.f32.mrf.mxu0
    %v3437 = vadd.f32 0.0, %v3436
    %v3438 = vpop.f32.mrf.mxu0
    %3439 = vdwg.mxu0
    %v3440 = vadd.f32 %v3364, %v3437
    %v3441 = vxor.u32 %v3440, 2147483648
    %v3442 = vmul.f32 %v3441, 1.442695
    %v3443 = vpow.pop %v3442
    %v3444 = vadd.f32 %v3443, 1.0
    %v3445 = vrcp.pop %v3444
    %v3446 = vmul.f32 1.0, %v3445
    %v3447 = vtanh.pop %v3440
    %v3448 = vmul.f32 %v3446, %v3357
    %3450 = vrot.lane.b32.xlu0 %v3447, 64
    %v3451 = vpop.permute.xlu0 %3450
    %v3453 = vmul.f32 %v3446, %v3451
    %3455 = vrot.lane.b32.xlu0 %v3453, 32
    %v3456 = vpop.permute.xlu0 %3455
    %v3458 = vadd.f32 %v3448, %v3456
    %v3459 = vtanh.pop %v3458
    %3461 = vrot.lane.b32.xlu0 %v3459, 64
    %v3462 = vpop.permute.xlu0 %3461
    %v3464 = vmul.f32 %v3446, %v3462
    %v3465 = vadd.f32 %v1574, %v3064
    %3467 = vrot.lane.b32.xlu0 %v3464, 32
    %v3468 = vpop.permute.xlu0 %3467
    %v3469 = vsel %vm58, %v3468, 0
    %3471 = vmatprep.subr.mxu0 0.0
    %3472 = vmatpush1.msra.mxu0 0.0
    %3473 = vmatprep.subr.mxu0 0.0
    %3474 = vmatpush1.msra.mxu0 0.0
    %3475 = vmatprep.subr.mxu0 0.0
    %3476 = vmatpush1.msra.mxu0 0.0
    %3477 = vmatprep.subr.mxu0 0.0
    %3478 = vmatpush1.msra.mxu0 0.0
    %3479 = vmatprep.subr.mxu0 0.0
    %3480 = vmatpush1.msra.mxu0 0.0
    %3481 = vmatprep.subr.mxu0 0.0
    %3482 = vmatpush1.msra.mxu0 0.0
    %3483 = vmatprep.subr.mxu0 0.0
    %3484 = vmatpush1.msra.mxu0 0.0
    %3485 = vmatprep.subr.mxu0 0.0
    %3486 = vmatpush1.msra.mxu0 0.0
    %3487 = vmatprep.subr.mxu0 0.0
    %3488 = vmatpush1.msra.mxu0 0.0
    %3489 = vmatprep.subr.mxu0 0.0
    %3490 = vmatpush1.msra.mxu0 0.0
    %3491 = vmatprep.subr.mxu0 0.0
    %3492 = vmatpush1.msra.mxu0 0.0
    %3493 = vmatprep.subr.mxu0 0.0
    %3494 = vmatpush1.msra.mxu0 0.0
    %3495 = vmatprep.subr.mxu0 0.0
    %3496 = vmatpush1.msra.mxu0 %v3058
    %3497 = vmatprep.subr.mxu0 0.0
    %3498 = vmatpush1.msra.mxu0 %v3057
    %3499 = vmatprep.subr.mxu0 0.0
    %3500 = vmatpush1.msra.mxu0 %v3056
    %3501 = vmatprep.subr.mxu0 0.0
    %3502 = vmatpush1.msra.mxu0 %v3055
    %3503 = vmatprep.subr.mxu0 0.0
    %3504 = vmatpush2.msra.mxu0 0.0
    %3505 = vmatprep.subr.mxu0 0.0
    %3506 = vmatpush2.msra.mxu0 0.0
    %3507 = vmatprep.subr.mxu0 0.0
    %3508 = vmatpush2.msra.mxu0 0.0
    %3509 = vmatprep.subr.mxu0 0.0
    %3510 = vmatpush2.msra.mxu0 0.0
    %3511 = vmatprep.subr.mxu0 0.0
    %3512 = vmatpush2.msra.mxu0 0.0
    %3513 = vmatprep.subr.mxu0 0.0
    %3514 = vmatpush2.msra.mxu0 0.0
    %3515 = vmatprep.subr.mxu0 0.0
    %3516 = vmatpush2.msra.mxu0 0.0
    %3517 = vmatprep.subr.mxu0 0.0
    %3518 = vmatpush2.msra.mxu0 0.0
    %3519 = vmatprep.subr.mxu0 0.0
    %3520 = vmatpush2.msra.mxu0 0.0
    %3521 = vmatprep.subr.mxu0 0.0
    %3522 = vmatpush2.msra.mxu0 0.0
    %3523 = vmatprep.subr.mxu0 0.0
    %3524 = vmatpush2.msra.mxu0 0.0
    %3525 = vmatprep.subr.mxu0 0.0
    %3526 = vmatpush2.msra.mxu0 0.0
    %3527 = vmatprep.subr.mxu0 0.0
    %3528 = vmatpush2.msra.mxu0 0.0
    %3529 = vmatprep.subr.mxu0 0.0
    %3530 = vmatpush2.msra.mxu0 0.0
    %3531 = vmatprep.subr.mxu0 0.0
    %3532 = vmatpush2.msra.mxu0 0.0
    %3533 = vmatprep.subr.mxu0 0.0
    %3534 = vmatpush2.msra.mxu0 0.0
    %3535 = vmatprep.mubr.f32.mxu0 0.0
    %3536 = vmatmul.mubr.f32.gmra.mxu0 %v3469
    %v3537 = vpop.f32.mrf.mxu0
    %v3538 = vadd.f32 0.0, %v3537
    %v3539 = vpop.f32.mrf.mxu0
    %3540 = vdwg.mxu0
    %v3541 = vadd.f32 %v3465, %v3538
    %v3542 = vxor.u32 %v3541, 2147483648
    %v3543 = vmul.f32 %v3542, 1.442695
    %v3544 = vpow.pop %v3543
    %v3545 = vadd.f32 %v3544, 1.0
    %v3546 = vrcp.pop %v3545
    %v3547 = vmul.f32 1.0, %v3546
    %v3548 = vtanh.pop %v3541
    %v3549 = vmul.f32 %v3547, %v3458
    %3551 = vrot.lane.b32.xlu0 %v3548, 64
    %v3552 = vpop.permute.xlu0 %3551
    %v3554 = vmul.f32 %v3547, %v3552
    %3556 = vrot.lane.b32.xlu0 %v3554, 32
    %v3557 = vpop.permute.xlu0 %3556
    %v3559 = vadd.f32 %v3549, %v3557
    %v3560 = vtanh.pop %v3559
    %3562 = vrot.lane.b32.xlu0 %v3560, 64
    %v3563 = vpop.permute.xlu0 %3562
    %v3565 = vmul.f32 %v3547, %v3563
    %v3566 = vadd.f32 %v2068, %v3064
    %3568 = vrot.lane.b32.xlu0 %v3565, 32
    %v3569 = vpop.permute.xlu0 %3568
    %v3570 = vsel %vm58, %v3569, 0
    %3572 = vmatprep.subr.mxu0 0.0
    %3573 = vmatpush1.msra.mxu0 0.0
    %3574 = vmatprep.subr.mxu0 0.0
    %3575 = vmatpush1.msra.mxu0 0.0
    %3576 = vmatprep.subr.mxu0 0.0
    %3577 = vmatpush1.msra.mxu0 0.0
    %3578 = vmatprep.subr.mxu0 0.0
    %3579 = vmatpush1.msra.mxu0 0.0
    %3580 = vmatprep.subr.mxu0 0.0
    %3581 = vmatpush1.msra.mxu0 0.0
    %3582 = vmatprep.subr.mxu0 0.0
    %3583 = vmatpush1.msra.mxu0 0.0
    %3584 = vmatprep.subr.mxu0 0.0
    %3585 = vmatpush1.msra.mxu0 0.0
    %3586 = vmatprep.subr.mxu0 0.0
    %3587 = vmatpush1.msra.mxu0 0.0
    %3588 = vmatprep.subr.mxu0 0.0
    %3589 = vmatpush1.msra.mxu0 0.0
    %3590 = vmatprep.subr.mxu0 0.0
    %3591 = vmatpush1.msra.mxu0 0.0
    %3592 = vmatprep.subr.mxu0 0.0
    %3593 = vmatpush1.msra.mxu0 0.0
    %3594 = vmatprep.subr.mxu0 0.0
    %3595 = vmatpush1.msra.mxu0 0.0
    %3596 = vmatprep.subr.mxu0 0.0
    %3597 = vmatpush1.msra.mxu0 %v3058
    %3598 = vmatprep.subr.mxu0 0.0
    %3599 = vmatpush1.msra.mxu0 %v3057
    %3600 = vmatprep.subr.mxu0 0.0
    %3601 = vmatpush1.msra.mxu0 %v3056
    %3602 = vmatprep.subr.mxu0 0.0
    %3603 = vmatpush1.msra.mxu0 %v3055
    %3604 = vmatprep.subr.mxu0 0.0
    %3605 = vmatpush2.msra.mxu0 0.0
    %3606 = vmatprep.subr.mxu0 0.0
    %3607 = vmatpush2.msra.mxu0 0.0
    %3608 = vmatprep.subr.mxu0 0.0
    %3609 = vmatpush2.msra.mxu0 0.0
    %3610 = vmatprep.subr.mxu0 0.0
    %3611 = vmatpush2.msra.mxu0 0.0
    %3612 = vmatprep.subr.mxu0 0.0
    %3613 = vmatpush2.msra.mxu0 0.0
    %3614 = vmatprep.subr.mxu0 0.0
    %3615 = vmatpush2.msra.mxu0 0.0
    %3616 = vmatprep.subr.mxu0 0.0
    %3617 = vmatpush2.msra.mxu0 0.0
    %3618 = vmatprep.subr.mxu0 0.0
    %3619 = vmatpush2.msra.mxu0 0.0
    %3620 = vmatprep.subr.mxu0 0.0
    %3621 = vmatpush2.msra.mxu0 0.0
    %3622 = vmatprep.subr.mxu0 0.0
    %3623 = vmatpush2.msra.mxu0 0.0
    %3624 = vmatprep.subr.mxu0 0.0
    %3625 = vmatpush2.msra.mxu0 0.0
    %3626 = vmatprep.subr.mxu0 0.0
    %3627 = vmatpush2.msra.mxu0 0.0
    %3628 = vmatprep.subr.mxu0 0.0
    %3629 = vmatpush2.msra.mxu0 0.0
    %3630 = vmatprep.subr.mxu0 0.0
    %3631 = vmatpush2.msra.mxu0 0.0
    %3632 = vmatprep.subr.mxu0 0.0
    %3633 = vmatpush2.msra.mxu0 0.0
    %3634 = vmatprep.subr.mxu0 0.0
    %3635 = vmatpush2.msra.mxu0 0.0
    %3636 = vmatprep.mubr.f32.mxu0 0.0
    %3637 = vmatmul.mubr.f32.gmra.mxu0 %v3570
    %v3638 = vpop.f32.mrf.mxu0
    %v3639 = vadd.f32 0.0, %v3638
    %v3640 = vpop.f32.mrf.mxu0
    %3641 = vdwg.mxu0
    %v3642 = vadd.f32 %v3566, %v3639
    %v3643 = vxor.u32 %v3642, 2147483648
    %v3644 = vmul.f32 %v3643, 1.442695
    %v3645 = vpow.pop %v3644
    %v3646 = vadd.f32 %v3645, 1.0
    %v3647 = vrcp.pop %v3646
    %v3648 = vmul.f32 1.0, %v3647
    %v3649 = vtanh.pop %v3642
    %v3650 = vmul.f32 %v3648, %v3559
    %3652 = vrot.lane.b32.xlu0 %v3649, 64
    %v3653 = vpop.permute.xlu0 %3652
    %v3655 = vmul.f32 %v3648, %v3653
    %3657 = vrot.lane.b32.xlu0 %v3655, 32
    %v3658 = vpop.permute.xlu0 %3657
    %v3660 = vadd.f32 %v3650, %v3658
    %v3661 = vtanh.pop %v3660
    %3663 = vrot.lane.b32.xlu0 %v3661, 64
    %v3664 = vpop.permute.xlu0 %3663
    %v3666 = vmul.f32 %v3648, %v3664
    %v3667 = vadd.f32 %v2562, %v3064
    %3669 = vrot.lane.b32.xlu0 %v3666, 32
    %v3670 = vpop.permute.xlu0 %3669
    %v3671 = vsel %vm58, %v3670, 0
    %3673 = vmatprep.subr.mxu0 0.0
    %3674 = vmatpush1.msra.mxu0 0.0
    %3675 = vmatprep.subr.mxu0 0.0
    %3676 = vmatpush1.msra.mxu0 0.0
    %3677 = vmatprep.subr.mxu0 0.0
    %3678 = vmatpush1.msra.mxu0 0.0
    %3679 = vmatprep.subr.mxu0 0.0
    %3680 = vmatpush1.msra.mxu0 0.0
    %3681 = vmatprep.subr.mxu0 0.0
    %3682 = vmatpush1.msra.mxu0 0.0
    %3683 = vmatprep.subr.mxu0 0.0
    %3684 = vmatpush1.msra.mxu0 0.0
    %3685 = vmatprep.subr.mxu0 0.0
    %3686 = vmatpush1.msra.mxu0 0.0
    %3687 = vmatprep.subr.mxu0 0.0
    %3688 = vmatpush1.msra.mxu0 0.0
    %3689 = vmatprep.subr.mxu0 0.0
    %3690 = vmatpush1.msra.mxu0 0.0
    %3691 = vmatprep.subr.mxu0 0.0
    %3692 = vmatpush1.msra.mxu0 0.0
    %3693 = vmatprep.subr.mxu0 0.0
    %3694 = vmatpush1.msra.mxu0 0.0
    %3695 = vmatprep.subr.mxu0 0.0
    %3696 = vmatpush1.msra.mxu0 0.0
    %3697 = vmatprep.subr.mxu0 0.0
    %3698 = vmatpush1.msra.mxu0 %v3058
    %3699 = vmatprep.subr.mxu0 0.0
    %3700 = vmatpush1.msra.mxu0 %v3057
    %3701 = vmatprep.subr.mxu0 0.0
    %3702 = vmatpush1.msra.mxu0 %v3056
    %3703 = vmatprep.subr.mxu0 0.0
    %3704 = vmatpush1.msra.mxu0 %v3055
    %3705 = vmatprep.subr.mxu0 0.0
    %3706 = vmatpush2.msra.mxu0 0.0
    %3707 = vmatprep.subr.mxu0 0.0
    %3708 = vmatpush2.msra.mxu0 0.0
    %3709 = vmatprep.subr.mxu0 0.0
    %3710 = vmatpush2.msra.mxu0 0.0
    %3711 = vmatprep.subr.mxu0 0.0
    %3712 = vmatpush2.msra.mxu0 0.0
    %3713 = vmatprep.subr.mxu0 0.0
    %3714 = vmatpush2.msra.mxu0 0.0
    %3715 = vmatprep.subr.mxu0 0.0
    %3716 = vmatpush2.msra.mxu0 0.0
    %3717 = vmatprep.subr.mxu0 0.0
    %3718 = vmatpush2.msra.mxu0 0.0
    %3719 = vmatprep.subr.mxu0 0.0
    %3720 = vmatpush2.msra.mxu0 0.0
    %3721 = vmatprep.subr.mxu0 0.0
    %3722 = vmatpush2.msra.mxu0 0.0
    %3723 = vmatprep.subr.mxu0 0.0
    %3724 = vmatpush2.msra.mxu0 0.0
    %3725 = vmatprep.subr.mxu0 0.0
    %3726 = vmatpush2.msra.mxu0 0.0
    %3727 = vmatprep.subr.mxu0 0.0
    %3728 = vmatpush2.msra.mxu0 0.0
    %3729 = vmatprep.subr.mxu0 0.0
    %3730 = vmatpush2.msra.mxu0 0.0
    %3731 = vmatprep.subr.mxu0 0.0
    %3732 = vmatpush2.msra.mxu0 0.0
    %3733 = vmatprep.subr.mxu0 0.0
    %3734 = vmatpush2.msra.mxu0 0.0
    %3735 = vmatprep.subr.mxu0 0.0
    %3736 = vmatpush2.msra.mxu0 0.0
    %3737 = vmatprep.mubr.f32.mxu0 0.0
    %3738 = vmatmul.mubr.f32.gmra.mxu0 %v3671
    %v3739 = vpop.f32.mrf.mxu0
    %v3740 = vadd.f32 0.0, %v3739
    %v3741 = vpop.f32.mrf.mxu0
    %3742 = vdwg.mxu0
    %v3743 = vadd.f32 %v3667, %v3740
    %v3744 = vxor.u32 %v3743, 2147483648
    %v3745 = vmul.f32 %v3744, 1.442695
    %v3746 = vpow.pop %v3745
    %v3747 = vadd.f32 %v3746, 1.0
    %v3748 = vrcp.pop %v3747
    %v3749 = vmul.f32 1.0, %v3748
    %v3750 = vtanh.pop %v3743
    %v3751 = vmul.f32 %v3749, %v3660
    %3753 = vrot.lane.b32.xlu0 %v3750, 64
    %v3754 = vpop.permute.xlu0 %3753
    %v3756 = vmul.f32 %v3749, %v3754
    %3758 = vrot.lane.b32.xlu0 %v3756, 32
    %v3759 = vpop.permute.xlu0 %3758
    %v3761 = vadd.f32 %v3751, %v3759
    %v3762 = vtanh.pop %v3761
    %3764 = vrot.lane.b32.xlu0 %v3762, 64
    %v3765 = vpop.permute.xlu0 %3764
    %v3767 = vmul.f32 %v3749, %v3765
    %v3768 = vadd.f32 %v3052, %v3064
    %3770 = vrot.lane.b32.xlu0 %v3767, 32
    %v3771 = vpop.permute.xlu0 %3770
    %v3772 = vsel %vm58, %v3771, 0
    %3774 = vmatprep.subr.mxu0 0.0
    %3775 = vmatpush1.msra.mxu0 0.0
    %3776 = vmatprep.subr.mxu0 0.0
    %3777 = vmatpush1.msra.mxu0 0.0
    %3778 = vmatprep.subr.mxu0 0.0
    %3779 = vmatpush1.msra.mxu0 0.0
    %3780 = vmatprep.subr.mxu0 0.0
    %3781 = vmatpush1.msra.mxu0 0.0
    %3782 = vmatprep.subr.mxu0 0.0
    %3783 = vmatpush1.msra.mxu0 0.0
    %3784 = vmatprep.subr.mxu0 0.0
    %3785 = vmatpush1.msra.mxu0 0.0
    %3786 = vmatprep.subr.mxu0 0.0
    %3787 = vmatpush1.msra.mxu0 0.0
    %3788 = vmatprep.subr.mxu0 0.0
    %3789 = vmatpush1.msra.mxu0 0.0
    %3790 = vmatprep.subr.mxu0 0.0
    %3791 = vmatpush1.msra.mxu0 0.0
    %3792 = vmatprep.subr.mxu0 0.0
    %3793 = vmatpush1.msra.mxu0 0.0
    %3794 = vmatprep.subr.mxu0 0.0
    %3795 = vmatpush1.msra.mxu0 0.0
    %3796 = vmatprep.subr.mxu0 0.0
    %3797 = vmatpush1.msra.mxu0 0.0
    %3798 = vmatprep.subr.mxu0 0.0
    %3799 = vmatpush1.msra.mxu0 %v3058
    %3800 = vmatprep.subr.mxu0 0.0
    %3801 = vmatpush1.msra.mxu0 %v3057
    %3802 = vmatprep.subr.mxu0 0.0
    %3803 = vmatpush1.msra.mxu0 %v3056
    %3804 = vmatprep.subr.mxu0 0.0
    %3805 = vmatpush1.msra.mxu0 %v3055
    %3806 = vmatprep.subr.mxu0 0.0
    %3807 = vmatpush2.msra.mxu0 0.0
    %3808 = vmatprep.subr.mxu0 0.0
    %3809 = vmatpush2.msra.mxu0 0.0
    %3810 = vmatprep.subr.mxu0 0.0
    %3811 = vmatpush2.msra.mxu0 0.0
    %3812 = vmatprep.subr.mxu0 0.0
    %3813 = vmatpush2.msra.mxu0 0.0
    %3814 = vmatprep.subr.mxu0 0.0
    %3815 = vmatpush2.msra.mxu0 0.0
    %3816 = vmatprep.subr.mxu0 0.0
    %3817 = vmatpush2.msra.mxu0 0.0
    %3818 = vmatprep.subr.mxu0 0.0
    %3819 = vmatpush2.msra.mxu0 0.0
    %3820 = vmatprep.subr.mxu0 0.0
    %3821 = vmatpush2.msra.mxu0 0.0
    %3822 = vmatprep.subr.mxu0 0.0
    %3823 = vmatpush2.msra.mxu0 0.0
    %3824 = vmatprep.subr.mxu0 0.0
    %3825 = vmatpush2.msra.mxu0 0.0
    %3826 = vmatprep.subr.mxu0 0.0
    %3827 = vmatpush2.msra.mxu0 0.0
    %3828 = vmatprep.subr.mxu0 0.0
    %3829 = vmatpush2.msra.mxu0 0.0
    %3830 = vmatprep.subr.mxu0 0.0
    %3831 = vmatpush2.msra.mxu0 0.0
    %3832 = vmatprep.subr.mxu0 0.0
    %3833 = vmatpush2.msra.mxu0 0.0
    %3834 = vmatprep.subr.mxu0 0.0
    %3835 = vmatpush2.msra.mxu0 0.0
    %3836 = vmatprep.subr.mxu0 0.0
    %3837 = vmatpush2.msra.mxu0 0.0
    %3838 = vmatprep.mubr.f32.mxu0 0.0
    %3839 = vmatmul.mubr.f32.gmra.mxu0 %v3772
    %v3840 = vpop.f32.mrf.mxu0
    %v3841 = vadd.f32 0.0, %v3840
    %v3842 = vpop.f32.mrf.mxu0
    %3843 = vdwg.mxu0
    %v3844 = vadd.f32 %v3768, %v3841
    %v3845 = vxor.u32 %v3844, 2147483648
    %v3846 = vmul.f32 %v3845, 1.442695
    %v3847 = vpow.pop %v3846
    %v3848 = vadd.f32 %v3847, 1.0
    %v3849 = vrcp.pop %v3848
    %v3850 = vmul.f32 1.0, %v3849
    %v3851 = vtanh.pop %v3844
    %v3852 = vmul.f32 %v3850, %v3761
    %3854 = vrot.lane.b32.xlu0 %v3851, 64
    %v3855 = vpop.permute.xlu0 %3854
    %v3857 = vmul.f32 %v3850, %v3855
    %3859 = vrot.lane.b32.xlu0 %v3857, 32
    %v3860 = vpop.permute.xlu0 %3859
    %v3862 = vadd.f32 %v3852, %v3860
    %v3863 = vtanh.pop %v3862
    %3865 = vrot.lane.b32.xlu0 %v3863, 64
    %v3866 = vpop.permute.xlu0 %3865
    %v3868 = vmul.f32 %v3850, %v3866
    %v3869 = vld [vmem:[%s11] sm:$0xff]
    %v3870 = vld [vmem:[%s11 + $0x8] sm:$0xff]
    %v3871 = vld [vmem:[%s11 + $0x10] sm:$0xff]
    %v3872 = vld [vmem:[%s11 + $0x18] sm:$0xff]
    %v3873 = vld [vmem:[%s12] sm:$0x1]
    %v3875 = vlaneseq
    %v3876 = vshrl.u32 %v3875, 7
    %v3877 = vsub.s32 0, %v3876
    %v3878 = vrot.slane %v3873, %v3877
    %3881 = vrot.lane.b32.xlu0 %v3868, 32
    %v3882 = vpop.permute.xlu0 %3881
    %v3883 = vsel %vm58, %v3882, 0
    %3885 = vmatprep.subr.mxu0 0.0
    %3886 = vmatpush1.msra.mxu0 0.0
    %3887 = vmatprep.subr.mxu0 0.0
    %3888 = vmatpush1.msra.mxu0 0.0
    %3889 = vmatprep.subr.mxu0 0.0
    %3890 = vmatpush1.msra.mxu0 0.0
    %3891 = vmatprep.subr.mxu0 0.0
    %3892 = vmatpush1.msra.mxu0 0.0
    %3893 = vmatprep.subr.mxu0 0.0
    %3894 = vmatpush1.msra.mxu0 0.0
    %3895 = vmatprep.subr.mxu0 0.0
    %3896 = vmatpush1.msra.mxu0 0.0
    %3897 = vmatprep.subr.mxu0 0.0
    %3898 = vmatpush1.msra.mxu0 0.0
    %3899 = vmatprep.subr.mxu0 0.0
    %3900 = vmatpush1.msra.mxu0 0.0
    %3901 = vmatprep.subr.mxu0 0.0
    %3902 = vmatpush1.msra.mxu0 0.0
    %3903 = vmatprep.subr.mxu0 0.0
    %3904 = vmatpush1.msra.mxu0 0.0
    %3905 = vmatprep.subr.mxu0 0.0
    %3906 = vmatpush1.msra.mxu0 0.0
    %3907 = vmatprep.subr.mxu0 0.0
    %3908 = vmatpush1.msra.mxu0 0.0
    %3909 = vmatprep.subr.mxu0 0.0
    %3910 = vmatpush1.msra.mxu0 %v3872
    %3911 = vmatprep.subr.mxu0 0.0
    %3912 = vmatpush1.msra.mxu0 %v3871
    %3913 = vmatprep.subr.mxu0 0.0
    %3914 = vmatpush1.msra.mxu0 %v3870
    %3915 = vmatprep.subr.mxu0 0.0
    %3916 = vmatpush1.msra.mxu0 %v3869
    %3917 = vmatprep.subr.mxu0 0.0
    %3918 = vmatpush2.msra.mxu0 0.0
    %3919 = vmatprep.subr.mxu0 0.0
    %3920 = vmatpush2.msra.mxu0 0.0
    %3921 = vmatprep.subr.mxu0 0.0
    %3922 = vmatpush2.msra.mxu0 0.0
    %3923 = vmatprep.subr.mxu0 0.0
    %3924 = vmatpush2.msra.mxu0 0.0
    %3925 = vmatprep.subr.mxu0 0.0
    %3926 = vmatpush2.msra.mxu0 0.0
    %3927 = vmatprep.subr.mxu0 0.0
    %3928 = vmatpush2.msra.mxu0 0.0
    %3929 = vmatprep.subr.mxu0 0.0
    %3930 = vmatpush2.msra.mxu0 0.0
    %3931 = vmatprep.subr.mxu0 0.0
    %3932 = vmatpush2.msra.mxu0 0.0
    %3933 = vmatprep.subr.mxu0 0.0
    %3934 = vmatpush2.msra.mxu0 0.0
    %3935 = vmatprep.subr.mxu0 0.0
    %3936 = vmatpush2.msra.mxu0 0.0
    %3937 = vmatprep.subr.mxu0 0.0
    %3938 = vmatpush2.msra.mxu0 0.0
    %3939 = vmatprep.subr.mxu0 0.0
    %3940 = vmatpush2.msra.mxu0 0.0
    %3941 = vmatprep.subr.mxu0 0.0
    %3942 = vmatpush2.msra.mxu0 0.0
    %3943 = vmatprep.subr.mxu0 0.0
    %3944 = vmatpush2.msra.mxu0 0.0
    %3945 = vmatprep.subr.mxu0 0.0
    %3946 = vmatpush2.msra.mxu0 0.0
    %3947 = vmatprep.subr.mxu0 0.0
    %3948 = vmatpush2.msra.mxu0 0.0
    %3949 = vmatprep.mubr.f32.mxu0 0.0
    %3950 = vmatmul.mubr.f32.gmra.mxu0 %v3883
    %v3951 = vpop.f32.mrf.mxu0
    %v3952 = vadd.f32 %v3878, %v3951
    %v3953 = vpop.f32.mrf.mxu0
    %3954 = vdwg.mxu0
    %vm3955 = vcmask 25600
    %3956 = vst.msk [vmem:[#allocation2] sm:$0x3] %vm3955, %v3952
    // Predicated region
    $region54: #{lstm_glove_vecs_forward.1} parent=1 // pred_check
      _
    $region55: #{lstm_glove_vecs_forward.1} parent=1 // pred_check_branch
      %3958 = sbr.rel (0) target = $region57
    $region56: #{lstm_glove_vecs_forward.1} parent=1 // pred_region
      %s3960 = ssub.s32 32, 32
      %3961 = vsyncadd [#allocation3], %s3960
      %s3963 = sshll.u32 [#allocation2], 4
      %s3964 = int_to_ptr.vmem [resolvable:$true] %s3963
      %3966 = dma.vmem_to_hbm [thread:$0]  %s3964, 32, %s13, [#allocation3]
    $region57: #{lstm_glove_vecs_forward.1} parent=1 // pred_fallthru
      _
    // Predicated region
    $region58: #{lstm_glove_vecs_forward.1} parent=1 // pred_check
      _
    $region59: #{lstm_glove_vecs_forward.1} parent=1 // pred_check_branch
      %3968 = sbr.rel (0) target = $region61
    $region60: #{lstm_glove_vecs_forward.1} parent=1 // pred_region
      %3969 = dma.done [#allocation3], 32
    $region61: #{lstm_glove_vecs_forward.1} parent=1 // pred_fallthru
      _
    %3970 = vsyncpa [#allocation3], 1

</llo_original>
